<compile_context>
chip_gen: v5e
topology: v5e:2x2
jax: 0.10.0
libtpu: 0.0.40
codegen_flags: <defaults>
</compile_context>

<pallas_src>
import functools

import jax
import jax.numpy as jnp
from jax.experimental import pallas as pl
from jax.experimental.pallas import tpu as pltpu


# ---------------------------------------------------------------------------
# Kernel 1: conv-as-matmul (im2col @ W) + bias + ReLU + 2x2 maxpool, fused.
#   grid = (COUT // tn  [parallel],  K // tk  [arbitrary, innermost])
# ---------------------------------------------------------------------------
def conv_pool_kernel(a_ref, w_ref, b_ref, o_ref, acc_ref, *, batch, oh, ow):
    k = pl.program_id(1)

    @pl.when(k == 0)
    def _():
        acc_ref[...] = jnp.zeros_like(acc_ref)

    acc_ref[...] += jnp.dot(a_ref[...], w_ref[...],
                            preferred_element_type=jnp.float32)

    @pl.when(k == pl.num_programs(1) - 1)
    def _():
        # bias + ReLU on the VMEM-resident accumulator, then 2x2 maxpool.
        y = jnp.maximum(acc_ref[...] + b_ref[...], 0.0)   # (batch*oh*ow, tn)
        ph_n, pw_n = oh // 2, ow // 2
        # rows of y are ordered (n, oh, ow); pooled rows ordered (n, ph, pw).
        for ni in range(batch):
            for ph in range(ph_n):
                for pw in range(pw_n):
                    base = ni * oh * ow + (2 * ph) * ow + 2 * pw
                    m = jnp.maximum(
                        jnp.maximum(y[base:base + 1, :],
                                    y[base + 1:base + 2, :]),
                        jnp.maximum(y[base + ow:base + ow + 1, :],
                                    y[base + ow + 1:base + ow + 2, :]))
                    out_row = ni * ph_n * pw_n + ph * pw_n + pw
                    o_ref[pl.ds(out_row, 1), :] = m


def conv_relu_pool(a, w, b, *, batch, oh, ow, tk=768, tn=512):
    """a: (batch*oh*ow, CIN*9), w: (CIN*9, COUT), b: (1, COUT).
    Returns pooled NHWC activations (batch*(oh//2)*(ow//2), COUT)."""
    M, K = a.shape
    _, cout = w.shape
    assert M == batch * oh * ow
    assert oh % 2 == 0 and ow % 2 == 0
    # TODO(synk): add an M grid axis before scaling batch beyond one block.
    assert K % tk == 0 and cout % tn == 0
    ph_n, pw_n = oh // 2, ow // 2
    kernel = functools.partial(conv_pool_kernel, batch=batch, oh=oh, ow=ow)
    return pl.pallas_call(
        kernel,
        out_shape=jax.ShapeDtypeStruct((batch * ph_n * pw_n, cout), jnp.float32),
        grid_spec=pltpu.PrefetchScalarGridSpec(
            num_scalar_prefetch=0,
            grid=(cout // tn, K // tk),
            in_specs=[
                pl.BlockSpec((M, tk), lambda j, k: (0, k)),
                pl.BlockSpec((tk, tn), lambda j, k: (k, j)),
                pl.BlockSpec((1, tn), lambda j, k: (0, j)),
            ],
            out_specs=pl.BlockSpec((batch * ph_n * pw_n, tn),
                                   lambda j, k: (0, j)),
            scratch_shapes=[pltpu.VMEM((M, tn), jnp.float32)],
        ),
        compiler_params=pltpu.CompilerParams(
            dimension_semantics=("parallel", "arbitrary"),
            vmem_limit_bytes=32 * 1024 * 1024),
    )(a, w, b)


# ---------------------------------------------------------------------------
# Kernel 2: fused MLP head: relu(x @ W1 + b1), then fc2 as VPU mul + lane sum.
# ---------------------------------------------------------------------------
def mlp_kernel(x_ref, w1_ref, b1_ref, w2_ref, b2_ref, o_ref):
    h = jnp.dot(x_ref[...], w1_ref[...], preferred_element_type=jnp.float32)
    h = jnp.maximum(h + b1_ref[...], 0.0)                     # (N, 256)
    o = jnp.sum(h * w2_ref[...], axis=-1, keepdims=True)      # (N, 1)
    o_ref[...] = o + b2_ref[...]


def mlp_head(x, w1, b1, w2, b2):
    nb, k1 = x.shape
    hdim = w1.shape[1]
    return pl.pallas_call(
        mlp_kernel,
        out_shape=jax.ShapeDtypeStruct((nb, 1), jnp.float32),
        grid=(1,),
        in_specs=[
            pl.BlockSpec((nb, k1), lambda i: (0, 0)),
            pl.BlockSpec((k1, hdim), lambda i: (0, 0)),
            pl.BlockSpec((1, hdim), lambda i: (0, 0)),
            pl.BlockSpec((1, hdim), lambda i: (0, 0)),
            pl.BlockSpec((1, 1), lambda i: (0, 0)),
        ],
        out_specs=pl.BlockSpec((nb, 1), lambda i: (0, 0)),
        compiler_params=pltpu.CompilerParams(
            vmem_limit_bytes=32 * 1024 * 1024),
    )(x, w1, b1, w2, b2)


# ---------------------------------------------------------------------------
# Glue: im2col, one-time parameter layout prep, full forward.
# ---------------------------------------------------------------------------
def im2col(x):
    # x: (N, C, H, W) -> (N*OH*OW, C*KH*KW); columns ordered (ci, kh, kw) to
    # match the PyTorch conv weight flatten order.
    N, C, H, W = x.shape
    KH = KW = 3
    OH, OW = H - KH + 1, W - KW + 1
    patches = jnp.stack(
        [x[:, :, kh:kh + OH, kw:kw + OW] for kh in range(KH) for kw in range(KW)],
        axis=2)                                       # (N, C, 9, OH, OW)
    patches = patches.reshape(N, C * KH * KW, OH, OW)
    patches = patches.transpose(0, 2, 3, 1).reshape(N * OH * OW, C * KH * KW)
    return patches, OH, OW


def init_params(key):
    # PyTorch-layout parameters.
    k1, k2, k3, k4, k5, k6 = jax.random.split(key, 6)
    conv_w = jax.random.normal(k1, (1024, 512, 3, 3), jnp.float32) * 0.02
    conv_b = jax.random.normal(k2, (1024,), jnp.float32) * 0.02
    fc1_w = jax.random.normal(k3, (256, 1024 * 2 * 2), jnp.float32) * 0.02
    fc1_b = jax.random.normal(k4, (256,), jnp.float32) * 0.02
    fc2_w = jax.random.normal(k5, (1, 256), jnp.float32) * 0.02
    fc2_b = jax.random.normal(k6, (1,), jnp.float32) * 0.02
    return conv_w, conv_b, fc1_w, fc1_b, fc2_w, fc2_b


def prepare_params(params):
    """One-time layout conversion (run ONCE, outside the jitted forward)."""
    conv_w, conv_b, fc1_w, fc1_b, fc2_w, fc2_b = params
    cout, cin, kh, kw = conv_w.shape
    # Conv weight -> (CIN*KH*KW, COUT), column order matches im2col.
    w_conv = conv_w.reshape(cout, cin * kh * kw).T
    b_conv = conv_b.reshape(1, cout)
    # fc1 weight: PyTorch's view(-1, 4096) flattens NCHW -> feature order
    # (c, ph, pw).  The pooled kernel output is NHWC -> (ph, pw, c).  Permute
    # fc1's input-feature axis once so the kernel can consume NHWC directly.
    PH = PW = 2
    g = jnp.arange(cout * PH * PW)
    ph = g // (PW * cout)
    pw = (g // cout) % PW
    c = g % cout
    perm = c * (PH * PW) + ph * PW + pw          # f(g) in PyTorch order
    w_fc1 = fc1_w[:, perm].T                     # (4096, 256)
    b_fc1 = fc1_b.reshape(1, -1)                 # (1, 256)
    w_fc2 = fc2_w.reshape(1, -1)                 # (1, 256)
    b_fc2 = fc2_b.reshape(1, 1)                  # (1, 1)
    return w_conv, b_conv, w_fc1, b_fc1, w_fc2, b_fc2


def forward(x, prepped):
    w_conv, b_conv, w_fc1, b_fc1, w_fc2, b_fc2 = prepped
    N = x.shape[0]
    cout = w_conv.shape[1]

    # conv1 + ReLU + 2x2 maxpool, fused into one Pallas kernel.
    a, OH, OW = im2col(x)                                     # (N*16, 4608)
    pooled = conv_relu_pool(a, w_conv, b_conv,
                            batch=N, oh=OH, ow=OW)            # (N*2*2, 1024) NHWC
    PH, PW = OH // 2, OW // 2

    # Free reshape to (N, PH*PW*COUT); fc1's weight was pre-permuted to this
    # (ph, pw, c) feature order, matching PyTorch's NCHW view(-1, 4096).
    flat = pooled.reshape(N, PH * PW * cout)                  # (N, 4096)

    # fc1 + ReLU + fc2 (fused Pallas MLP kernel).
    out = mlp_head(flat, w_fc1, b_fc1, w_fc2, b_fc2)          # (N, 1)
    return out[:, 0]                                          # squeeze(1)


if __name__ == "__main__":
    key = jax.random.PRNGKey(0)
    pkey, xkey = jax.random.split(key)
    params = prepare_params(init_params(pkey))   # layout prep done once
    params = jax.block_until_ready(params)

    # Input: (N, 512, 6, 6) -> conv(3x3 valid) -> 4x4 -> pool(2,2) -> 2x2,
    # consistent with the module's view(-1, 1024*2*2).
    x = jax.random.normal(xkey, (2, 512, 6, 6), jnp.float32)

    fwd = jax.jit(forward)
    out = jax.block_until_ready(fwd(x, params))
    assert out.shape == (2,) and out.dtype == jnp.float32
    print("KERNEL_OK")
</pallas_src>

<mosaic_0001>
module attributes {stable_mosaic.version = 11 : i64} {
  func.func @conv_pool_kernel(%arg0: i32, %arg1: i32, %arg2: memref<32x768xf32, #tpu.memory_space<vmem>>, %arg3: memref<768x512xf32, #tpu.memory_space<vmem>>, %arg4: memref<1x512xf32, #tpu.memory_space<vmem>>, %arg5: memref<8x512xf32, #tpu.memory_space<vmem>>, %arg6: memref<32x512xf32, #tpu.memory_space<vmem>>) attributes {dimension_semantics = [#tpu.dimension_semantics<parallel>, #tpu.dimension_semantics<arbitrary>], iteration_bounds = array<i64: 2, 6>, scalar_prefetch = 0 : i64, scratch_operands = 1 : i64, tpu.core_type = #tpu.core_type<tc>, window_params = [{transform_indices = @transform_0, window_bounds = array<i64: 32, 768>}, {transform_indices = @transform_1, window_bounds = array<i64: 768, 512>}, {transform_indices = @transform_2, window_bounds = array<i64: 1, 512>}, {transform_indices = @transform_3, window_bounds = array<i64: 8, 512>}]} {
    %c0_i32 = arith.constant 0 : i32
    %0 = arith.cmpi eq, %arg1, %c0_i32 : i32
    %1 = arith.extui %0 : i1 to i32
    %c0_i32_0 = arith.constant 0 : i32
    %2 = arith.cmpi ne, %1, %c0_i32_0 : i32
    scf.if %2 {
      %cst_9 = arith.constant 0.000000e+00 : f32
      %12 = vector.broadcast %cst_9 : f32 to vector<32x512xf32>
      %c0_10 = arith.constant 0 : index
      %c0_11 = arith.constant 0 : index
      %13 = vector.load %arg6[%c0_10, %c0_11] : memref<32x512xf32, #tpu.memory_space<vmem>>, vector<32x512xf32>
      tpu.vector_store %arg6[%c0_10, %c0_11], %12 {strides = array<i32>} : memref<32x512xf32, #tpu.memory_space<vmem>>, vector<32x512xf32>,
    } else {
    }
    %c0 = arith.constant 0 : index
    %c0_1 = arith.constant 0 : index
    %3 = vector.load %arg6[%c0, %c0_1] : memref<32x512xf32, #tpu.memory_space<vmem>>, vector<32x512xf32>
    %c0_2 = arith.constant 0 : index
    %c0_3 = arith.constant 0 : index
    %4 = vector.load %arg2[%c0_2, %c0_3] : memref<32x768xf32, #tpu.memory_space<vmem>>, vector<32x768xf32>
    %c0_4 = arith.constant 0 : index
    %c0_5 = arith.constant 0 : index
    %5 = vector.load %arg3[%c0_4, %c0_5] : memref<768x512xf32, #tpu.memory_space<vmem>>, vector<768x512xf32>
    %cst = arith.constant dense<0.000000e+00> : vector<32x512xf32>
    %6 = tpu.matmul %4, %5, %cst {dimension_numbers = #tpu.dot_dimension_numbers<[1], [0], [0], [1], [0, 0, 1, 1], [], []>} : vector<32x768xf32>, vector<768x512xf32>, vector<32x512xf32> -> vector<32x512xf32>
    %7 = arith.addf %3, %6 : vector<32x512xf32>
    %c0_6 = arith.constant 0 : index
    %c0_7 = arith.constant 0 : index
    %8 = vector.load %arg6[%c0_6, %c0_7] : memref<32x512xf32, #tpu.memory_space<vmem>>, vector<32x512xf32>
    tpu.vector_store %arg6[%c0_6, %c0_7], %7 {strides = array<i32>} : memref<32x512xf32, #tpu.memory_space<vmem>>, vector<32x512xf32>,
    %c5_i32 = arith.constant 5 : i32
    %9 = arith.cmpi eq, %arg1, %c5_i32 : i32
    %10 = arith.extui %9 : i1 to i32
    %c0_i32_8 = arith.constant 0 : i32
    %11 = arith.cmpi ne, %10, %c0_i32_8 : i32
    scf.if %11 {
      %c0_9 = arith.constant 0 : index
      %c0_10 = arith.constant 0 : index
      %12 = vector.load %arg6[%c0_9, %c0_10] : memref<32x512xf32, #tpu.memory_space<vmem>>, vector<32x512xf32>
      %c0_11 = arith.constant 0 : index
      %c0_12 = arith.constant 0 : index
      %13 = vector.load %arg4[%c0_11, %c0_12] : memref<1x512xf32, #tpu.memory_space<vmem>>, vector<1x512xf32>
      %14 = vector.broadcast %13 : vector<1x512xf32> to vector<32x512xf32>
      %15 = arith.addf %12, %14 : vector<32x512xf32>
      %cst_13 = arith.constant 0.000000e+00 : f32
      %16 = vector.broadcast %cst_13 : f32 to vector<32x512xf32>
      %17 = arith.maximumf %15, %16 : vector<32x512xf32>
      %18 = vector.extract_strided_slice %17 {offsets = [0, 0], sizes = [1, 512], strides = [1, 1]} : vector<32x512xf32> to vector<1x512xf32>
      %19 = vector.extract_strided_slice %17 {offsets = [1, 0], sizes = [1, 512], strides = [1, 1]} : vector<32x512xf32> to vector<1x512xf32>
      %20 = arith.maximumf %18, %19 : vector<1x512xf32>
      %21 = vector.extract_strided_slice %17 {offsets = [4, 0], sizes = [1, 512], strides = [1, 1]} : vector<32x512xf32> to vector<1x512xf32>
      %22 = vector.extract_strided_slice %17 {offsets = [5, 0], sizes = [1, 512], strides = [1, 1]} : vector<32x512xf32> to vector<1x512xf32>
      %23 = arith.maximumf %21, %22 : vector<1x512xf32>
      %24 = arith.maximumf %20, %23 : vector<1x512xf32>
      %c0_14 = arith.constant 0 : index
      %c0_15 = arith.constant 0 : index
      %25 = vector.load %arg5[%c0_14, %c0_15] : memref<8x512xf32, #tpu.memory_space<vmem>>, vector<1x512xf32>
      tpu.vector_store %arg5[%c0_14, %c0_15], %24 {strides = array<i32>} : memref<8x512xf32, #tpu.memory_space<vmem>>, vector<1x512xf32>,
      %26 = vector.extract_strided_slice %17 {offsets = [2, 0], sizes = [1, 512], strides = [1, 1]} : vector<32x512xf32> to vector<1x512xf32>
      %27 = vector.extract_strided_slice %17 {offsets = [3, 0], sizes = [1, 512], strides = [1, 1]} : vector<32x512xf32> to vector<1x512xf32>
      %28 = arith.maximumf %26, %27 : vector<1x512xf32>
      %29 = vector.extract_strided_slice %17 {offsets = [6, 0], sizes = [1, 512], strides = [1, 1]} : vector<32x512xf32> to vector<1x512xf32>
      %30 = vector.extract_strided_slice %17 {offsets = [7, 0], sizes = [1, 512], strides = [1, 1]} : vector<32x512xf32> to vector<1x512xf32>
      %31 = arith.maximumf %29, %30 : vector<1x512xf32>
      %32 = arith.maximumf %28, %31 : vector<1x512xf32>
      %c1 = arith.constant 1 : index
      %c0_16 = arith.constant 0 : index
      %33 = vector.load %arg5[%c1, %c0_16] : memref<8x512xf32, #tpu.memory_space<vmem>>, vector<1x512xf32>
      tpu.vector_store %arg5[%c1, %c0_16], %32 {strides = array<i32>} : memref<8x512xf32, #tpu.memory_space<vmem>>, vector<1x512xf32>,
      %34 = vector.extract_strided_slice %17 {offsets = [8, 0], sizes = [1, 512], strides = [1, 1]} : vector<32x512xf32> to vector<1x512xf32>
      %35 = vector.extract_strided_slice %17 {offsets = [9, 0], sizes = [1, 512], strides = [1, 1]} : vector<32x512xf32> to vector<1x512xf32>
      %36 = arith.maximumf %34, %35 : vector<1x512xf32>
      %37 = vector.extract_strided_slice %17 {offsets = [12, 0], sizes = [1, 512], strides = [1, 1]} : vector<32x512xf32> to vector<1x512xf32>
      %38 = vector.extract_strided_slice %17 {offsets = [13, 0], sizes = [1, 512], strides = [1, 1]} : vector<32x512xf32> to vector<1x512xf32>
      %39 = arith.maximumf %37, %38 : vector<1x512xf32>
      %40 = arith.maximumf %36, %39 : vector<1x512xf32>
      %c2 = arith.constant 2 : index
      %c0_17 = arith.constant 0 : index
      %41 = vector.load %arg5[%c2, %c0_17] : memref<8x512xf32, #tpu.memory_space<vmem>>, vector<1x512xf32>
      tpu.vector_store %arg5[%c2, %c0_17], %40 {strides = array<i32>} : memref<8x512xf32, #tpu.memory_space<vmem>>, vector<1x512xf32>,
      %42 = vector.extract_strided_slice %17 {offsets = [10, 0], sizes = [1, 512], strides = [1, 1]} : vector<32x512xf32> to vector<1x512xf32>
      %43 = vector.extract_strided_slice %17 {offsets = [11, 0], sizes = [1, 512], strides = [1, 1]} : vector<32x512xf32> to vector<1x512xf32>
      %44 = arith.maximumf %42, %43 : vector<1x512xf32>
      %45 = vector.extract_strided_slice %17 {offsets = [14, 0], sizes = [1, 512], strides = [1, 1]} : vector<32x512xf32> to vector<1x512xf32>
      %46 = vector.extract_strided_slice %17 {offsets = [15, 0], sizes = [1, 512], strides = [1, 1]} : vector<32x512xf32> to vector<1x512xf32>
      %47 = arith.maximumf %45, %46 : vector<1x512xf32>
      %48 = arith.maximumf %44, %47 : vector<1x512xf32>
      %c3 = arith.constant 3 : index
      %c0_18 = arith.constant 0 : index
      %49 = vector.load %arg5[%c3, %c0_18] : memref<8x512xf32, #tpu.memory_space<vmem>>, vector<1x512xf32>
      tpu.vector_store %arg5[%c3, %c0_18], %48 {strides = array<i32>} : memref<8x512xf32, #tpu.memory_space<vmem>>, vector<1x512xf32>,
      %50 = vector.extract_strided_slice %17 {offsets = [16, 0], sizes = [1, 512], strides = [1, 1]} : vector<32x512xf32> to vector<1x512xf32>
      %51 = vector.extract_strided_slice %17 {offsets = [17, 0], sizes = [1, 512], strides = [1, 1]} : vector<32x512xf32> to vector<1x512xf32>
      %52 = arith.maximumf %50, %51 : vector<1x512xf32>
      %53 = vector.extract_strided_slice %17 {offsets = [20, 0], sizes = [1, 512], strides = [1, 1]} : vector<32x512xf32> to vector<1x512xf32>
      %54 = vector.extract_strided_slice %17 {offsets = [21, 0], sizes = [1, 512], strides = [1, 1]} : vector<32x512xf32> to vector<1x512xf32>
      %55 = arith.maximumf %53, %54 : vector<1x512xf32>
      %56 = arith.maximumf %52, %55 : vector<1x512xf32>
      %c4 = arith.constant 4 : index
      %c0_19 = arith.constant 0 : index
      %57 = vector.load %arg5[%c4, %c0_19] : memref<8x512xf32, #tpu.memory_space<vmem>>, vector<1x512xf32>
      tpu.vector_store %arg5[%c4, %c0_19], %56 {strides = array<i32>} : memref<8x512xf32, #tpu.memory_space<vmem>>, vector<1x512xf32>,
      %58 = vector.extract_strided_slice %17 {offsets = [18, 0], sizes = [1, 512], strides = [1, 1]} : vector<32x512xf32> to vector<1x512xf32>
      %59 = vector.extract_strided_slice %17 {offsets = [19, 0], sizes = [1, 512], strides = [1, 1]} : vector<32x512xf32> to vector<1x512xf32>
      %60 = arith.maximumf %58, %59 : vector<1x512xf32>
      %61 = vector.extract_strided_slice %17 {offsets = [22, 0], sizes = [1, 512], strides = [1, 1]} : vector<32x512xf32> to vector<1x512xf32>
      %62 = vector.extract_strided_slice %17 {offsets = [23, 0], sizes = [1, 512], strides = [1, 1]} : vector<32x512xf32> to vector<1x512xf32>
      %63 = arith.maximumf %61, %62 : vector<1x512xf32>
      %64 = arith.maximumf %60, %63 : vector<1x512xf32>
      %c5 = arith.constant 5 : index
      %c0_20 = arith.constant 0 : index
      %65 = vector.load %arg5[%c5, %c0_20] : memref<8x512xf32, #tpu.memory_space<vmem>>, vector<1x512xf32>
      tpu.vector_store %arg5[%c5, %c0_20], %64 {strides = array<i32>} : memref<8x512xf32, #tpu.memory_space<vmem>>, vector<1x512xf32>,
      %66 = vector.extract_strided_slice %17 {offsets = [24, 0], sizes = [1, 512], strides = [1, 1]} : vector<32x512xf32> to vector<1x512xf32>
      %67 = vector.extract_strided_slice %17 {offsets = [25, 0], sizes = [1, 512], strides = [1, 1]} : vector<32x512xf32> to vector<1x512xf32>
      %68 = arith.maximumf %66, %67 : vector<1x512xf32>
      %69 = vector.extract_strided_slice %17 {offsets = [28, 0], sizes = [1, 512], strides = [1, 1]} : vector<32x512xf32> to vector<1x512xf32>
      %70 = vector.extract_strided_slice %17 {offsets = [29, 0], sizes = [1, 512], strides = [1, 1]} : vector<32x512xf32> to vector<1x512xf32>
      %71 = arith.maximumf %69, %70 : vector<1x512xf32>
      %72 = arith.maximumf %68, %71 : vector<1x512xf32>
      %c6 = arith.constant 6 : index
      %c0_21 = arith.constant 0 : index
      %73 = vector.load %arg5[%c6, %c0_21] : memref<8x512xf32, #tpu.memory_space<vmem>>, vector<1x512xf32>
      tpu.vector_store %arg5[%c6, %c0_21], %72 {strides = array<i32>} : memref<8x512xf32, #tpu.memory_space<vmem>>, vector<1x512xf32>,
      %74 = vector.extract_strided_slice %17 {offsets = [26, 0], sizes = [1, 512], strides = [1, 1]} : vector<32x512xf32> to vector<1x512xf32>
      %75 = vector.extract_strided_slice %17 {offsets = [27, 0], sizes = [1, 512], strides = [1, 1]} : vector<32x512xf32> to vector<1x512xf32>
      %76 = arith.maximumf %74, %75 : vector<1x512xf32>
      %77 = vector.extract_strided_slice %17 {offsets = [30, 0], sizes = [1, 512], strides = [1, 1]} : vector<32x512xf32> to vector<1x512xf32>
      %78 = vector.extract_strided_slice %17 {offsets = [31, 0], sizes = [1, 512], strides = [1, 1]} : vector<32x512xf32> to vector<1x512xf32>
      %79 = arith.maximumf %77, %78 : vector<1x512xf32>
      %80 = arith.maximumf %76, %79 : vector<1x512xf32>
      %c7 = arith.constant 7 : index
      %c0_22 = arith.constant 0 : index
      %81 = vector.load %arg5[%c7, %c0_22] : memref<8x512xf32, #tpu.memory_space<vmem>>, vector<1x512xf32>
      tpu.vector_store %arg5[%c7, %c0_22], %80 {strides = array<i32>} : memref<8x512xf32, #tpu.memory_space<vmem>>, vector<1x512xf32>,
    } else {
    }
    return
  }
  func.func @transform_0(%arg0: i32, %arg1: i32) -> (i32, i32) {
    %c0_i32 = arith.constant 0 : i32
    %c0_i32_0 = arith.constant 0 : i32
    return %c0_i32, %arg1 : i32, i32
  }
  func.func @transform_1(%arg0: i32, %arg1: i32) -> (i32, i32) {
    %c0_i32 = arith.constant 0 : i32
    return %arg1, %arg0 : i32, i32
  }
  func.func @transform_2(%arg0: i32, %arg1: i32) -> (i32, i32) {
    %c0_i32 = arith.constant 0 : i32
    %c0_i32_0 = arith.constant 0 : i32
    return %c0_i32, %arg0 : i32, i32
  }
  func.func @transform_3(%arg0: i32, %arg1: i32) -> (i32, i32) {
    %c0_i32 = arith.constant 0 : i32
    %c0_i32_0 = arith.constant 0 : i32
    return %c0_i32, %arg0 : i32, i32
  }
}

module attributes {stable_mosaic.version = 11 : i64} {
  func.func @mlp_kernel(%arg0: i32, %arg1: memref<2x4096xf32, #tpu.memory_space<vmem>>, %arg2: memref<4096x256xf32, #tpu.memory_space<vmem>>, %arg3: memref<1x256xf32, #tpu.memory_space<vmem>>, %arg4: memref<1x256xf32, #tpu.memory_space<vmem>>, %arg5: memref<1x1xf32, #tpu.memory_space<vmem>>, %arg6: memref<2x1xf32, #tpu.memory_space<vmem>>) attributes {dimension_semantics = [#tpu.dimension_semantics<arbitrary>], iteration_bounds = array<i64: 1>, scalar_prefetch = 0 : i64, scratch_operands = 0 : i64, tpu.core_type = #tpu.core_type<tc>, window_params = [{pipeline_mode = #tpu.pipeline_mode<synchronous>, transform_indices = @transform_0, window_bounds = array<i64: 2, 4096>}, {pipeline_mode = #tpu.pipeline_mode<synchronous>, transform_indices = @transform_1, window_bounds = array<i64: 4096, 256>}, {pipeline_mode = #tpu.pipeline_mode<synchronous>, transform_indices = @transform_2, window_bounds = array<i64: 1, 256>}, {pipeline_mode = #tpu.pipeline_mode<synchronous>, transform_indices = @transform_3, window_bounds = array<i64: 1, 256>}, {pipeline_mode = #tpu.pipeline_mode<synchronous>, transform_indices = @transform_4, window_bounds = array<i64: 1, 1>}, {pipeline_mode = #tpu.pipeline_mode<synchronous>, transform_indices = @transform_5, window_bounds = array<i64: 2, 1>}]} {
    %c0 = arith.constant 0 : index
    %c0_0 = arith.constant 0 : index
    %0 = vector.load %arg1[%c0, %c0_0] : memref<2x4096xf32, #tpu.memory_space<vmem>>, vector<2x4096xf32>
    %c0_1 = arith.constant 0 : index
    %c0_2 = arith.constant 0 : index
    %1 = vector.load %arg2[%c0_1, %c0_2] : memref<4096x256xf32, #tpu.memory_space<vmem>>, vector<4096x256xf32>
    %cst = arith.constant dense<0.000000e+00> : vector<2x256xf32>
    %2 = tpu.matmul %0, %1, %cst {dimension_numbers = #tpu.dot_dimension_numbers<[1], [0], [0], [1], [0, 0, 1, 1], [], []>} : vector<2x4096xf32>, vector<4096x256xf32>, vector<2x256xf32> -> vector<2x256xf32>
    %c0_3 = arith.constant 0 : index
    %c0_4 = arith.constant 0 : index
    %3 = vector.load %arg3[%c0_3, %c0_4] : memref<1x256xf32, #tpu.memory_space<vmem>>, vector<1x256xf32>
    %4 = vector.broadcast %3 : vector<1x256xf32> to vector<2x256xf32>
    %5 = arith.addf %2, %4 : vector<2x256xf32>
    %cst_5 = arith.constant 0.000000e+00 : f32
    %6 = vector.broadcast %cst_5 : f32 to vector<2x256xf32>
    %7 = arith.maximumf %5, %6 : vector<2x256xf32>
    %c0_6 = arith.constant 0 : index
    %c0_7 = arith.constant 0 : index
    %8 = vector.load %arg4[%c0_6, %c0_7] : memref<1x256xf32, #tpu.memory_space<vmem>>, vector<1x256xf32>
    %9 = vector.broadcast %8 : vector<1x256xf32> to vector<2x256xf32>
    %10 = arith.mulf %7, %9 : vector<2x256xf32>
    %cst_8 = arith.constant dense<0.000000e+00> : vector<2xf32>
    %11 = vector.multi_reduction <add>, %10, %cst_8 [1] : vector<2x256xf32> to vector<2xf32>
    %12 = vector.shape_cast %11 : vector<2xf32> to vector<2x1xf32>
    %c0_9 = arith.constant 0 : index
    %c0_10 = arith.constant 0 : index
    %13 = vector.load %arg5[%c0_9, %c0_10] : memref<1x1xf32, #tpu.memory_space<vmem>>, vector<1x1xf32>
    %14 = vector.broadcast %13 : vector<1x1xf32> to vector<2x1xf32>
    %15 = arith.addf %12, %14 : vector<2x1xf32>
    %c0_11 = arith.constant 0 : index
    %c0_12 = arith.constant 0 : index
    %16 = vector.load %arg6[%c0_11, %c0_12] : memref<2x1xf32, #tpu.memory_space<vmem>>, vector<2x1xf32>
    tpu.vector_store %arg6[%c0_11, %c0_12], %15 {strides = array<i32>} : memref<2x1xf32, #tpu.memory_space<vmem>>, vector<2x1xf32>,
    return
  }
  func.func @transform_0(%arg0: i32) -> (i32, i32) {
    %c0_i32 = arith.constant 0 : i32
    %c0_i32_0 = arith.constant 0 : i32
    %c0_i32_1 = arith.constant 0 : i32
    return %c0_i32, %c0_i32_0 : i32, i32
  }
  func.func @transform_1(%arg0: i32) -> (i32, i32) {
    %c0_i32 = arith.constant 0 : i32
    %c0_i32_0 = arith.constant 0 : i32
    %c0_i32_1 = arith.constant 0 : i32
    return %c0_i32, %c0_i32_0 : i32, i32
  }
  func.func @transform_2(%arg0: i32) -> (i32, i32) {
    %c0_i32 = arith.constant 0 : i32
    %c0_i32_0 = arith.constant 0 : i32
    %c0_i32_1 = arith.constant 0 : i32
    return %c0_i32, %c0_i32_0 : i32, i32
  }
  func.func @transform_3(%arg0: i32) -> (i32, i32) {
    %c0_i32 = arith.constant 0 : i32
    %c0_i32_0 = arith.constant 0 : i32
    %c0_i32_1 = arith.constant 0 : i32
    return %c0_i32, %c0_i32_0 : i32, i32
  }
  func.func @transform_4(%arg0: i32) -> (i32, i32) {
    %c0_i32 = arith.constant 0 : i32
    %c0_i32_0 = arith.constant 0 : i32
    %c0_i32_1 = arith.constant 0 : i32
    return %c0_i32, %c0_i32_0 : i32, i32
  }
  func.func @transform_5(%arg0: i32) -> (i32, i32) {
    %c0_i32 = arith.constant 0 : i32
    %c0_i32_0 = arith.constant 0 : i32
    %c0_i32_1 = arith.constant 0 : i32
    return %c0_i32, %c0_i32_0 : i32, i32
  }
}

</mosaic_0001>

<llo_original>
// kernel: forward.2
$region0: #{forward.2}
  #allocation0 [shape = 'u32[]', space=smem, size = 0x4, offset = 0x4, fixed_abs, tag = 'smem constant byte address 0x4 - core index']
  #allocation1 [shape = 'u32[72,128]{1,0:T(1,128)}', space=vmem, size = 0x9000, scoped, tag = 'internal scratch']
  #allocation2 [shape = 'f32[32,512]{1,0:T(8,128)}', space=vmem, size = 0x10000, scoped, tag = 'scratch operand']
  %s0 = inlined_call_operand.vmem [shape: f32[32,4608], index: 0, kind: input, shape index: {}]
  %s1 = inlined_call_operand.vmem [shape: f32[4608,1024], index: 1, kind: input, shape index: {}]
  %s2 = inlined_call_operand.vmem [shape: f32[1,1024], index: 2, kind: input, shape index: {}]
  %s3 = inlined_call_operand.vmem [shape: f32[8,1024], index: 3, kind: output, shape index: {}]
  %s4 = sld [smem:[#allocation0]]
  $region99: #{forward.2} parent=0
    _
  %s6 = ssub.s32 1, %s4
  %s7 = scalar_select 0, %s6, %s4
  $region1: #{forward.2} parent=0
    #allocation3 [shape = 'u8[196608]{0}', space=vmem, size = 0x30000, scoped, tag = 'input window, operand 0']
    #allocation4 [shape = 'u8[3145728]{0}', space=vmem, size = 0x300000, scoped, tag = 'input window, operand 1']
    loop: start=0, step=1, limit=14
    $region2: #{forward.2} parent=1 // loop_pre_header
      _
    $region3: #{forward.2} parent=1 // loop_header
      %s9 = sphi 0, %s13
      %p10 = scmp.ge.s32.totalorder %s9, 14
      %s16 = sphi 0, %s28
      %s17 = sphi 0, %s24
      %s18 = sphi 0, %s16
      %s19 = sphi 0, %s17
      %s20 = sphi 0, %s18
      %s21 = sphi 0, %s19
      %s31 = sphi 0, %s33
      %s34 = sphi 0, %s31
      %s35 = sphi 0, %s34
      %s51 = sphi 0, %s35
      %s59 = sphi 0, %s61
      %s62 = sphi 0, %s59
      %s63 = sphi 0, %s62
      %s79 = sphi 0, %s63
      %s85 = sphi 0, %s87
      %s88 = sphi 0, %s85
      %s89 = sphi 0, %s88
      %s105 = sphi 0, %s89
      %s111 = sphi 0, %s113
      %s114 = sphi 0, %s111
      %s115 = sphi 0, %s114
      %s131 = sphi 0, %s115
    $region4: #{forward.2} parent=1 // loop_header_branch
      %12 = sbr.rel (%p10) target = $region8
    $region5: #{forward.2} parent=1 // loop_body
      %s14 = ssub.s32 %s9, 1
      %s15 = ssub.s32 %s9, 2
      %s22 = sadd.s32 1, %s17
      %p23 = scmp.ge.s32.totalorder %s22, 6
      %s24 = scalar_select %p23, 0, %s22
      %s25 = sadd.s32 1, %s16
      %s26 = scalar_select %p23, %s25, %s16
      %p27 = scmp.ge.s32.totalorder %s26, 2
      %s28 = scalar_select %p27, 0, %s26
      %s29 = ssub.s32 %s17, %s24
      %p30 = scmp.eq.s32.totalorder %s29, 0
      %s32 = sadd.s32 %s31, 1
      %s33 = scalar_select %p30, %s31, %s32
      %p36 = pneg %p30
      %p37 = scmp.eq.s32.totalorder %s9, 11
      %p38 = por %p36, %p37
      %p39 = scmp.ne.s32.totalorder %s31, %s34
      %p40 = scmp.eq.s32.totalorder %s9, 0
      %p41 = por %p39, %p40
      %p42 = scmp.ne.s32.totalorder %s31, %s34
      %p43 = scmp.eq.s32.totalorder %s14, 11
      %p44 = por %p42, %p43
      %p45 = scmp.ne.s32.totalorder %s34, %s35
      %p46 = scmp.eq.s32.totalorder %s14, 0
      %p47 = por %p45, %p46
      %p48 = scmp.ne.s32.totalorder %s34, %s35
      %p49 = scmp.eq.s32.totalorder %s15, 11
      %p50 = por %p48, %p49
      %p52 = scmp.ne.s32.totalorder %s35, %s51
      %p53 = scmp.eq.s32.totalorder %s15, 0
      %p54 = por %p52, %p53
      %s55 = ssub.s32 %s17, %s24
      %s56 = ssub.s32 %s16, %s28
      %s57 = sor.u32 %s55, %s56
      %p58 = scmp.eq.s32.totalorder %s57, 0
      %s60 = sadd.s32 %s59, 1
      %s61 = scalar_select %p58, %s59, %s60
      %p64 = pneg %p58
      %p65 = scmp.eq.s32.totalorder %s9, 11
      %p66 = por %p64, %p65
      %p67 = scmp.ne.s32.totalorder %s59, %s62
      %p68 = scmp.eq.s32.totalorder %s9, 0
      %p69 = por %p67, %p68
      %p70 = scmp.ne.s32.totalorder %s59, %s62
      %p71 = scmp.eq.s32.totalorder %s14, 11
      %p72 = por %p70, %p71
      %p73 = scmp.ne.s32.totalorder %s62, %s63
      %p74 = scmp.eq.s32.totalorder %s14, 0
      %p75 = por %p73, %p74
      %p76 = scmp.ne.s32.totalorder %s62, %s63
      %p77 = scmp.eq.s32.totalorder %s15, 11
      %p78 = por %p76, %p77
      %p80 = scmp.ne.s32.totalorder %s63, %s79
      %p81 = scmp.eq.s32.totalorder %s15, 0
      %p82 = por %p80, %p81
      %s83 = ssub.s32 %s16, %s28
      %p84 = scmp.eq.s32.totalorder %s83, 0
      %s86 = sadd.s32 %s85, 1
      %s87 = scalar_select %p84, %s85, %s86
      %p90 = pneg %p84
      %p91 = scmp.eq.s32.totalorder %s9, 11
      %p92 = por %p90, %p91
      %p93 = scmp.ne.s32.totalorder %s85, %s88
      %p94 = scmp.eq.s32.totalorder %s9, 0
      %p95 = por %p93, %p94
      %p96 = scmp.ne.s32.totalorder %s85, %s88
      %p97 = scmp.eq.s32.totalorder %s14, 11
      %p98 = por %p96, %p97
      %p99 = scmp.ne.s32.totalorder %s88, %s89
      %p100 = scmp.eq.s32.totalorder %s14, 0
      %p101 = por %p99, %p100
      %p102 = scmp.ne.s32.totalorder %s88, %s89
      %p103 = scmp.eq.s32.totalorder %s15, 11
      %p104 = por %p102, %p103
      %p106 = scmp.ne.s32.totalorder %s89, %s105
      %p107 = scmp.eq.s32.totalorder %s15, 0
      %p108 = por %p106, %p107
      %s109 = ssub.s32 %s16, %s28
      %p110 = scmp.eq.s32.totalorder %s109, 0
      %s112 = sadd.s32 %s111, 1
      %s113 = scalar_select %p110, %s111, %s112
      %p116 = pneg %p110
      %p117 = scmp.eq.s32.totalorder %s9, 11
      %p118 = por %p116, %p117
      %p119 = scmp.ne.s32.totalorder %s111, %s114
      %p120 = scmp.eq.s32.totalorder %s9, 0
      %p121 = por %p119, %p120
      %p122 = scmp.ne.s32.totalorder %s111, %s114
      %p123 = scmp.eq.s32.totalorder %s14, 11
      %p124 = por %p122, %p123
      %p125 = scmp.ne.s32.totalorder %s114, %s115
      %p126 = scmp.eq.s32.totalorder %s14, 0
      %p127 = por %p125, %p126
      %p128 = scmp.ne.s32.totalorder %s114, %s115
      %p129 = scmp.eq.s32.totalorder %s15, 11
      %p130 = por %p128, %p129
      %p132 = scmp.ne.s32.totalorder %s115, %s131
      %p133 = scmp.eq.s32.totalorder %s15, 0
      %p134 = por %p132, %p133
      %p135 = scmp.le.s32.totalorder 1, %s9
      %p136 = scmp.lt.s32.totalorder %s9, 13
      %p137 = pnand %p135, %p136
      %p138 = pneg %p137
      // Predicated region
      $region9: #{forward.2} parent=5 // pred_check
        _
      $region10: #{forward.2} parent=5 // pred_check_branch
        %140 = sbr.rel (%p137) target = $region12
      $region11: #{forward.2} parent=5 // pred_region
        %s141 = ssub.s32 %s9, 1
      $region12: #{forward.2} parent=5 // pred_fallthru
        _
      %p142 = scmp.lt.s32.totalorder %s9, 12
      // Predicated region
      $region13: #{forward.2} parent=5 // pred_check
        %p143 = pneg %p142
      $region14: #{forward.2} parent=5 // pred_check_branch
        %145 = sbr.rel (%p143) target = $region16
      $region15: #{forward.2} parent=5 // pred_region
        // Predicated region
        $region17: #{forward.2} parent=15 // pred_check
          %p146 = pneg %p41
        $region18: #{forward.2} parent=15 // pred_check_branch
          %148 = sbr.rel (%p146) target = $region20
        $region19: #{forward.2} parent=15 // pred_region
          %s149 = sand.u32 %s31, 1
          %s150 = sand.u32 %s31, 1
          %s151 = smul.addr %s150, 192
          %s152 = scalar_lea.vmem [#allocation3], %s151
          %s153 = smul.u32 6, %s17
          %s154 = smul.addr %s153, 8
          %s155 = scalar_lea.vmem %s0, %s154
          // Predicated region
          $region21: #{forward.2} parent=19 // pred_check
            _
          $region22: #{forward.2} parent=19 // pred_check_branch
            %157 = sbr.rel (0) target = $region24
          $region23: #{forward.2} parent=19 // pred_region
            // Predicated region
            $region25: #{forward.2} parent=23 // pred_check
              _
            $region26: #{forward.2} parent=23 // pred_check_branch
              %159 = sbr.rel (0) target = $region28
            $region27: #{forward.2} parent=23 // pred_region
              loop: start=0, step=1, limit=1
              $region29: #{forward.2} parent=27 // loop_pre_header
                _
              $region30: #{forward.2} parent=27 // loop_header
                %s161 = sphi 0, %s165
                %p162 = scmp.ge.s32.totalorder %s161, 1
                %s166 = sphi %s155, %s155
                %s167 = sphi %s152, %s152
              $region31: #{forward.2} parent=27 // loop_header_branch
                %164 = sbr.rel (%p162) target = $region35
              $region32: #{forward.2} parent=27 // loop_body
                %v168 = vld [vmem:[%s166] sm:$0xff]
                %169 = vst [vmem:[%s167] sm:$0xff] %v168
                %v170 = vld [vmem:[%s166 + $0x8] sm:$0xff]
                %171 = vst [vmem:[%s167 + $0x8] sm:$0xff] %v170
                %v172 = vld [vmem:[%s166 + $0x10] sm:$0xff]
                %173 = vst [vmem:[%s167 + $0x10] sm:$0xff] %v172
                %v174 = vld [vmem:[%s166 + $0x18] sm:$0xff]
                %175 = vst [vmem:[%s167 + $0x18] sm:$0xff] %v174
                %v176 = vld [vmem:[%s166 + $0x20] sm:$0xff]
                %177 = vst [vmem:[%s167 + $0x20] sm:$0xff] %v176
                %v178 = vld [vmem:[%s166 + $0x28] sm:$0xff]
                %179 = vst [vmem:[%s167 + $0x28] sm:$0xff] %v178
                %v180 = vld [vmem:[%s166 + $0x120] sm:$0xff]
                %181 = vst [vmem:[%s167 + $0x30] sm:$0xff] %v180
                %v182 = vld [vmem:[%s166 + $0x128] sm:$0xff]
                %183 = vst [vmem:[%s167 + $0x38] sm:$0xff] %v182
                %v184 = vld [vmem:[%s166 + $0x130] sm:$0xff]
                %185 = vst [vmem:[%s167 + $0x40] sm:$0xff] %v184
                %v186 = vld [vmem:[%s166 + $0x138] sm:$0xff]
                %187 = vst [vmem:[%s167 + $0x48] sm:$0xff] %v186
                %v188 = vld [vmem:[%s166 + $0x140] sm:$0xff]
                %189 = vst [vmem:[%s167 + $0x50] sm:$0xff] %v188
                %v190 = vld [vmem:[%s166 + $0x148] sm:$0xff]
                %191 = vst [vmem:[%s167 + $0x58] sm:$0xff] %v190
                %v192 = vld [vmem:[%s166 + $0x240] sm:$0xff]
                %193 = vst [vmem:[%s167 + $0x60] sm:$0xff] %v192
                %v194 = vld [vmem:[%s166 + $0x248] sm:$0xff]
                %195 = vst [vmem:[%s167 + $0x68] sm:$0xff] %v194
                %v196 = vld [vmem:[%s166 + $0x250] sm:$0xff]
                %197 = vst [vmem:[%s167 + $0x70] sm:$0xff] %v196
                %v198 = vld [vmem:[%s166 + $0x258] sm:$0xff]
                %199 = vst [vmem:[%s167 + $0x78] sm:$0xff] %v198
                %v200 = vld [vmem:[%s166 + $0x260] sm:$0xff]
                %201 = vst [vmem:[%s167 + $0x80] sm:$0xff] %v200
                %v202 = vld [vmem:[%s166 + $0x268] sm:$0xff]
                %203 = vst [vmem:[%s167 + $0x88] sm:$0xff] %v202
                %v204 = vld [vmem:[%s166 + $0x360] sm:$0xff]
                %205 = vst [vmem:[%s167 + $0x90] sm:$0xff] %v204
                %v206 = vld [vmem:[%s166 + $0x368] sm:$0xff]
                %207 = vst [vmem:[%s167 + $0x98] sm:$0xff] %v206
                %v208 = vld [vmem:[%s166 + $0x370] sm:$0xff]
                %209 = vst [vmem:[%s167 + $0xa0] sm:$0xff] %v208
                %v210 = vld [vmem:[%s166 + $0x378] sm:$0xff]
                %211 = vst [vmem:[%s167 + $0xa8] sm:$0xff] %v210
                %v212 = vld [vmem:[%s166 + $0x380] sm:$0xff]
                %213 = vst [vmem:[%s167 + $0xb0] sm:$0xff] %v212
                %v214 = vld [vmem:[%s166 + $0x388] sm:$0xff]
                %215 = vst [vmem:[%s167 + $0xb8] sm:$0xff] %v214
              $region33: #{forward.2} parent=27 // loop_footer
                %s165 = sadd.s32 1, %s161
              $region34: #{forward.2} parent=27 // loop_footer_branch
                %160 = sbr.rel target = $region30
              $region35: #{forward.2} parent=27 // loop_exit
                _
            $region28: #{forward.2} parent=23 // pred_fallthru
              _
            // Predicated region
            $region36: #{forward.2} parent=23 // pred_check
              _
            $region37: #{forward.2} parent=23 // pred_check_branch
              %217 = sbr.rel target = $region39
            $region38: #{forward.2} parent=23 // pred_region
              _
            $region39: #{forward.2} parent=23 // pred_fallthru
              _
          $region24: #{forward.2} parent=19 // pred_fallthru
            _
          %218 = vnop
        $region20: #{forward.2} parent=15 // pred_fallthru
          _
        // Predicated region
        $region40: #{forward.2} parent=15 // pred_check
          %p219 = pneg %p69
        $region41: #{forward.2} parent=15 // pred_check_branch
          %221 = sbr.rel (%p219) target = $region43
        $region42: #{forward.2} parent=15 // pred_region
          %s222 = sand.u32 %s59, 1
          %s223 = sand.u32 %s59, 1
          %s224 = smul.addr %s223, 3072
          %s225 = scalar_lea.vmem [#allocation4], %s224
          %s226 = smul.u32 96, %s17
          %s227 = smul.u32 4, %s16
          %s228 = smul.addr %s226, 8
          %s229 = sadd.s32 %s227, %s228
          %s230 = smul.addr %s229, 8
          %s231 = scalar_lea.vmem %s1, %s230
          // Predicated region
          $region44: #{forward.2} parent=42 // pred_check
            _
          $region45: #{forward.2} parent=42 // pred_check_branch
            %233 = sbr.rel (0) target = $region47
          $region46: #{forward.2} parent=42 // pred_region
            // Predicated region
            $region48: #{forward.2} parent=46 // pred_check
              _
            $region49: #{forward.2} parent=46 // pred_check_branch
              %235 = sbr.rel (0) target = $region51
            $region50: #{forward.2} parent=46 // pred_region
              loop: start=0, step=1, limit=1
              $region52: #{forward.2} parent=50 // loop_pre_header
                _
              $region53: #{forward.2} parent=50 // loop_header
                %s237 = sphi 0, %s241
                %p238 = scmp.ge.s32.totalorder %s237, 1
                %s242 = sphi %s231, %s231
                %s243 = sphi %s225, %s225
              $region54: #{forward.2} parent=50 // loop_header_branch
                %240 = sbr.rel (%p238) target = $region58
              $region55: #{forward.2} parent=50 // loop_body
                %v244 = vld [vmem:[%s242] sm:$0xff]
                %245 = vst [vmem:[%s243] sm:$0xff] %v244
                %v246 = vld [vmem:[%s242 + $0x8] sm:$0xff]
                %247 = vst [vmem:[%s243 + $0x8] sm:$0xff] %v246
                %v248 = vld [vmem:[%s242 + $0x10] sm:$0xff]
                %249 = vst [vmem:[%s243 + $0x10] sm:$0xff] %v248
                %v250 = vld [vmem:[%s242 + $0x18] sm:$0xff]
                %251 = vst [vmem:[%s243 + $0x18] sm:$0xff] %v250
                %v252 = vld [vmem:[%s242 + $0x40] sm:$0xff]
                %253 = vst [vmem:[%s243 + $0x20] sm:$0xff] %v252
                %v254 = vld [vmem:[%s242 + $0x48] sm:$0xff]
                %255 = vst [vmem:[%s243 + $0x28] sm:$0xff] %v254
                %v256 = vld [vmem:[%s242 + $0x50] sm:$0xff]
                %257 = vst [vmem:[%s243 + $0x30] sm:$0xff] %v256
                %v258 = vld [vmem:[%s242 + $0x58] sm:$0xff]
                %259 = vst [vmem:[%s243 + $0x38] sm:$0xff] %v258
                %v260 = vld [vmem:[%s242 + $0x80] sm:$0xff]
                %261 = vst [vmem:[%s243 + $0x40] sm:$0xff] %v260
                %v262 = vld [vmem:[%s242 + $0x88] sm:$0xff]
                %263 = vst [vmem:[%s243 + $0x48] sm:$0xff] %v262
                %v264 = vld [vmem:[%s242 + $0x90] sm:$0xff]
                %265 = vst [vmem:[%s243 + $0x50] sm:$0xff] %v264
                %v266 = vld [vmem:[%s242 + $0x98] sm:$0xff]
                %267 = vst [vmem:[%s243 + $0x58] sm:$0xff] %v266
                %v268 = vld [vmem:[%s242 + $0xc0] sm:$0xff]
                %269 = vst [vmem:[%s243 + $0x60] sm:$0xff] %v268
                %v270 = vld [vmem:[%s242 + $0xc8] sm:$0xff]
                %271 = vst [vmem:[%s243 + $0x68] sm:$0xff] %v270
                %v272 = vld [vmem:[%s242 + $0xd0] sm:$0xff]
                %273 = vst [vmem:[%s243 + $0x70] sm:$0xff] %v272
                %v274 = vld [vmem:[%s242 + $0xd8] sm:$0xff]
                %275 = vst [vmem:[%s243 + $0x78] sm:$0xff] %v274
                %v276 = vld [vmem:[%s242 + $0x100] sm:$0xff]
                %277 = vst [vmem:[%s243 + $0x80] sm:$0xff] %v276
                %v278 = vld [vmem:[%s242 + $0x108] sm:$0xff]
                %279 = vst [vmem:[%s243 + $0x88] sm:$0xff] %v278
                %v280 = vld [vmem:[%s242 + $0x110] sm:$0xff]
                %281 = vst [vmem:[%s243 + $0x90] sm:$0xff] %v280
                %v282 = vld [vmem:[%s242 + $0x118] sm:$0xff]
                %283 = vst [vmem:[%s243 + $0x98] sm:$0xff] %v282
                %v284 = vld [vmem:[%s242 + $0x140] sm:$0xff]
                %285 = vst [vmem:[%s243 + $0xa0] sm:$0xff] %v284
                %v286 = vld [vmem:[%s242 + $0x148] sm:$0xff]
                %287 = vst [vmem:[%s243 + $0xa8] sm:$0xff] %v286
                %v288 = vld [vmem:[%s242 + $0x150] sm:$0xff]
                %289 = vst [vmem:[%s243 + $0xb0] sm:$0xff] %v288
                %v290 = vld [vmem:[%s242 + $0x158] sm:$0xff]
                %291 = vst [vmem:[%s243 + $0xb8] sm:$0xff] %v290
                %v292 = vld [vmem:[%s242 + $0x180] sm:$0xff]
                %293 = vst [vmem:[%s243 + $0xc0] sm:$0xff] %v292
                %v294 = vld [vmem:[%s242 + $0x188] sm:$0xff]
                %295 = vst [vmem:[%s243 + $0xc8] sm:$0xff] %v294
                %v296 = vld [vmem:[%s242 + $0x190] sm:$0xff]
                %297 = vst [vmem:[%s243 + $0xd0] sm:$0xff] %v296
                %v298 = vld [vmem:[%s242 + $0x198] sm:$0xff]
                %299 = vst [vmem:[%s243 + $0xd8] sm:$0xff] %v298
                %v300 = vld [vmem:[%s242 + $0x1c0] sm:$0xff]
                %301 = vst [vmem:[%s243 + $0xe0] sm:$0xff] %v300
                %v302 = vld [vmem:[%s242 + $0x1c8] sm:$0xff]
                %303 = vst [vmem:[%s243 + $0xe8] sm:$0xff] %v302
                %v304 = vld [vmem:[%s242 + $0x1d0] sm:$0xff]
                %305 = vst [vmem:[%s243 + $0xf0] sm:$0xff] %v304
                %v306 = vld [vmem:[%s242 + $0x1d8] sm:$0xff]
                %307 = vst [vmem:[%s243 + $0xf8] sm:$0xff] %v306
                %v308 = vld [vmem:[%s242 + $0x200] sm:$0xff]
                %309 = vst [vmem:[%s243 + $0x100] sm:$0xff] %v308
                %v310 = vld [vmem:[%s242 + $0x208] sm:$0xff]
                %311 = vst [vmem:[%s243 + $0x108] sm:$0xff] %v310
                %v312 = vld [vmem:[%s242 + $0x210] sm:$0xff]
                %313 = vst [vmem:[%s243 + $0x110] sm:$0xff] %v312
                %v314 = vld [vmem:[%s242 + $0x218] sm:$0xff]
                %315 = vst [vmem:[%s243 + $0x118] sm:$0xff] %v314
                %v316 = vld [vmem:[%s242 + $0x240] sm:$0xff]
                %317 = vst [vmem:[%s243 + $0x120] sm:$0xff] %v316
                %v318 = vld [vmem:[%s242 + $0x248] sm:$0xff]
                %319 = vst [vmem:[%s243 + $0x128] sm:$0xff] %v318
                %v320 = vld [vmem:[%s242 + $0x250] sm:$0xff]
                %321 = vst [vmem:[%s243 + $0x130] sm:$0xff] %v320
                %v322 = vld [vmem:[%s242 + $0x258] sm:$0xff]
                %323 = vst [vmem:[%s243 + $0x138] sm:$0xff] %v322
                %v324 = vld [vmem:[%s242 + $0x280] sm:$0xff]
                %325 = vst [vmem:[%s243 + $0x140] sm:$0xff] %v324
                %v326 = vld [vmem:[%s242 + $0x288] sm:$0xff]
                %327 = vst [vmem:[%s243 + $0x148] sm:$0xff] %v326
                %v328 = vld [vmem:[%s242 + $0x290] sm:$0xff]
                %329 = vst [vmem:[%s243 + $0x150] sm:$0xff] %v328
                %v330 = vld [vmem:[%s242 + $0x298] sm:$0xff]
                %331 = vst [vmem:[%s243 + $0x158] sm:$0xff] %v330
                %v332 = vld [vmem:[%s242 + $0x2c0] sm:$0xff]
                %333 = vst [vmem:[%s243 + $0x160] sm:$0xff] %v332
                %v334 = vld [vmem:[%s242 + $0x2c8] sm:$0xff]
                %335 = vst [vmem:[%s243 + $0x168] sm:$0xff] %v334
                %v336 = vld [vmem:[%s242 + $0x2d0] sm:$0xff]
                %337 = vst [vmem:[%s243 + $0x170] sm:$0xff] %v336
                %v338 = vld [vmem:[%s242 + $0x2d8] sm:$0xff]
                %339 = vst [vmem:[%s243 + $0x178] sm:$0xff] %v338
                %v340 = vld [vmem:[%s242 + $0x300] sm:$0xff]
                %341 = vst [vmem:[%s243 + $0x180] sm:$0xff] %v340
                %v342 = vld [vmem:[%s242 + $0x308] sm:$0xff]
                %343 = vst [vmem:[%s243 + $0x188] sm:$0xff] %v342
                %v344 = vld [vmem:[%s242 + $0x310] sm:$0xff]
                %345 = vst [vmem:[%s243 + $0x190] sm:$0xff] %v344
                %v346 = vld [vmem:[%s242 + $0x318] sm:$0xff]
                %347 = vst [vmem:[%s243 + $0x198] sm:$0xff] %v346
                %v348 = vld [vmem:[%s242 + $0x340] sm:$0xff]
                %349 = vst [vmem:[%s243 + $0x1a0] sm:$0xff] %v348
                %v350 = vld [vmem:[%s242 + $0x348] sm:$0xff]
                %351 = vst [vmem:[%s243 + $0x1a8] sm:$0xff] %v350
                %v352 = vld [vmem:[%s242 + $0x350] sm:$0xff]
                %353 = vst [vmem:[%s243 + $0x1b0] sm:$0xff] %v352
                %v354 = vld [vmem:[%s242 + $0x358] sm:$0xff]
                %355 = vst [vmem:[%s243 + $0x1b8] sm:$0xff] %v354
                %v356 = vld [vmem:[%s242 + $0x380] sm:$0xff]
                %357 = vst [vmem:[%s243 + $0x1c0] sm:$0xff] %v356
                %v358 = vld [vmem:[%s242 + $0x388] sm:$0xff]
                %359 = vst [vmem:[%s243 + $0x1c8] sm:$0xff] %v358
                %v360 = vld [vmem:[%s242 + $0x390] sm:$0xff]
                %361 = vst [vmem:[%s243 + $0x1d0] sm:$0xff] %v360
                %v362 = vld [vmem:[%s242 + $0x398] sm:$0xff]
                %363 = vst [vmem:[%s243 + $0x1d8] sm:$0xff] %v362
                %v364 = vld [vmem:[%s242 + $0x3c0] sm:$0xff]
                %365 = vst [vmem:[%s243 + $0x1e0] sm:$0xff] %v364
                %v366 = vld [vmem:[%s242 + $0x3c8] sm:$0xff]
                %367 = vst [vmem:[%s243 + $0x1e8] sm:$0xff] %v366
                %v368 = vld [vmem:[%s242 + $0x3d0] sm:$0xff]
                %369 = vst [vmem:[%s243 + $0x1f0] sm:$0xff] %v368
                %v370 = vld [vmem:[%s242 + $0x3d8] sm:$0xff]
                %371 = vst [vmem:[%s243 + $0x1f8] sm:$0xff] %v370
                %v372 = vld [vmem:[%s242 + $0x400] sm:$0xff]
                %373 = vst [vmem:[%s243 + $0x200] sm:$0xff] %v372
                %v374 = vld [vmem:[%s242 + $0x408] sm:$0xff]
                %375 = vst [vmem:[%s243 + $0x208] sm:$0xff] %v374
                %v376 = vld [vmem:[%s242 + $0x410] sm:$0xff]
                %377 = vst [vmem:[%s243 + $0x210] sm:$0xff] %v376
                %v378 = vld [vmem:[%s242 + $0x418] sm:$0xff]
                %379 = vst [vmem:[%s243 + $0x218] sm:$0xff] %v378
                %v380 = vld [vmem:[%s242 + $0x440] sm:$0xff]
                %381 = vst [vmem:[%s243 + $0x220] sm:$0xff] %v380
                %v382 = vld [vmem:[%s242 + $0x448] sm:$0xff]
                %383 = vst [vmem:[%s243 + $0x228] sm:$0xff] %v382
                %v384 = vld [vmem:[%s242 + $0x450] sm:$0xff]
                %385 = vst [vmem:[%s243 + $0x230] sm:$0xff] %v384
                %v386 = vld [vmem:[%s242 + $0x458] sm:$0xff]
                %387 = vst [vmem:[%s243 + $0x238] sm:$0xff] %v386
                %v388 = vld [vmem:[%s242 + $0x480] sm:$0xff]
                %389 = vst [vmem:[%s243 + $0x240] sm:$0xff] %v388
                %v390 = vld [vmem:[%s242 + $0x488] sm:$0xff]
                %391 = vst [vmem:[%s243 + $0x248] sm:$0xff] %v390
                %v392 = vld [vmem:[%s242 + $0x490] sm:$0xff]
                %393 = vst [vmem:[%s243 + $0x250] sm:$0xff] %v392
                %v394 = vld [vmem:[%s242 + $0x498] sm:$0xff]
                %395 = vst [vmem:[%s243 + $0x258] sm:$0xff] %v394
                %v396 = vld [vmem:[%s242 + $0x4c0] sm:$0xff]
                %397 = vst [vmem:[%s243 + $0x260] sm:$0xff] %v396
                %v398 = vld [vmem:[%s242 + $0x4c8] sm:$0xff]
                %399 = vst [vmem:[%s243 + $0x268] sm:$0xff] %v398
                %v400 = vld [vmem:[%s242 + $0x4d0] sm:$0xff]
                %401 = vst [vmem:[%s243 + $0x270] sm:$0xff] %v400
                %v402 = vld [vmem:[%s242 + $0x4d8] sm:$0xff]
                %403 = vst [vmem:[%s243 + $0x278] sm:$0xff] %v402
                %v404 = vld [vmem:[%s242 + $0x500] sm:$0xff]
                %405 = vst [vmem:[%s243 + $0x280] sm:$0xff] %v404
                %v406 = vld [vmem:[%s242 + $0x508] sm:$0xff]
                %407 = vst [vmem:[%s243 + $0x288] sm:$0xff] %v406
                %v408 = vld [vmem:[%s242 + $0x510] sm:$0xff]
                %409 = vst [vmem:[%s243 + $0x290] sm:$0xff] %v408
                %v410 = vld [vmem:[%s242 + $0x518] sm:$0xff]
                %411 = vst [vmem:[%s243 + $0x298] sm:$0xff] %v410
                %v412 = vld [vmem:[%s242 + $0x540] sm:$0xff]
                %413 = vst [vmem:[%s243 + $0x2a0] sm:$0xff] %v412
                %v414 = vld [vmem:[%s242 + $0x548] sm:$0xff]
                %415 = vst [vmem:[%s243 + $0x2a8] sm:$0xff] %v414
                %v416 = vld [vmem:[%s242 + $0x550] sm:$0xff]
                %417 = vst [vmem:[%s243 + $0x2b0] sm:$0xff] %v416
                %v418 = vld [vmem:[%s242 + $0x558] sm:$0xff]
                %419 = vst [vmem:[%s243 + $0x2b8] sm:$0xff] %v418
                %v420 = vld [vmem:[%s242 + $0x580] sm:$0xff]
                %421 = vst [vmem:[%s243 + $0x2c0] sm:$0xff] %v420
                %v422 = vld [vmem:[%s242 + $0x588] sm:$0xff]
                %423 = vst [vmem:[%s243 + $0x2c8] sm:$0xff] %v422
                %v424 = vld [vmem:[%s242 + $0x590] sm:$0xff]
                %425 = vst [vmem:[%s243 + $0x2d0] sm:$0xff] %v424
                %v426 = vld [vmem:[%s242 + $0x598] sm:$0xff]
                %427 = vst [vmem:[%s243 + $0x2d8] sm:$0xff] %v426
                %v428 = vld [vmem:[%s242 + $0x5c0] sm:$0xff]
                %429 = vst [vmem:[%s243 + $0x2e0] sm:$0xff] %v428
                %v430 = vld [vmem:[%s242 + $0x5c8] sm:$0xff]
                %431 = vst [vmem:[%s243 + $0x2e8] sm:$0xff] %v430
                %v432 = vld [vmem:[%s242 + $0x5d0] sm:$0xff]
                %433 = vst [vmem:[%s243 + $0x2f0] sm:$0xff] %v432
                %v434 = vld [vmem:[%s242 + $0x5d8] sm:$0xff]
                %435 = vst [vmem:[%s243 + $0x2f8] sm:$0xff] %v434
                %v436 = vld [vmem:[%s242 + $0x600] sm:$0xff]
                %437 = vst [vmem:[%s243 + $0x300] sm:$0xff] %v436
                %v438 = vld [vmem:[%s242 + $0x608] sm:$0xff]
                %439 = vst [vmem:[%s243 + $0x308] sm:$0xff] %v438
                %v440 = vld [vmem:[%s242 + $0x610] sm:$0xff]
                %441 = vst [vmem:[%s243 + $0x310] sm:$0xff] %v440
                %v442 = vld [vmem:[%s242 + $0x618] sm:$0xff]
                %443 = vst [vmem:[%s243 + $0x318] sm:$0xff] %v442
                %v444 = vld [vmem:[%s242 + $0x640] sm:$0xff]
                %445 = vst [vmem:[%s243 + $0x320] sm:$0xff] %v444
                %v446 = vld [vmem:[%s242 + $0x648] sm:$0xff]
                %447 = vst [vmem:[%s243 + $0x328] sm:$0xff] %v446
                %v448 = vld [vmem:[%s242 + $0x650] sm:$0xff]
                %449 = vst [vmem:[%s243 + $0x330] sm:$0xff] %v448
                %v450 = vld [vmem:[%s242 + $0x658] sm:$0xff]
                %451 = vst [vmem:[%s243 + $0x338] sm:$0xff] %v450
                %v452 = vld [vmem:[%s242 + $0x680] sm:$0xff]
                %453 = vst [vmem:[%s243 + $0x340] sm:$0xff] %v452
                %v454 = vld [vmem:[%s242 + $0x688] sm:$0xff]
                %455 = vst [vmem:[%s243 + $0x348] sm:$0xff] %v454
                %v456 = vld [vmem:[%s242 + $0x690] sm:$0xff]
                %457 = vst [vmem:[%s243 + $0x350] sm:$0xff] %v456
                %v458 = vld [vmem:[%s242 + $0x698] sm:$0xff]
                %459 = vst [vmem:[%s243 + $0x358] sm:$0xff] %v458
                %v460 = vld [vmem:[%s242 + $0x6c0] sm:$0xff]
                %461 = vst [vmem:[%s243 + $0x360] sm:$0xff] %v460
                %v462 = vld [vmem:[%s242 + $0x6c8] sm:$0xff]
                %463 = vst [vmem:[%s243 + $0x368] sm:$0xff] %v462
                %v464 = vld [vmem:[%s242 + $0x6d0] sm:$0xff]
                %465 = vst [vmem:[%s243 + $0x370] sm:$0xff] %v464
                %v466 = vld [vmem:[%s242 + $0x6d8] sm:$0xff]
                %467 = vst [vmem:[%s243 + $0x378] sm:$0xff] %v466
                %v468 = vld [vmem:[%s242 + $0x700] sm:$0xff]
                %469 = vst [vmem:[%s243 + $0x380] sm:$0xff] %v468
                %v470 = vld [vmem:[%s242 + $0x708] sm:$0xff]
                %471 = vst [vmem:[%s243 + $0x388] sm:$0xff] %v470
                %v472 = vld [vmem:[%s242 + $0x710] sm:$0xff]
                %473 = vst [vmem:[%s243 + $0x390] sm:$0xff] %v472
                %v474 = vld [vmem:[%s242 + $0x718] sm:$0xff]
                %475 = vst [vmem:[%s243 + $0x398] sm:$0xff] %v474
                %v476 = vld [vmem:[%s242 + $0x740] sm:$0xff]
                %477 = vst [vmem:[%s243 + $0x3a0] sm:$0xff] %v476
                %v478 = vld [vmem:[%s242 + $0x748] sm:$0xff]
                %479 = vst [vmem:[%s243 + $0x3a8] sm:$0xff] %v478
                %v480 = vld [vmem:[%s242 + $0x750] sm:$0xff]
                %481 = vst [vmem:[%s243 + $0x3b0] sm:$0xff] %v480
                %v482 = vld [vmem:[%s242 + $0x758] sm:$0xff]
                %483 = vst [vmem:[%s243 + $0x3b8] sm:$0xff] %v482
                %v484 = vld [vmem:[%s242 + $0x780] sm:$0xff]
                %485 = vst [vmem:[%s243 + $0x3c0] sm:$0xff] %v484
                %v486 = vld [vmem:[%s242 + $0x788] sm:$0xff]
                %487 = vst [vmem:[%s243 + $0x3c8] sm:$0xff] %v486
                %v488 = vld [vmem:[%s242 + $0x790] sm:$0xff]
                %489 = vst [vmem:[%s243 + $0x3d0] sm:$0xff] %v488
                %v490 = vld [vmem:[%s242 + $0x798] sm:$0xff]
                %491 = vst [vmem:[%s243 + $0x3d8] sm:$0xff] %v490
                %v492 = vld [vmem:[%s242 + $0x7c0] sm:$0xff]
                %493 = vst [vmem:[%s243 + $0x3e0] sm:$0xff] %v492
                %v494 = vld [vmem:[%s242 + $0x7c8] sm:$0xff]
                %495 = vst [vmem:[%s243 + $0x3e8] sm:$0xff] %v494
                %v496 = vld [vmem:[%s242 + $0x7d0] sm:$0xff]
                %497 = vst [vmem:[%s243 + $0x3f0] sm:$0xff] %v496
                %v498 = vld [vmem:[%s242 + $0x7d8] sm:$0xff]
                %499 = vst [vmem:[%s243 + $0x3f8] sm:$0xff] %v498
                %v500 = vld [vmem:[%s242 + $0x800] sm:$0xff]
                %501 = vst [vmem:[%s243 + $0x400] sm:$0xff] %v500
                %v502 = vld [vmem:[%s242 + $0x808] sm:$0xff]
                %503 = vst [vmem:[%s243 + $0x408] sm:$0xff] %v502
                %v504 = vld [vmem:[%s242 + $0x810] sm:$0xff]
                %505 = vst [vmem:[%s243 + $0x410] sm:$0xff] %v504
                %v506 = vld [vmem:[%s242 + $0x818] sm:$0xff]
                %507 = vst [vmem:[%s243 + $0x418] sm:$0xff] %v506
                %v508 = vld [vmem:[%s242 + $0x840] sm:$0xff]
                %509 = vst [vmem:[%s243 + $0x420] sm:$0xff] %v508
                %v510 = vld [vmem:[%s242 + $0x848] sm:$0xff]
                %511 = vst [vmem:[%s243 + $0x428] sm:$0xff] %v510
                %v512 = vld [vmem:[%s242 + $0x850] sm:$0xff]
                %513 = vst [vmem:[%s243 + $0x430] sm:$0xff] %v512
                %v514 = vld [vmem:[%s242 + $0x858] sm:$0xff]
                %515 = vst [vmem:[%s243 + $0x438] sm:$0xff] %v514
                %v516 = vld [vmem:[%s242 + $0x880] sm:$0xff]
                %517 = vst [vmem:[%s243 + $0x440] sm:$0xff] %v516
                %v518 = vld [vmem:[%s242 + $0x888] sm:$0xff]
                %519 = vst [vmem:[%s243 + $0x448] sm:$0xff] %v518
                %v520 = vld [vmem:[%s242 + $0x890] sm:$0xff]
                %521 = vst [vmem:[%s243 + $0x450] sm:$0xff] %v520
                %v522 = vld [vmem:[%s242 + $0x898] sm:$0xff]
                %523 = vst [vmem:[%s243 + $0x458] sm:$0xff] %v522
                %v524 = vld [vmem:[%s242 + $0x8c0] sm:$0xff]
                %525 = vst [vmem:[%s243 + $0x460] sm:$0xff] %v524
                %v526 = vld [vmem:[%s242 + $0x8c8] sm:$0xff]
                %527 = vst [vmem:[%s243 + $0x468] sm:$0xff] %v526
                %v528 = vld [vmem:[%s242 + $0x8d0] sm:$0xff]
                %529 = vst [vmem:[%s243 + $0x470] sm:$0xff] %v528
                %v530 = vld [vmem:[%s242 + $0x8d8] sm:$0xff]
                %531 = vst [vmem:[%s243 + $0x478] sm:$0xff] %v530
                %v532 = vld [vmem:[%s242 + $0x900] sm:$0xff]
                %533 = vst [vmem:[%s243 + $0x480] sm:$0xff] %v532
                %v534 = vld [vmem:[%s242 + $0x908] sm:$0xff]
                %535 = vst [vmem:[%s243 + $0x488] sm:$0xff] %v534
                %v536 = vld [vmem:[%s242 + $0x910] sm:$0xff]
                %537 = vst [vmem:[%s243 + $0x490] sm:$0xff] %v536
                %v538 = vld [vmem:[%s242 + $0x918] sm:$0xff]
                %539 = vst [vmem:[%s243 + $0x498] sm:$0xff] %v538
                %v540 = vld [vmem:[%s242 + $0x940] sm:$0xff]
                %541 = vst [vmem:[%s243 + $0x4a0] sm:$0xff] %v540
                %v542 = vld [vmem:[%s242 + $0x948] sm:$0xff]
                %543 = vst [vmem:[%s243 + $0x4a8] sm:$0xff] %v542
                %v544 = vld [vmem:[%s242 + $0x950] sm:$0xff]
                %545 = vst [vmem:[%s243 + $0x4b0] sm:$0xff] %v544
                %v546 = vld [vmem:[%s242 + $0x958] sm:$0xff]
                %547 = vst [vmem:[%s243 + $0x4b8] sm:$0xff] %v546
                %v548 = vld [vmem:[%s242 + $0x980] sm:$0xff]
                %549 = vst [vmem:[%s243 + $0x4c0] sm:$0xff] %v548
                %v550 = vld [vmem:[%s242 + $0x988] sm:$0xff]
                %551 = vst [vmem:[%s243 + $0x4c8] sm:$0xff] %v550
                %v552 = vld [vmem:[%s242 + $0x990] sm:$0xff]
                %553 = vst [vmem:[%s243 + $0x4d0] sm:$0xff] %v552
                %v554 = vld [vmem:[%s242 + $0x998] sm:$0xff]
                %555 = vst [vmem:[%s243 + $0x4d8] sm:$0xff] %v554
                %v556 = vld [vmem:[%s242 + $0x9c0] sm:$0xff]
                %557 = vst [vmem:[%s243 + $0x4e0] sm:$0xff] %v556
                %v558 = vld [vmem:[%s242 + $0x9c8] sm:$0xff]
                %559 = vst [vmem:[%s243 + $0x4e8] sm:$0xff] %v558
                %v560 = vld [vmem:[%s242 + $0x9d0] sm:$0xff]
                %561 = vst [vmem:[%s243 + $0x4f0] sm:$0xff] %v560
                %v562 = vld [vmem:[%s242 + $0x9d8] sm:$0xff]
                %563 = vst [vmem:[%s243 + $0x4f8] sm:$0xff] %v562
                %v564 = vld [vmem:[%s242 + $0xa00] sm:$0xff]
                %565 = vst [vmem:[%s243 + $0x500] sm:$0xff] %v564
                %v566 = vld [vmem:[%s242 + $0xa08] sm:$0xff]
                %567 = vst [vmem:[%s243 + $0x508] sm:$0xff] %v566
                %v568 = vld [vmem:[%s242 + $0xa10] sm:$0xff]
                %569 = vst [vmem:[%s243 + $0x510] sm:$0xff] %v568
                %v570 = vld [vmem:[%s242 + $0xa18] sm:$0xff]
                %571 = vst [vmem:[%s243 + $0x518] sm:$0xff] %v570
                %v572 = vld [vmem:[%s242 + $0xa40] sm:$0xff]
                %573 = vst [vmem:[%s243 + $0x520] sm:$0xff] %v572
                %v574 = vld [vmem:[%s242 + $0xa48] sm:$0xff]
                %575 = vst [vmem:[%s243 + $0x528] sm:$0xff] %v574
                %v576 = vld [vmem:[%s242 + $0xa50] sm:$0xff]
                %577 = vst [vmem:[%s243 + $0x530] sm:$0xff] %v576
                %v578 = vld [vmem:[%s242 + $0xa58] sm:$0xff]
                %579 = vst [vmem:[%s243 + $0x538] sm:$0xff] %v578
                %v580 = vld [vmem:[%s242 + $0xa80] sm:$0xff]
                %581 = vst [vmem:[%s243 + $0x540] sm:$0xff] %v580
                %v582 = vld [vmem:[%s242 + $0xa88] sm:$0xff]
                %583 = vst [vmem:[%s243 + $0x548] sm:$0xff] %v582
                %v584 = vld [vmem:[%s242 + $0xa90] sm:$0xff]
                %585 = vst [vmem:[%s243 + $0x550] sm:$0xff] %v584
                %v586 = vld [vmem:[%s242 + $0xa98] sm:$0xff]
                %587 = vst [vmem:[%s243 + $0x558] sm:$0xff] %v586
                %v588 = vld [vmem:[%s242 + $0xac0] sm:$0xff]
                %589 = vst [vmem:[%s243 + $0x560] sm:$0xff] %v588
                %v590 = vld [vmem:[%s242 + $0xac8] sm:$0xff]
                %591 = vst [vmem:[%s243 + $0x568] sm:$0xff] %v590
                %v592 = vld [vmem:[%s242 + $0xad0] sm:$0xff]
                %593 = vst [vmem:[%s243 + $0x570] sm:$0xff] %v592
                %v594 = vld [vmem:[%s242 + $0xad8] sm:$0xff]
                %595 = vst [vmem:[%s243 + $0x578] sm:$0xff] %v594
                %v596 = vld [vmem:[%s242 + $0xb00] sm:$0xff]
                %597 = vst [vmem:[%s243 + $0x580] sm:$0xff] %v596
                %v598 = vld [vmem:[%s242 + $0xb08] sm:$0xff]
                %599 = vst [vmem:[%s243 + $0x588] sm:$0xff] %v598
                %v600 = vld [vmem:[%s242 + $0xb10] sm:$0xff]
                %601 = vst [vmem:[%s243 + $0x590] sm:$0xff] %v600
                %v602 = vld [vmem:[%s242 + $0xb18] sm:$0xff]
                %603 = vst [vmem:[%s243 + $0x598] sm:$0xff] %v602
                %v604 = vld [vmem:[%s242 + $0xb40] sm:$0xff]
                %605 = vst [vmem:[%s243 + $0x5a0] sm:$0xff] %v604
                %v606 = vld [vmem:[%s242 + $0xb48] sm:$0xff]
                %607 = vst [vmem:[%s243 + $0x5a8] sm:$0xff] %v606
                %v608 = vld [vmem:[%s242 + $0xb50] sm:$0xff]
                %609 = vst [vmem:[%s243 + $0x5b0] sm:$0xff] %v608
                %v610 = vld [vmem:[%s242 + $0xb58] sm:$0xff]
                %611 = vst [vmem:[%s243 + $0x5b8] sm:$0xff] %v610
                %v612 = vld [vmem:[%s242 + $0xb80] sm:$0xff]
                %613 = vst [vmem:[%s243 + $0x5c0] sm:$0xff] %v612
                %v614 = vld [vmem:[%s242 + $0xb88] sm:$0xff]
                %615 = vst [vmem:[%s243 + $0x5c8] sm:$0xff] %v614
                %v616 = vld [vmem:[%s242 + $0xb90] sm:$0xff]
                %617 = vst [vmem:[%s243 + $0x5d0] sm:$0xff] %v616
                %v618 = vld [vmem:[%s242 + $0xb98] sm:$0xff]
                %619 = vst [vmem:[%s243 + $0x5d8] sm:$0xff] %v618
                %v620 = vld [vmem:[%s242 + $0xbc0] sm:$0xff]
                %621 = vst [vmem:[%s243 + $0x5e0] sm:$0xff] %v620
                %v622 = vld [vmem:[%s242 + $0xbc8] sm:$0xff]
                %623 = vst [vmem:[%s243 + $0x5e8] sm:$0xff] %v622
                %v624 = vld [vmem:[%s242 + $0xbd0] sm:$0xff]
                %625 = vst [vmem:[%s243 + $0x5f0] sm:$0xff] %v624
                %v626 = vld [vmem:[%s242 + $0xbd8] sm:$0xff]
                %627 = vst [vmem:[%s243 + $0x5f8] sm:$0xff] %v626
                %v628 = vld [vmem:[%s242 + $0xc00] sm:$0xff]
                %629 = vst [vmem:[%s243 + $0x600] sm:$0xff] %v628
                %v630 = vld [vmem:[%s242 + $0xc08] sm:$0xff]
                %631 = vst [vmem:[%s243 + $0x608] sm:$0xff] %v630
                %v632 = vld [vmem:[%s242 + $0xc10] sm:$0xff]
                %633 = vst [vmem:[%s243 + $0x610] sm:$0xff] %v632
                %v634 = vld [vmem:[%s242 + $0xc18] sm:$0xff]
                %635 = vst [vmem:[%s243 + $0x618] sm:$0xff] %v634
                %v636 = vld [vmem:[%s242 + $0xc40] sm:$0xff]
                %637 = vst [vmem:[%s243 + $0x620] sm:$0xff] %v636
                %v638 = vld [vmem:[%s242 + $0xc48] sm:$0xff]
                %639 = vst [vmem:[%s243 + $0x628] sm:$0xff] %v638
                %v640 = vld [vmem:[%s242 + $0xc50] sm:$0xff]
                %641 = vst [vmem:[%s243 + $0x630] sm:$0xff] %v640
                %v642 = vld [vmem:[%s242 + $0xc58] sm:$0xff]
                %643 = vst [vmem:[%s243 + $0x638] sm:$0xff] %v642
                %v644 = vld [vmem:[%s242 + $0xc80] sm:$0xff]
                %645 = vst [vmem:[%s243 + $0x640] sm:$0xff] %v644
                %v646 = vld [vmem:[%s242 + $0xc88] sm:$0xff]
                %647 = vst [vmem:[%s243 + $0x648] sm:$0xff] %v646
                %v648 = vld [vmem:[%s242 + $0xc90] sm:$0xff]
                %649 = vst [vmem:[%s243 + $0x650] sm:$0xff] %v648
                %v650 = vld [vmem:[%s242 + $0xc98] sm:$0xff]
                %651 = vst [vmem:[%s243 + $0x658] sm:$0xff] %v650
                %v652 = vld [vmem:[%s242 + $0xcc0] sm:$0xff]
                %653 = vst [vmem:[%s243 + $0x660] sm:$0xff] %v652
                %v654 = vld [vmem:[%s242 + $0xcc8] sm:$0xff]
                %655 = vst [vmem:[%s243 + $0x668] sm:$0xff] %v654
                %v656 = vld [vmem:[%s242 + $0xcd0] sm:$0xff]
                %657 = vst [vmem:[%s243 + $0x670] sm:$0xff] %v656
                %v658 = vld [vmem:[%s242 + $0xcd8] sm:$0xff]
                %659 = vst [vmem:[%s243 + $0x678] sm:$0xff] %v658
                %v660 = vld [vmem:[%s242 + $0xd00] sm:$0xff]
                %661 = vst [vmem:[%s243 + $0x680] sm:$0xff] %v660
                %v662 = vld [vmem:[%s242 + $0xd08] sm:$0xff]
                %663 = vst [vmem:[%s243 + $0x688] sm:$0xff] %v662
                %v664 = vld [vmem:[%s242 + $0xd10] sm:$0xff]
                %665 = vst [vmem:[%s243 + $0x690] sm:$0xff] %v664
                %v666 = vld [vmem:[%s242 + $0xd18] sm:$0xff]
                %667 = vst [vmem:[%s243 + $0x698] sm:$0xff] %v666
                %v668 = vld [vmem:[%s242 + $0xd40] sm:$0xff]
                %669 = vst [vmem:[%s243 + $0x6a0] sm:$0xff] %v668
                %v670 = vld [vmem:[%s242 + $0xd48] sm:$0xff]
                %671 = vst [vmem:[%s243 + $0x6a8] sm:$0xff] %v670
                %v672 = vld [vmem:[%s242 + $0xd50] sm:$0xff]
                %673 = vst [vmem:[%s243 + $0x6b0] sm:$0xff] %v672
                %v674 = vld [vmem:[%s242 + $0xd58] sm:$0xff]
                %675 = vst [vmem:[%s243 + $0x6b8] sm:$0xff] %v674
                %v676 = vld [vmem:[%s242 + $0xd80] sm:$0xff]
                %677 = vst [vmem:[%s243 + $0x6c0] sm:$0xff] %v676
                %v678 = vld [vmem:[%s242 + $0xd88] sm:$0xff]
                %679 = vst [vmem:[%s243 + $0x6c8] sm:$0xff] %v678
                %v680 = vld [vmem:[%s242 + $0xd90] sm:$0xff]
                %681 = vst [vmem:[%s243 + $0x6d0] sm:$0xff] %v680
                %v682 = vld [vmem:[%s242 + $0xd98] sm:$0xff]
                %683 = vst [vmem:[%s243 + $0x6d8] sm:$0xff] %v682
                %v684 = vld [vmem:[%s242 + $0xdc0] sm:$0xff]
                %685 = vst [vmem:[%s243 + $0x6e0] sm:$0xff] %v684
                %v686 = vld [vmem:[%s242 + $0xdc8] sm:$0xff]
                %687 = vst [vmem:[%s243 + $0x6e8] sm:$0xff] %v686
                %v688 = vld [vmem:[%s242 + $0xdd0] sm:$0xff]
                %689 = vst [vmem:[%s243 + $0x6f0] sm:$0xff] %v688
                %v690 = vld [vmem:[%s242 + $0xdd8] sm:$0xff]
                %691 = vst [vmem:[%s243 + $0x6f8] sm:$0xff] %v690
                %v692 = vld [vmem:[%s242 + $0xe00] sm:$0xff]
                %693 = vst [vmem:[%s243 + $0x700] sm:$0xff] %v692
                %v694 = vld [vmem:[%s242 + $0xe08] sm:$0xff]
                %695 = vst [vmem:[%s243 + $0x708] sm:$0xff] %v694
                %v696 = vld [vmem:[%s242 + $0xe10] sm:$0xff]
                %697 = vst [vmem:[%s243 + $0x710] sm:$0xff] %v696
                %v698 = vld [vmem:[%s242 + $0xe18] sm:$0xff]
                %699 = vst [vmem:[%s243 + $0x718] sm:$0xff] %v698
                %v700 = vld [vmem:[%s242 + $0xe40] sm:$0xff]
                %701 = vst [vmem:[%s243 + $0x720] sm:$0xff] %v700
                %v702 = vld [vmem:[%s242 + $0xe48] sm:$0xff]
                %703 = vst [vmem:[%s243 + $0x728] sm:$0xff] %v702
                %v704 = vld [vmem:[%s242 + $0xe50] sm:$0xff]
                %705 = vst [vmem:[%s243 + $0x730] sm:$0xff] %v704
                %v706 = vld [vmem:[%s242 + $0xe58] sm:$0xff]
                %707 = vst [vmem:[%s243 + $0x738] sm:$0xff] %v706
                %v708 = vld [vmem:[%s242 + $0xe80] sm:$0xff]
                %709 = vst [vmem:[%s243 + $0x740] sm:$0xff] %v708
                %v710 = vld [vmem:[%s242 + $0xe88] sm:$0xff]
                %711 = vst [vmem:[%s243 + $0x748] sm:$0xff] %v710
                %v712 = vld [vmem:[%s242 + $0xe90] sm:$0xff]
                %713 = vst [vmem:[%s243 + $0x750] sm:$0xff] %v712
                %v714 = vld [vmem:[%s242 + $0xe98] sm:$0xff]
                %715 = vst [vmem:[%s243 + $0x758] sm:$0xff] %v714
                %v716 = vld [vmem:[%s242 + $0xec0] sm:$0xff]
                %717 = vst [vmem:[%s243 + $0x760] sm:$0xff] %v716
                %v718 = vld [vmem:[%s242 + $0xec8] sm:$0xff]
                %719 = vst [vmem:[%s243 + $0x768] sm:$0xff] %v718
                %v720 = vld [vmem:[%s242 + $0xed0] sm:$0xff]
                %721 = vst [vmem:[%s243 + $0x770] sm:$0xff] %v720
                %v722 = vld [vmem:[%s242 + $0xed8] sm:$0xff]
                %723 = vst [vmem:[%s243 + $0x778] sm:$0xff] %v722
                %v724 = vld [vmem:[%s242 + $0xf00] sm:$0xff]
                %725 = vst [vmem:[%s243 + $0x780] sm:$0xff] %v724
                %v726 = vld [vmem:[%s242 + $0xf08] sm:$0xff]
                %727 = vst [vmem:[%s243 + $0x788] sm:$0xff] %v726
                %v728 = vld [vmem:[%s242 + $0xf10] sm:$0xff]
                %729 = vst [vmem:[%s243 + $0x790] sm:$0xff] %v728
                %v730 = vld [vmem:[%s242 + $0xf18] sm:$0xff]
                %731 = vst [vmem:[%s243 + $0x798] sm:$0xff] %v730
                %v732 = vld [vmem:[%s242 + $0xf40] sm:$0xff]
                %733 = vst [vmem:[%s243 + $0x7a0] sm:$0xff] %v732
                %v734 = vld [vmem:[%s242 + $0xf48] sm:$0xff]
                %735 = vst [vmem:[%s243 + $0x7a8] sm:$0xff] %v734
                %v736 = vld [vmem:[%s242 + $0xf50] sm:$0xff]
                %737 = vst [vmem:[%s243 + $0x7b0] sm:$0xff] %v736
                %v738 = vld [vmem:[%s242 + $0xf58] sm:$0xff]
                %739 = vst [vmem:[%s243 + $0x7b8] sm:$0xff] %v738
                %v740 = vld [vmem:[%s242 + $0xf80] sm:$0xff]
                %741 = vst [vmem:[%s243 + $0x7c0] sm:$0xff] %v740
                %v742 = vld [vmem:[%s242 + $0xf88] sm:$0xff]
                %743 = vst [vmem:[%s243 + $0x7c8] sm:$0xff] %v742
                %v744 = vld [vmem:[%s242 + $0xf90] sm:$0xff]
                %745 = vst [vmem:[%s243 + $0x7d0] sm:$0xff] %v744
                %v746 = vld [vmem:[%s242 + $0xf98] sm:$0xff]
                %747 = vst [vmem:[%s243 + $0x7d8] sm:$0xff] %v746
                %v748 = vld [vmem:[%s242 + $0xfc0] sm:$0xff]
                %749 = vst [vmem:[%s243 + $0x7e0] sm:$0xff] %v748
                %v750 = vld [vmem:[%s242 + $0xfc8] sm:$0xff]
                %751 = vst [vmem:[%s243 + $0x7e8] sm:$0xff] %v750
                %v752 = vld [vmem:[%s242 + $0xfd0] sm:$0xff]
                %753 = vst [vmem:[%s243 + $0x7f0] sm:$0xff] %v752
                %v754 = vld [vmem:[%s242 + $0xfd8] sm:$0xff]
                %755 = vst [vmem:[%s243 + $0x7f8] sm:$0xff] %v754
                %v756 = vld [vmem:[%s242 + $0x1000] sm:$0xff]
                %757 = vst [vmem:[%s243 + $0x800] sm:$0xff] %v756
                %v758 = vld [vmem:[%s242 + $0x1008] sm:$0xff]
                %759 = vst [vmem:[%s243 + $0x808] sm:$0xff] %v758
                %v760 = vld [vmem:[%s242 + $0x1010] sm:$0xff]
                %761 = vst [vmem:[%s243 + $0x810] sm:$0xff] %v760
                %v762 = vld [vmem:[%s242 + $0x1018] sm:$0xff]
                %763 = vst [vmem:[%s243 + $0x818] sm:$0xff] %v762
                %v764 = vld [vmem:[%s242 + $0x1040] sm:$0xff]
                %765 = vst [vmem:[%s243 + $0x820] sm:$0xff] %v764
                %v766 = vld [vmem:[%s242 + $0x1048] sm:$0xff]
                %767 = vst [vmem:[%s243 + $0x828] sm:$0xff] %v766
                %v768 = vld [vmem:[%s242 + $0x1050] sm:$0xff]
                %769 = vst [vmem:[%s243 + $0x830] sm:$0xff] %v768
                %v770 = vld [vmem:[%s242 + $0x1058] sm:$0xff]
                %771 = vst [vmem:[%s243 + $0x838] sm:$0xff] %v770
                %v772 = vld [vmem:[%s242 + $0x1080] sm:$0xff]
                %773 = vst [vmem:[%s243 + $0x840] sm:$0xff] %v772
                %v774 = vld [vmem:[%s242 + $0x1088] sm:$0xff]
                %775 = vst [vmem:[%s243 + $0x848] sm:$0xff] %v774
                %v776 = vld [vmem:[%s242 + $0x1090] sm:$0xff]
                %777 = vst [vmem:[%s243 + $0x850] sm:$0xff] %v776
                %v778 = vld [vmem:[%s242 + $0x1098] sm:$0xff]
                %779 = vst [vmem:[%s243 + $0x858] sm:$0xff] %v778
                %v780 = vld [vmem:[%s242 + $0x10c0] sm:$0xff]
                %781 = vst [vmem:[%s243 + $0x860] sm:$0xff] %v780
                %v782 = vld [vmem:[%s242 + $0x10c8] sm:$0xff]
                %783 = vst [vmem:[%s243 + $0x868] sm:$0xff] %v782
                %v784 = vld [vmem:[%s242 + $0x10d0] sm:$0xff]
                %785 = vst [vmem:[%s243 + $0x870] sm:$0xff] %v784
                %v786 = vld [vmem:[%s242 + $0x10d8] sm:$0xff]
                %787 = vst [vmem:[%s243 + $0x878] sm:$0xff] %v786
                %v788 = vld [vmem:[%s242 + $0x1100] sm:$0xff]
                %789 = vst [vmem:[%s243 + $0x880] sm:$0xff] %v788
                %v790 = vld [vmem:[%s242 + $0x1108] sm:$0xff]
                %791 = vst [vmem:[%s243 + $0x888] sm:$0xff] %v790
                %v792 = vld [vmem:[%s242 + $0x1110] sm:$0xff]
                %793 = vst [vmem:[%s243 + $0x890] sm:$0xff] %v792
                %v794 = vld [vmem:[%s242 + $0x1118] sm:$0xff]
                %795 = vst [vmem:[%s243 + $0x898] sm:$0xff] %v794
                %v796 = vld [vmem:[%s242 + $0x1140] sm:$0xff]
                %797 = vst [vmem:[%s243 + $0x8a0] sm:$0xff] %v796
                %v798 = vld [vmem:[%s242 + $0x1148] sm:$0xff]
                %799 = vst [vmem:[%s243 + $0x8a8] sm:$0xff] %v798
                %v800 = vld [vmem:[%s242 + $0x1150] sm:$0xff]
                %801 = vst [vmem:[%s243 + $0x8b0] sm:$0xff] %v800
                %v802 = vld [vmem:[%s242 + $0x1158] sm:$0xff]
                %803 = vst [vmem:[%s243 + $0x8b8] sm:$0xff] %v802
                %v804 = vld [vmem:[%s242 + $0x1180] sm:$0xff]
                %805 = vst [vmem:[%s243 + $0x8c0] sm:$0xff] %v804
                %v806 = vld [vmem:[%s242 + $0x1188] sm:$0xff]
                %807 = vst [vmem:[%s243 + $0x8c8] sm:$0xff] %v806
                %v808 = vld [vmem:[%s242 + $0x1190] sm:$0xff]
                %809 = vst [vmem:[%s243 + $0x8d0] sm:$0xff] %v808
                %v810 = vld [vmem:[%s242 + $0x1198] sm:$0xff]
                %811 = vst [vmem:[%s243 + $0x8d8] sm:$0xff] %v810
                %v812 = vld [vmem:[%s242 + $0x11c0] sm:$0xff]
                %813 = vst [vmem:[%s243 + $0x8e0] sm:$0xff] %v812
                %v814 = vld [vmem:[%s242 + $0x11c8] sm:$0xff]
                %815 = vst [vmem:[%s243 + $0x8e8] sm:$0xff] %v814
                %v816 = vld [vmem:[%s242 + $0x11d0] sm:$0xff]
                %817 = vst [vmem:[%s243 + $0x8f0] sm:$0xff] %v816
                %v818 = vld [vmem:[%s242 + $0x11d8] sm:$0xff]
                %819 = vst [vmem:[%s243 + $0x8f8] sm:$0xff] %v818
                %v820 = vld [vmem:[%s242 + $0x1200] sm:$0xff]
                %821 = vst [vmem:[%s243 + $0x900] sm:$0xff] %v820
                %v822 = vld [vmem:[%s242 + $0x1208] sm:$0xff]
                %823 = vst [vmem:[%s243 + $0x908] sm:$0xff] %v822
                %v824 = vld [vmem:[%s242 + $0x1210] sm:$0xff]
                %825 = vst [vmem:[%s243 + $0x910] sm:$0xff] %v824
                %v826 = vld [vmem:[%s242 + $0x1218] sm:$0xff]
                %827 = vst [vmem:[%s243 + $0x918] sm:$0xff] %v826
                %v828 = vld [vmem:[%s242 + $0x1240] sm:$0xff]
                %829 = vst [vmem:[%s243 + $0x920] sm:$0xff] %v828
                %v830 = vld [vmem:[%s242 + $0x1248] sm:$0xff]
                %831 = vst [vmem:[%s243 + $0x928] sm:$0xff] %v830
                %v832 = vld [vmem:[%s242 + $0x1250] sm:$0xff]
                %833 = vst [vmem:[%s243 + $0x930] sm:$0xff] %v832
                %v834 = vld [vmem:[%s242 + $0x1258] sm:$0xff]
                %835 = vst [vmem:[%s243 + $0x938] sm:$0xff] %v834
                %v836 = vld [vmem:[%s242 + $0x1280] sm:$0xff]
                %837 = vst [vmem:[%s243 + $0x940] sm:$0xff] %v836
                %v838 = vld [vmem:[%s242 + $0x1288] sm:$0xff]
                %839 = vst [vmem:[%s243 + $0x948] sm:$0xff] %v838
                %v840 = vld [vmem:[%s242 + $0x1290] sm:$0xff]
                %841 = vst [vmem:[%s243 + $0x950] sm:$0xff] %v840
                %v842 = vld [vmem:[%s242 + $0x1298] sm:$0xff]
                %843 = vst [vmem:[%s243 + $0x958] sm:$0xff] %v842
                %v844 = vld [vmem:[%s242 + $0x12c0] sm:$0xff]
                %845 = vst [vmem:[%s243 + $0x960] sm:$0xff] %v844
                %v846 = vld [vmem:[%s242 + $0x12c8] sm:$0xff]
                %847 = vst [vmem:[%s243 + $0x968] sm:$0xff] %v846
                %v848 = vld [vmem:[%s242 + $0x12d0] sm:$0xff]
                %849 = vst [vmem:[%s243 + $0x970] sm:$0xff] %v848
                %v850 = vld [vmem:[%s242 + $0x12d8] sm:$0xff]
                %851 = vst [vmem:[%s243 + $0x978] sm:$0xff] %v850
                %v852 = vld [vmem:[%s242 + $0x1300] sm:$0xff]
                %853 = vst [vmem:[%s243 + $0x980] sm:$0xff] %v852
                %v854 = vld [vmem:[%s242 + $0x1308] sm:$0xff]
                %855 = vst [vmem:[%s243 + $0x988] sm:$0xff] %v854
                %v856 = vld [vmem:[%s242 + $0x1310] sm:$0xff]
                %857 = vst [vmem:[%s243 + $0x990] sm:$0xff] %v856
                %v858 = vld [vmem:[%s242 + $0x1318] sm:$0xff]
                %859 = vst [vmem:[%s243 + $0x998] sm:$0xff] %v858
                %v860 = vld [vmem:[%s242 + $0x1340] sm:$0xff]
                %861 = vst [vmem:[%s243 + $0x9a0] sm:$0xff] %v860
                %v862 = vld [vmem:[%s242 + $0x1348] sm:$0xff]
                %863 = vst [vmem:[%s243 + $0x9a8] sm:$0xff] %v862
                %v864 = vld [vmem:[%s242 + $0x1350] sm:$0xff]
                %865 = vst [vmem:[%s243 + $0x9b0] sm:$0xff] %v864
                %v866 = vld [vmem:[%s242 + $0x1358] sm:$0xff]
                %867 = vst [vmem:[%s243 + $0x9b8] sm:$0xff] %v866
                %v868 = vld [vmem:[%s242 + $0x1380] sm:$0xff]
                %869 = vst [vmem:[%s243 + $0x9c0] sm:$0xff] %v868
                %v870 = vld [vmem:[%s242 + $0x1388] sm:$0xff]
                %871 = vst [vmem:[%s243 + $0x9c8] sm:$0xff] %v870
                %v872 = vld [vmem:[%s242 + $0x1390] sm:$0xff]
                %873 = vst [vmem:[%s243 + $0x9d0] sm:$0xff] %v872
                %v874 = vld [vmem:[%s242 + $0x1398] sm:$0xff]
                %875 = vst [vmem:[%s243 + $0x9d8] sm:$0xff] %v874
                %v876 = vld [vmem:[%s242 + $0x13c0] sm:$0xff]
                %877 = vst [vmem:[%s243 + $0x9e0] sm:$0xff] %v876
                %v878 = vld [vmem:[%s242 + $0x13c8] sm:$0xff]
                %879 = vst [vmem:[%s243 + $0x9e8] sm:$0xff] %v878
                %v880 = vld [vmem:[%s242 + $0x13d0] sm:$0xff]
                %881 = vst [vmem:[%s243 + $0x9f0] sm:$0xff] %v880
                %v882 = vld [vmem:[%s242 + $0x13d8] sm:$0xff]
                %883 = vst [vmem:[%s243 + $0x9f8] sm:$0xff] %v882
                %v884 = vld [vmem:[%s242 + $0x1400] sm:$0xff]
                %885 = vst [vmem:[%s243 + $0xa00] sm:$0xff] %v884
                %v886 = vld [vmem:[%s242 + $0x1408] sm:$0xff]
                %887 = vst [vmem:[%s243 + $0xa08] sm:$0xff] %v886
                %v888 = vld [vmem:[%s242 + $0x1410] sm:$0xff]
                %889 = vst [vmem:[%s243 + $0xa10] sm:$0xff] %v888
                %v890 = vld [vmem:[%s242 + $0x1418] sm:$0xff]
                %891 = vst [vmem:[%s243 + $0xa18] sm:$0xff] %v890
                %v892 = vld [vmem:[%s242 + $0x1440] sm:$0xff]
                %893 = vst [vmem:[%s243 + $0xa20] sm:$0xff] %v892
                %v894 = vld [vmem:[%s242 + $0x1448] sm:$0xff]
                %895 = vst [vmem:[%s243 + $0xa28] sm:$0xff] %v894
                %v896 = vld [vmem:[%s242 + $0x1450] sm:$0xff]
                %897 = vst [vmem:[%s243 + $0xa30] sm:$0xff] %v896
                %v898 = vld [vmem:[%s242 + $0x1458] sm:$0xff]
                %899 = vst [vmem:[%s243 + $0xa38] sm:$0xff] %v898
                %v900 = vld [vmem:[%s242 + $0x1480] sm:$0xff]
                %901 = vst [vmem:[%s243 + $0xa40] sm:$0xff] %v900
                %v902 = vld [vmem:[%s242 + $0x1488] sm:$0xff]
                %903 = vst [vmem:[%s243 + $0xa48] sm:$0xff] %v902
                %v904 = vld [vmem:[%s242 + $0x1490] sm:$0xff]
                %905 = vst [vmem:[%s243 + $0xa50] sm:$0xff] %v904
                %v906 = vld [vmem:[%s242 + $0x1498] sm:$0xff]
                %907 = vst [vmem:[%s243 + $0xa58] sm:$0xff] %v906
                %v908 = vld [vmem:[%s242 + $0x14c0] sm:$0xff]
                %909 = vst [vmem:[%s243 + $0xa60] sm:$0xff] %v908
                %v910 = vld [vmem:[%s242 + $0x14c8] sm:$0xff]
                %911 = vst [vmem:[%s243 + $0xa68] sm:$0xff] %v910
                %v912 = vld [vmem:[%s242 + $0x14d0] sm:$0xff]
                %913 = vst [vmem:[%s243 + $0xa70] sm:$0xff] %v912
                %v914 = vld [vmem:[%s242 + $0x14d8] sm:$0xff]
                %915 = vst [vmem:[%s243 + $0xa78] sm:$0xff] %v914
                %v916 = vld [vmem:[%s242 + $0x1500] sm:$0xff]
                %917 = vst [vmem:[%s243 + $0xa80] sm:$0xff] %v916
                %v918 = vld [vmem:[%s242 + $0x1508] sm:$0xff]
                %919 = vst [vmem:[%s243 + $0xa88] sm:$0xff] %v918
                %v920 = vld [vmem:[%s242 + $0x1510] sm:$0xff]
                %921 = vst [vmem:[%s243 + $0xa90] sm:$0xff] %v920
                %v922 = vld [vmem:[%s242 + $0x1518] sm:$0xff]
                %923 = vst [vmem:[%s243 + $0xa98] sm:$0xff] %v922
                %v924 = vld [vmem:[%s242 + $0x1540] sm:$0xff]
                %925 = vst [vmem:[%s243 + $0xaa0] sm:$0xff] %v924
                %v926 = vld [vmem:[%s242 + $0x1548] sm:$0xff]
                %927 = vst [vmem:[%s243 + $0xaa8] sm:$0xff] %v926
                %v928 = vld [vmem:[%s242 + $0x1550] sm:$0xff]
                %929 = vst [vmem:[%s243 + $0xab0] sm:$0xff] %v928
                %v930 = vld [vmem:[%s242 + $0x1558] sm:$0xff]
                %931 = vst [vmem:[%s243 + $0xab8] sm:$0xff] %v930
                %v932 = vld [vmem:[%s242 + $0x1580] sm:$0xff]
                %933 = vst [vmem:[%s243 + $0xac0] sm:$0xff] %v932
                %v934 = vld [vmem:[%s242 + $0x1588] sm:$0xff]
                %935 = vst [vmem:[%s243 + $0xac8] sm:$0xff] %v934
                %v936 = vld [vmem:[%s242 + $0x1590] sm:$0xff]
                %937 = vst [vmem:[%s243 + $0xad0] sm:$0xff] %v936
                %v938 = vld [vmem:[%s242 + $0x1598] sm:$0xff]
                %939 = vst [vmem:[%s243 + $0xad8] sm:$0xff] %v938
                %v940 = vld [vmem:[%s242 + $0x15c0] sm:$0xff]
                %941 = vst [vmem:[%s243 + $0xae0] sm:$0xff] %v940
                %v942 = vld [vmem:[%s242 + $0x15c8] sm:$0xff]
                %943 = vst [vmem:[%s243 + $0xae8] sm:$0xff] %v942
                %v944 = vld [vmem:[%s242 + $0x15d0] sm:$0xff]
                %945 = vst [vmem:[%s243 + $0xaf0] sm:$0xff] %v944
                %v946 = vld [vmem:[%s242 + $0x15d8] sm:$0xff]
                %947 = vst [vmem:[%s243 + $0xaf8] sm:$0xff] %v946
                %v948 = vld [vmem:[%s242 + $0x1600] sm:$0xff]
                %949 = vst [vmem:[%s243 + $0xb00] sm:$0xff] %v948
                %v950 = vld [vmem:[%s242 + $0x1608] sm:$0xff]
                %951 = vst [vmem:[%s243 + $0xb08] sm:$0xff] %v950
                %v952 = vld [vmem:[%s242 + $0x1610] sm:$0xff]
                %953 = vst [vmem:[%s243 + $0xb10] sm:$0xff] %v952
                %v954 = vld [vmem:[%s242 + $0x1618] sm:$0xff]
                %955 = vst [vmem:[%s243 + $0xb18] sm:$0xff] %v954
                %v956 = vld [vmem:[%s242 + $0x1640] sm:$0xff]
                %957 = vst [vmem:[%s243 + $0xb20] sm:$0xff] %v956
                %v958 = vld [vmem:[%s242 + $0x1648] sm:$0xff]
                %959 = vst [vmem:[%s243 + $0xb28] sm:$0xff] %v958
                %v960 = vld [vmem:[%s242 + $0x1650] sm:$0xff]
                %961 = vst [vmem:[%s243 + $0xb30] sm:$0xff] %v960
                %v962 = vld [vmem:[%s242 + $0x1658] sm:$0xff]
                %963 = vst [vmem:[%s243 + $0xb38] sm:$0xff] %v962
                %v964 = vld [vmem:[%s242 + $0x1680] sm:$0xff]
                %965 = vst [vmem:[%s243 + $0xb40] sm:$0xff] %v964
                %v966 = vld [vmem:[%s242 + $0x1688] sm:$0xff]
                %967 = vst [vmem:[%s243 + $0xb48] sm:$0xff] %v966
                %v968 = vld [vmem:[%s242 + $0x1690] sm:$0xff]
                %969 = vst [vmem:[%s243 + $0xb50] sm:$0xff] %v968
                %v970 = vld [vmem:[%s242 + $0x1698] sm:$0xff]
                %971 = vst [vmem:[%s243 + $0xb58] sm:$0xff] %v970
                %v972 = vld [vmem:[%s242 + $0x16c0] sm:$0xff]
                %973 = vst [vmem:[%s243 + $0xb60] sm:$0xff] %v972
                %v974 = vld [vmem:[%s242 + $0x16c8] sm:$0xff]
                %975 = vst [vmem:[%s243 + $0xb68] sm:$0xff] %v974
                %v976 = vld [vmem:[%s242 + $0x16d0] sm:$0xff]
                %977 = vst [vmem:[%s243 + $0xb70] sm:$0xff] %v976
                %v978 = vld [vmem:[%s242 + $0x16d8] sm:$0xff]
                %979 = vst [vmem:[%s243 + $0xb78] sm:$0xff] %v978
                %v980 = vld [vmem:[%s242 + $0x1700] sm:$0xff]
                %981 = vst [vmem:[%s243 + $0xb80] sm:$0xff] %v980
                %v982 = vld [vmem:[%s242 + $0x1708] sm:$0xff]
                %983 = vst [vmem:[%s243 + $0xb88] sm:$0xff] %v982
                %v984 = vld [vmem:[%s242 + $0x1710] sm:$0xff]
                %985 = vst [vmem:[%s243 + $0xb90] sm:$0xff] %v984
                %v986 = vld [vmem:[%s242 + $0x1718] sm:$0xff]
                %987 = vst [vmem:[%s243 + $0xb98] sm:$0xff] %v986
                %v988 = vld [vmem:[%s242 + $0x1740] sm:$0xff]
                %989 = vst [vmem:[%s243 + $0xba0] sm:$0xff] %v988
                %v990 = vld [vmem:[%s242 + $0x1748] sm:$0xff]
                %991 = vst [vmem:[%s243 + $0xba8] sm:$0xff] %v990
                %v992 = vld [vmem:[%s242 + $0x1750] sm:$0xff]
                %993 = vst [vmem:[%s243 + $0xbb0] sm:$0xff] %v992
                %v994 = vld [vmem:[%s242 + $0x1758] sm:$0xff]
                %995 = vst [vmem:[%s243 + $0xbb8] sm:$0xff] %v994
                %v996 = vld [vmem:[%s242 + $0x1780] sm:$0xff]
                %997 = vst [vmem:[%s243 + $0xbc0] sm:$0xff] %v996
                %v998 = vld [vmem:[%s242 + $0x1788] sm:$0xff]
                %999 = vst [vmem:[%s243 + $0xbc8] sm:$0xff] %v998
                %v1000 = vld [vmem:[%s242 + $0x1790] sm:$0xff]
                %1001 = vst [vmem:[%s243 + $0xbd0] sm:$0xff] %v1000
                %v1002 = vld [vmem:[%s242 + $0x1798] sm:$0xff]
                %1003 = vst [vmem:[%s243 + $0xbd8] sm:$0xff] %v1002
                %v1004 = vld [vmem:[%s242 + $0x17c0] sm:$0xff]
                %1005 = vst [vmem:[%s243 + $0xbe0] sm:$0xff] %v1004
                %v1006 = vld [vmem:[%s242 + $0x17c8] sm:$0xff]
                %1007 = vst [vmem:[%s243 + $0xbe8] sm:$0xff] %v1006
                %v1008 = vld [vmem:[%s242 + $0x17d0] sm:$0xff]
                %1009 = vst [vmem:[%s243 + $0xbf0] sm:$0xff] %v1008
                %v1010 = vld [vmem:[%s242 + $0x17d8] sm:$0xff]
                %1011 = vst [vmem:[%s243 + $0xbf8] sm:$0xff] %v1010
              $region56: #{forward.2} parent=50 // loop_footer
                %s241 = sadd.s32 1, %s237
              $region57: #{forward.2} parent=50 // loop_footer_branch
                %236 = sbr.rel target = $region53
              $region58: #{forward.2} parent=50 // loop_exit
                _
            $region51: #{forward.2} parent=46 // pred_fallthru
              _
            // Predicated region
            $region59: #{forward.2} parent=46 // pred_check
              _
            $region60: #{forward.2} parent=46 // pred_check_branch
              %1013 = sbr.rel target = $region62
            $region61: #{forward.2} parent=46 // pred_region
              _
            $region62: #{forward.2} parent=46 // pred_fallthru
              _
          $region47: #{forward.2} parent=42 // pred_fallthru
            _
          %1014 = vnop
        $region43: #{forward.2} parent=15 // pred_fallthru
          _
        // Predicated region
        $region63: #{forward.2} parent=15 // pred_check
          %p1015 = pneg %p95
        $region64: #{forward.2} parent=15 // pred_check_branch
          %1017 = sbr.rel (%p1015) target = $region66
        $region65: #{forward.2} parent=15 // pred_region
          %s1018 = smul.u32 4, %s16
          %p1019 = scmp.lt.s32.totalorder %s1018, 7
          %s1020 = scalar_select %p1019, %s1018, 7
          %s1021 = scalar_lea.vmem %s2, %s1020
          %s1022 = smul.u32 4, %s16
        $region66: #{forward.2} parent=15 // pred_fallthru
          _
      $region16: #{forward.2} parent=5 // pred_fallthru
        _
      %p1023 = scmp.le.s32.totalorder 1, %s9
      %p1024 = scmp.lt.s32.totalorder %s9, 13
      %p1025 = pnand %p1023, %p1024
      %p1026 = pneg %p1025
      // Predicated region
      $region67: #{forward.2} parent=5 // pred_check
        _
      $region68: #{forward.2} parent=5 // pred_check_branch
        %1028 = sbr.rel (%p1025) target = $region70
      $region69: #{forward.2} parent=5 // pred_region
        %s1029 = ssub.s32 %s9, 1
        %s1030 = sand.u32 %s34, 1
        %s1031 = sand.u32 %s34, 1
        %s1032 = smul.addr %s1031, 192
        %s1033 = scalar_lea.vmem [#allocation3], %s1032
        // Predicated region
        $region71: #{forward.2} parent=69 // pred_check
          %p1034 = pneg %p47
        $region72: #{forward.2} parent=69 // pred_check_branch
          %1036 = sbr.rel (%p1034) target = $region74
        $region73: #{forward.2} parent=69 // pred_region
          _
        $region74: #{forward.2} parent=69 // pred_fallthru
          _
        %s1037 = sand.u32 %s62, 1
        %s1038 = sand.u32 %s62, 1
        %s1039 = smul.addr %s1038, 3072
        %s1040 = scalar_lea.vmem [#allocation4], %s1039
        // Predicated region
        $region75: #{forward.2} parent=69 // pred_check
          %p1041 = pneg %p75
        $region76: #{forward.2} parent=69 // pred_check_branch
          %1043 = sbr.rel (%p1041) target = $region78
        $region77: #{forward.2} parent=69 // pred_region
          _
        $region78: #{forward.2} parent=69 // pred_fallthru
          _
        %s1044 = sand.u32 %s34, 1
        %s1045 = sand.u32 %s34, 1
        %s1046 = smul.addr %s1045, 192
        %s1047 = scalar_lea.vmem [#allocation3], %s1046
        %p1048 = pneg %p47
        %p1049 = pneg %p44
        %s1050 = sand.u32 %s62, 1
        %s1051 = sand.u32 %s62, 1
        %s1052 = smul.addr %s1051, 3072
        %s1053 = scalar_lea.vmem [#allocation4], %s1052
        %p1054 = pneg %p75
        %p1055 = pneg %p72
        %s1056 = smul.u32 4, %s18
        %p1057 = scmp.lt.s32.totalorder %s1056, 7
        %s1058 = scalar_select %p1057, %s1056, 7
        %s1059 = scalar_lea.vmem %s2, %s1058
        %p1060 = pneg %p101
        %p1061 = pneg %p98
        %p1062 = pneg %p127
        %p1063 = pneg %p124
        %s1064 = smul.u32 4, %s18
        %p1065 = scmp.lt.s32.totalorder %s1064, 7
        %s1066 = scalar_select %p1065, %s1064, 7
        %s1067 = smul.addr %s1066, 8
        %s1068 = scalar_lea.vmem %s3, %s1067
        %s1069 = smul.u32 6, %s19
        %s1070 = smul.u32 96, %s19
        %s1071 = smul.u32 4, %s18
        %s1072 = smul.u32 4, %s18
        %p1073 = scmp.lt.s32.totalorder %s1072, 7
        %s1074 = scalar_select %p1073, %s1072, 7
        %s1075 = scalar_lea.vmem %s2, %s1074
        %s1076 = smul.u32 4, %s18
        %s1077 = smul.u32 4, %s18
        %p1078 = scmp.lt.s32.totalorder %s1077, 7
        %s1079 = scalar_select %p1078, %s1077, 7
        %s1080 = smul.addr %s1079, 8
        %s1081 = scalar_lea.vmem %s3, %s1080
        %s1082 = smul.u32 4, %s18
        %p1083 = scmp.eq.s32.totalorder %s19, 0
        // Predicated region
        $region79: #{forward.2} parent=69 // pred_check
          %p1084 = pneg %p1083
        $region80: #{forward.2} parent=69 // pred_check_branch
          %1086 = sbr.rel (%p1084) target = $region82
        $region81: #{forward.2} parent=69 // pred_region
          %1087 = vst [vmem:[#allocation2] sm:$0xff] 0.0
          %1088 = vst [vmem:[#allocation2 + $0x8] sm:$0xff] 0.0
          %1089 = vst [vmem:[#allocation2 + $0x10] sm:$0xff] 0.0
          %1090 = vst [vmem:[#allocation2 + $0x18] sm:$0xff] 0.0
          %1091 = vst [vmem:[#allocation2 + $0x20] sm:$0xff] 0.0
          %1092 = vst [vmem:[#allocation2 + $0x28] sm:$0xff] 0.0
          %1093 = vst [vmem:[#allocation2 + $0x30] sm:$0xff] 0.0
          %1094 = vst [vmem:[#allocation2 + $0x38] sm:$0xff] 0.0
          %1095 = vst [vmem:[#allocation2 + $0x40] sm:$0xff] 0.0
          %1096 = vst [vmem:[#allocation2 + $0x48] sm:$0xff] 0.0
          %1097 = vst [vmem:[#allocation2 + $0x50] sm:$0xff] 0.0
          %1098 = vst [vmem:[#allocation2 + $0x58] sm:$0xff] 0.0
          %1099 = vst [vmem:[#allocation2 + $0x60] sm:$0xff] 0.0
          %1100 = vst [vmem:[#allocation2 + $0x68] sm:$0xff] 0.0
          %1101 = vst [vmem:[#allocation2 + $0x70] sm:$0xff] 0.0
          %1102 = vst [vmem:[#allocation2 + $0x78] sm:$0xff] 0.0
        $region82: #{forward.2} parent=69 // pred_fallthru
          _
        %v1103 = vld [vmem:[#allocation2] sm:$0xff]
        %v1104 = vld [vmem:[#allocation2 + $0x8] sm:$0xff]
        %v1105 = vld [vmem:[#allocation2 + $0x10] sm:$0xff]
        %v1106 = vld [vmem:[#allocation2 + $0x18] sm:$0xff]
        %v1107 = vld [vmem:[#allocation2 + $0x20] sm:$0xff]
        %v1108 = vld [vmem:[#allocation2 + $0x28] sm:$0xff]
        %v1109 = vld [vmem:[#allocation2 + $0x30] sm:$0xff]
        %v1110 = vld [vmem:[#allocation2 + $0x38] sm:$0xff]
        %v1111 = vld [vmem:[#allocation2 + $0x40] sm:$0xff]
        %v1112 = vld [vmem:[#allocation2 + $0x48] sm:$0xff]
        %v1113 = vld [vmem:[#allocation2 + $0x50] sm:$0xff]
        %v1114 = vld [vmem:[#allocation2 + $0x58] sm:$0xff]
        %v1115 = vld [vmem:[#allocation2 + $0x60] sm:$0xff]
        %v1116 = vld [vmem:[#allocation2 + $0x68] sm:$0xff]
        %v1117 = vld [vmem:[#allocation2 + $0x70] sm:$0xff]
        %v1118 = vld [vmem:[#allocation2 + $0x78] sm:$0xff]
        %v1119 = vld [vmem:[%s1033] sm:$0xff]
        %v1120 = vld [vmem:[%s1033 + $0x8] sm:$0xff]
        %v1121 = vld [vmem:[%s1033 + $0x10] sm:$0xff]
        %v1122 = vld [vmem:[%s1033 + $0x18] sm:$0xff]
        %v1123 = vld [vmem:[%s1033 + $0x20] sm:$0xff]
        %v1124 = vld [vmem:[%s1033 + $0x28] sm:$0xff]
        %v1125 = vld [vmem:[%s1033 + $0x30] sm:$0xff]
        %v1126 = vld [vmem:[%s1033 + $0x38] sm:$0xff]
        %v1127 = vld [vmem:[%s1033 + $0x40] sm:$0xff]
        %v1128 = vld [vmem:[%s1033 + $0x48] sm:$0xff]
        %v1129 = vld [vmem:[%s1033 + $0x50] sm:$0xff]
        %v1130 = vld [vmem:[%s1033 + $0x58] sm:$0xff]
        %v1131 = vld [vmem:[%s1033 + $0x60] sm:$0xff]
        %v1132 = vld [vmem:[%s1033 + $0x68] sm:$0xff]
        %v1133 = vld [vmem:[%s1033 + $0x70] sm:$0xff]
        %v1134 = vld [vmem:[%s1033 + $0x78] sm:$0xff]
        %v1135 = vld [vmem:[%s1033 + $0x80] sm:$0xff]
        %v1136 = vld [vmem:[%s1033 + $0x88] sm:$0xff]
        %v1137 = vld [vmem:[%s1033 + $0x90] sm:$0xff]
        %v1138 = vld [vmem:[%s1033 + $0x98] sm:$0xff]
        %v1139 = vld [vmem:[%s1033 + $0xa0] sm:$0xff]
        %v1140 = vld [vmem:[%s1033 + $0xa8] sm:$0xff]
        %v1141 = vld [vmem:[%s1033 + $0xb0] sm:$0xff]
        %v1142 = vld [vmem:[%s1033 + $0xb8] sm:$0xff]
        %v1143 = vld [vmem:[%s1040] sm:$0xff]
        %v1144 = vld [vmem:[%s1040 + $0x8] sm:$0xff]
        %v1145 = vld [vmem:[%s1040 + $0x10] sm:$0xff]
        %v1146 = vld [vmem:[%s1040 + $0x18] sm:$0xff]
        %v1147 = vld [vmem:[%s1040 + $0x20] sm:$0xff]
        %v1148 = vld [vmem:[%s1040 + $0x28] sm:$0xff]
        %v1149 = vld [vmem:[%s1040 + $0x30] sm:$0xff]
        %v1150 = vld [vmem:[%s1040 + $0x38] sm:$0xff]
        %v1151 = vld [vmem:[%s1040 + $0x40] sm:$0xff]
        %v1152 = vld [vmem:[%s1040 + $0x48] sm:$0xff]
        %v1153 = vld [vmem:[%s1040 + $0x50] sm:$0xff]
        %v1154 = vld [vmem:[%s1040 + $0x58] sm:$0xff]
        %v1155 = vld [vmem:[%s1040 + $0x60] sm:$0xff]
        %v1156 = vld [vmem:[%s1040 + $0x68] sm:$0xff]
        %v1157 = vld [vmem:[%s1040 + $0x70] sm:$0xff]
        %v1158 = vld [vmem:[%s1040 + $0x78] sm:$0xff]
        %v1159 = vld [vmem:[%s1040 + $0x80] sm:$0xff]
        %v1160 = vld [vmem:[%s1040 + $0x88] sm:$0xff]
        %v1161 = vld [vmem:[%s1040 + $0x90] sm:$0xff]
        %v1162 = vld [vmem:[%s1040 + $0x98] sm:$0xff]
        %v1163 = vld [vmem:[%s1040 + $0xa0] sm:$0xff]
        %v1164 = vld [vmem:[%s1040 + $0xa8] sm:$0xff]
        %v1165 = vld [vmem:[%s1040 + $0xb0] sm:$0xff]
        %v1166 = vld [vmem:[%s1040 + $0xb8] sm:$0xff]
        %v1167 = vld [vmem:[%s1040 + $0xc0] sm:$0xff]
        %v1168 = vld [vmem:[%s1040 + $0xc8] sm:$0xff]
        %v1169 = vld [vmem:[%s1040 + $0xd0] sm:$0xff]
        %v1170 = vld [vmem:[%s1040 + $0xd8] sm:$0xff]
        %v1171 = vld [vmem:[%s1040 + $0xe0] sm:$0xff]
        %v1172 = vld [vmem:[%s1040 + $0xe8] sm:$0xff]
        %v1173 = vld [vmem:[%s1040 + $0xf0] sm:$0xff]
        %v1174 = vld [vmem:[%s1040 + $0xf8] sm:$0xff]
        %v1175 = vld [vmem:[%s1040 + $0x100] sm:$0xff]
        %v1176 = vld [vmem:[%s1040 + $0x108] sm:$0xff]
        %v1177 = vld [vmem:[%s1040 + $0x110] sm:$0xff]
        %v1178 = vld [vmem:[%s1040 + $0x118] sm:$0xff]
        %v1179 = vld [vmem:[%s1040 + $0x120] sm:$0xff]
        %v1180 = vld [vmem:[%s1040 + $0x128] sm:$0xff]
        %v1181 = vld [vmem:[%s1040 + $0x130] sm:$0xff]
        %v1182 = vld [vmem:[%s1040 + $0x138] sm:$0xff]
        %v1183 = vld [vmem:[%s1040 + $0x140] sm:$0xff]
        %v1184 = vld [vmem:[%s1040 + $0x148] sm:$0xff]
        %v1185 = vld [vmem:[%s1040 + $0x150] sm:$0xff]
        %v1186 = vld [vmem:[%s1040 + $0x158] sm:$0xff]
        %v1187 = vld [vmem:[%s1040 + $0x160] sm:$0xff]
        %v1188 = vld [vmem:[%s1040 + $0x168] sm:$0xff]
        %v1189 = vld [vmem:[%s1040 + $0x170] sm:$0xff]
        %v1190 = vld [vmem:[%s1040 + $0x178] sm:$0xff]
        %v1191 = vld [vmem:[%s1040 + $0x180] sm:$0xff]
        %v1192 = vld [vmem:[%s1040 + $0x188] sm:$0xff]
        %v1193 = vld [vmem:[%s1040 + $0x190] sm:$0xff]
        %v1194 = vld [vmem:[%s1040 + $0x198] sm:$0xff]
        %v1195 = vld [vmem:[%s1040 + $0x1a0] sm:$0xff]
        %v1196 = vld [vmem:[%s1040 + $0x1a8] sm:$0xff]
        %v1197 = vld [vmem:[%s1040 + $0x1b0] sm:$0xff]
        %v1198 = vld [vmem:[%s1040 + $0x1b8] sm:$0xff]
        %v1199 = vld [vmem:[%s1040 + $0x1c0] sm:$0xff]
        %v1200 = vld [vmem:[%s1040 + $0x1c8] sm:$0xff]
        %v1201 = vld [vmem:[%s1040 + $0x1d0] sm:$0xff]
        %v1202 = vld [vmem:[%s1040 + $0x1d8] sm:$0xff]
        %v1203 = vld [vmem:[%s1040 + $0x1e0] sm:$0xff]
        %v1204 = vld [vmem:[%s1040 + $0x1e8] sm:$0xff]
        %v1205 = vld [vmem:[%s1040 + $0x1f0] sm:$0xff]
        %v1206 = vld [vmem:[%s1040 + $0x1f8] sm:$0xff]
        %v1207 = vld [vmem:[%s1040 + $0x200] sm:$0xff]
        %v1208 = vld [vmem:[%s1040 + $0x208] sm:$0xff]
        %v1209 = vld [vmem:[%s1040 + $0x210] sm:$0xff]
        %v1210 = vld [vmem:[%s1040 + $0x218] sm:$0xff]
        %v1211 = vld [vmem:[%s1040 + $0x220] sm:$0xff]
        %v1212 = vld [vmem:[%s1040 + $0x228] sm:$0xff]
        %v1213 = vld [vmem:[%s1040 + $0x230] sm:$0xff]
        %v1214 = vld [vmem:[%s1040 + $0x238] sm:$0xff]
        %v1215 = vld [vmem:[%s1040 + $0x240] sm:$0xff]
        %v1216 = vld [vmem:[%s1040 + $0x248] sm:$0xff]
        %v1217 = vld [vmem:[%s1040 + $0x250] sm:$0xff]
        %v1218 = vld [vmem:[%s1040 + $0x258] sm:$0xff]
        %v1219 = vld [vmem:[%s1040 + $0x260] sm:$0xff]
        %v1220 = vld [vmem:[%s1040 + $0x268] sm:$0xff]
        %v1221 = vld [vmem:[%s1040 + $0x270] sm:$0xff]
        %v1222 = vld [vmem:[%s1040 + $0x278] sm:$0xff]
        %v1223 = vld [vmem:[%s1040 + $0x280] sm:$0xff]
        %v1224 = vld [vmem:[%s1040 + $0x288] sm:$0xff]
        %v1225 = vld [vmem:[%s1040 + $0x290] sm:$0xff]
        %v1226 = vld [vmem:[%s1040 + $0x298] sm:$0xff]
        %v1227 = vld [vmem:[%s1040 + $0x2a0] sm:$0xff]
        %v1228 = vld [vmem:[%s1040 + $0x2a8] sm:$0xff]
        %v1229 = vld [vmem:[%s1040 + $0x2b0] sm:$0xff]
        %v1230 = vld [vmem:[%s1040 + $0x2b8] sm:$0xff]
        %v1231 = vld [vmem:[%s1040 + $0x2c0] sm:$0xff]
        %v1232 = vld [vmem:[%s1040 + $0x2c8] sm:$0xff]
        %v1233 = vld [vmem:[%s1040 + $0x2d0] sm:$0xff]
        %v1234 = vld [vmem:[%s1040 + $0x2d8] sm:$0xff]
        %v1235 = vld [vmem:[%s1040 + $0x2e0] sm:$0xff]
        %v1236 = vld [vmem:[%s1040 + $0x2e8] sm:$0xff]
        %v1237 = vld [vmem:[%s1040 + $0x2f0] sm:$0xff]
        %v1238 = vld [vmem:[%s1040 + $0x2f8] sm:$0xff]
        %v1239 = vld [vmem:[%s1040 + $0x300] sm:$0xff]
        %v1240 = vld [vmem:[%s1040 + $0x308] sm:$0xff]
        %v1241 = vld [vmem:[%s1040 + $0x310] sm:$0xff]
        %v1242 = vld [vmem:[%s1040 + $0x318] sm:$0xff]
        %v1243 = vld [vmem:[%s1040 + $0x320] sm:$0xff]
        %v1244 = vld [vmem:[%s1040 + $0x328] sm:$0xff]
        %v1245 = vld [vmem:[%s1040 + $0x330] sm:$0xff]
        %v1246 = vld [vmem:[%s1040 + $0x338] sm:$0xff]
        %v1247 = vld [vmem:[%s1040 + $0x340] sm:$0xff]
        %v1248 = vld [vmem:[%s1040 + $0x348] sm:$0xff]
        %v1249 = vld [vmem:[%s1040 + $0x350] sm:$0xff]
        %v1250 = vld [vmem:[%s1040 + $0x358] sm:$0xff]
        %v1251 = vld [vmem:[%s1040 + $0x360] sm:$0xff]
        %v1252 = vld [vmem:[%s1040 + $0x368] sm:$0xff]
        %v1253 = vld [vmem:[%s1040 + $0x370] sm:$0xff]
        %v1254 = vld [vmem:[%s1040 + $0x378] sm:$0xff]
        %v1255 = vld [vmem:[%s1040 + $0x380] sm:$0xff]
        %v1256 = vld [vmem:[%s1040 + $0x388] sm:$0xff]
        %v1257 = vld [vmem:[%s1040 + $0x390] sm:$0xff]
        %v1258 = vld [vmem:[%s1040 + $0x398] sm:$0xff]
        %v1259 = vld [vmem:[%s1040 + $0x3a0] sm:$0xff]
        %v1260 = vld [vmem:[%s1040 + $0x3a8] sm:$0xff]
        %v1261 = vld [vmem:[%s1040 + $0x3b0] sm:$0xff]
        %v1262 = vld [vmem:[%s1040 + $0x3b8] sm:$0xff]
        %v1263 = vld [vmem:[%s1040 + $0x3c0] sm:$0xff]
        %v1264 = vld [vmem:[%s1040 + $0x3c8] sm:$0xff]
        %v1265 = vld [vmem:[%s1040 + $0x3d0] sm:$0xff]
        %v1266 = vld [vmem:[%s1040 + $0x3d8] sm:$0xff]
        %v1267 = vld [vmem:[%s1040 + $0x3e0] sm:$0xff]
        %v1268 = vld [vmem:[%s1040 + $0x3e8] sm:$0xff]
        %v1269 = vld [vmem:[%s1040 + $0x3f0] sm:$0xff]
        %v1270 = vld [vmem:[%s1040 + $0x3f8] sm:$0xff]
        %v1271 = vld [vmem:[%s1040 + $0x400] sm:$0xff]
        %v1272 = vld [vmem:[%s1040 + $0x408] sm:$0xff]
        %v1273 = vld [vmem:[%s1040 + $0x410] sm:$0xff]
        %v1274 = vld [vmem:[%s1040 + $0x418] sm:$0xff]
        %v1275 = vld [vmem:[%s1040 + $0x420] sm:$0xff]
        %v1276 = vld [vmem:[%s1040 + $0x428] sm:$0xff]
        %v1277 = vld [vmem:[%s1040 + $0x430] sm:$0xff]
        %v1278 = vld [vmem:[%s1040 + $0x438] sm:$0xff]
        %v1279 = vld [vmem:[%s1040 + $0x440] sm:$0xff]
        %v1280 = vld [vmem:[%s1040 + $0x448] sm:$0xff]
        %v1281 = vld [vmem:[%s1040 + $0x450] sm:$0xff]
        %v1282 = vld [vmem:[%s1040 + $0x458] sm:$0xff]
        %v1283 = vld [vmem:[%s1040 + $0x460] sm:$0xff]
        %v1284 = vld [vmem:[%s1040 + $0x468] sm:$0xff]
        %v1285 = vld [vmem:[%s1040 + $0x470] sm:$0xff]
        %v1286 = vld [vmem:[%s1040 + $0x478] sm:$0xff]
        %v1287 = vld [vmem:[%s1040 + $0x480] sm:$0xff]
        %v1288 = vld [vmem:[%s1040 + $0x488] sm:$0xff]
        %v1289 = vld [vmem:[%s1040 + $0x490] sm:$0xff]
        %v1290 = vld [vmem:[%s1040 + $0x498] sm:$0xff]
        %v1291 = vld [vmem:[%s1040 + $0x4a0] sm:$0xff]
        %v1292 = vld [vmem:[%s1040 + $0x4a8] sm:$0xff]
        %v1293 = vld [vmem:[%s1040 + $0x4b0] sm:$0xff]
        %v1294 = vld [vmem:[%s1040 + $0x4b8] sm:$0xff]
        %v1295 = vld [vmem:[%s1040 + $0x4c0] sm:$0xff]
        %v1296 = vld [vmem:[%s1040 + $0x4c8] sm:$0xff]
        %v1297 = vld [vmem:[%s1040 + $0x4d0] sm:$0xff]
        %v1298 = vld [vmem:[%s1040 + $0x4d8] sm:$0xff]
        %v1299 = vld [vmem:[%s1040 + $0x4e0] sm:$0xff]
        %v1300 = vld [vmem:[%s1040 + $0x4e8] sm:$0xff]
        %v1301 = vld [vmem:[%s1040 + $0x4f0] sm:$0xff]
        %v1302 = vld [vmem:[%s1040 + $0x4f8] sm:$0xff]
        %v1303 = vld [vmem:[%s1040 + $0x500] sm:$0xff]
        %v1304 = vld [vmem:[%s1040 + $0x508] sm:$0xff]
        %v1305 = vld [vmem:[%s1040 + $0x510] sm:$0xff]
        %v1306 = vld [vmem:[%s1040 + $0x518] sm:$0xff]
        %v1307 = vld [vmem:[%s1040 + $0x520] sm:$0xff]
        %v1308 = vld [vmem:[%s1040 + $0x528] sm:$0xff]
        %v1309 = vld [vmem:[%s1040 + $0x530] sm:$0xff]
        %v1310 = vld [vmem:[%s1040 + $0x538] sm:$0xff]
        %v1311 = vld [vmem:[%s1040 + $0x540] sm:$0xff]
        %v1312 = vld [vmem:[%s1040 + $0x548] sm:$0xff]
        %v1313 = vld [vmem:[%s1040 + $0x550] sm:$0xff]
        %v1314 = vld [vmem:[%s1040 + $0x558] sm:$0xff]
        %v1315 = vld [vmem:[%s1040 + $0x560] sm:$0xff]
        %v1316 = vld [vmem:[%s1040 + $0x568] sm:$0xff]
        %v1317 = vld [vmem:[%s1040 + $0x570] sm:$0xff]
        %v1318 = vld [vmem:[%s1040 + $0x578] sm:$0xff]
        %v1319 = vld [vmem:[%s1040 + $0x580] sm:$0xff]
        %v1320 = vld [vmem:[%s1040 + $0x588] sm:$0xff]
        %v1321 = vld [vmem:[%s1040 + $0x590] sm:$0xff]
        %v1322 = vld [vmem:[%s1040 + $0x598] sm:$0xff]
        %v1323 = vld [vmem:[%s1040 + $0x5a0] sm:$0xff]
        %v1324 = vld [vmem:[%s1040 + $0x5a8] sm:$0xff]
        %v1325 = vld [vmem:[%s1040 + $0x5b0] sm:$0xff]
        %v1326 = vld [vmem:[%s1040 + $0x5b8] sm:$0xff]
        %v1327 = vld [vmem:[%s1040 + $0x5c0] sm:$0xff]
        %v1328 = vld [vmem:[%s1040 + $0x5c8] sm:$0xff]
        %v1329 = vld [vmem:[%s1040 + $0x5d0] sm:$0xff]
        %v1330 = vld [vmem:[%s1040 + $0x5d8] sm:$0xff]
        %v1331 = vld [vmem:[%s1040 + $0x5e0] sm:$0xff]
        %v1332 = vld [vmem:[%s1040 + $0x5e8] sm:$0xff]
        %v1333 = vld [vmem:[%s1040 + $0x5f0] sm:$0xff]
        %v1334 = vld [vmem:[%s1040 + $0x5f8] sm:$0xff]
        %v1335 = vld [vmem:[%s1040 + $0x600] sm:$0xff]
        %v1336 = vld [vmem:[%s1040 + $0x608] sm:$0xff]
        %v1337 = vld [vmem:[%s1040 + $0x610] sm:$0xff]
        %v1338 = vld [vmem:[%s1040 + $0x618] sm:$0xff]
        %v1339 = vld [vmem:[%s1040 + $0x620] sm:$0xff]
        %v1340 = vld [vmem:[%s1040 + $0x628] sm:$0xff]
        %v1341 = vld [vmem:[%s1040 + $0x630] sm:$0xff]
        %v1342 = vld [vmem:[%s1040 + $0x638] sm:$0xff]
        %v1343 = vld [vmem:[%s1040 + $0x640] sm:$0xff]
        %v1344 = vld [vmem:[%s1040 + $0x648] sm:$0xff]
        %v1345 = vld [vmem:[%s1040 + $0x650] sm:$0xff]
        %v1346 = vld [vmem:[%s1040 + $0x658] sm:$0xff]
        %v1347 = vld [vmem:[%s1040 + $0x660] sm:$0xff]
        %v1348 = vld [vmem:[%s1040 + $0x668] sm:$0xff]
        %v1349 = vld [vmem:[%s1040 + $0x670] sm:$0xff]
        %v1350 = vld [vmem:[%s1040 + $0x678] sm:$0xff]
        %v1351 = vld [vmem:[%s1040 + $0x680] sm:$0xff]
        %v1352 = vld [vmem:[%s1040 + $0x688] sm:$0xff]
        %v1353 = vld [vmem:[%s1040 + $0x690] sm:$0xff]
        %v1354 = vld [vmem:[%s1040 + $0x698] sm:$0xff]
        %v1355 = vld [vmem:[%s1040 + $0x6a0] sm:$0xff]
        %v1356 = vld [vmem:[%s1040 + $0x6a8] sm:$0xff]
        %v1357 = vld [vmem:[%s1040 + $0x6b0] sm:$0xff]
        %v1358 = vld [vmem:[%s1040 + $0x6b8] sm:$0xff]
        %v1359 = vld [vmem:[%s1040 + $0x6c0] sm:$0xff]
        %v1360 = vld [vmem:[%s1040 + $0x6c8] sm:$0xff]
        %v1361 = vld [vmem:[%s1040 + $0x6d0] sm:$0xff]
        %v1362 = vld [vmem:[%s1040 + $0x6d8] sm:$0xff]
        %v1363 = vld [vmem:[%s1040 + $0x6e0] sm:$0xff]
        %v1364 = vld [vmem:[%s1040 + $0x6e8] sm:$0xff]
        %v1365 = vld [vmem:[%s1040 + $0x6f0] sm:$0xff]
        %v1366 = vld [vmem:[%s1040 + $0x6f8] sm:$0xff]
        %v1367 = vld [vmem:[%s1040 + $0x700] sm:$0xff]
        %v1368 = vld [vmem:[%s1040 + $0x708] sm:$0xff]
        %v1369 = vld [vmem:[%s1040 + $0x710] sm:$0xff]
        %v1370 = vld [vmem:[%s1040 + $0x718] sm:$0xff]
        %v1371 = vld [vmem:[%s1040 + $0x720] sm:$0xff]
        %v1372 = vld [vmem:[%s1040 + $0x728] sm:$0xff]
        %v1373 = vld [vmem:[%s1040 + $0x730] sm:$0xff]
        %v1374 = vld [vmem:[%s1040 + $0x738] sm:$0xff]
        %v1375 = vld [vmem:[%s1040 + $0x740] sm:$0xff]
        %v1376 = vld [vmem:[%s1040 + $0x748] sm:$0xff]
        %v1377 = vld [vmem:[%s1040 + $0x750] sm:$0xff]
        %v1378 = vld [vmem:[%s1040 + $0x758] sm:$0xff]
        %v1379 = vld [vmem:[%s1040 + $0x760] sm:$0xff]
        %v1380 = vld [vmem:[%s1040 + $0x768] sm:$0xff]
        %v1381 = vld [vmem:[%s1040 + $0x770] sm:$0xff]
        %v1382 = vld [vmem:[%s1040 + $0x778] sm:$0xff]
        %v1383 = vld [vmem:[%s1040 + $0x780] sm:$0xff]
        %v1384 = vld [vmem:[%s1040 + $0x788] sm:$0xff]
        %v1385 = vld [vmem:[%s1040 + $0x790] sm:$0xff]
        %v1386 = vld [vmem:[%s1040 + $0x798] sm:$0xff]
        %v1387 = vld [vmem:[%s1040 + $0x7a0] sm:$0xff]
        %v1388 = vld [vmem:[%s1040 + $0x7a8] sm:$0xff]
        %v1389 = vld [vmem:[%s1040 + $0x7b0] sm:$0xff]
        %v1390 = vld [vmem:[%s1040 + $0x7b8] sm:$0xff]
        %v1391 = vld [vmem:[%s1040 + $0x7c0] sm:$0xff]
        %v1392 = vld [vmem:[%s1040 + $0x7c8] sm:$0xff]
        %v1393 = vld [vmem:[%s1040 + $0x7d0] sm:$0xff]
        %v1394 = vld [vmem:[%s1040 + $0x7d8] sm:$0xff]
        %v1395 = vld [vmem:[%s1040 + $0x7e0] sm:$0xff]
        %v1396 = vld [vmem:[%s1040 + $0x7e8] sm:$0xff]
        %v1397 = vld [vmem:[%s1040 + $0x7f0] sm:$0xff]
        %v1398 = vld [vmem:[%s1040 + $0x7f8] sm:$0xff]
        %v1399 = vld [vmem:[%s1040 + $0x800] sm:$0xff]
        %v1400 = vld [vmem:[%s1040 + $0x808] sm:$0xff]
        %v1401 = vld [vmem:[%s1040 + $0x810] sm:$0xff]
        %v1402 = vld [vmem:[%s1040 + $0x818] sm:$0xff]
        %v1403 = vld [vmem:[%s1040 + $0x820] sm:$0xff]
        %v1404 = vld [vmem:[%s1040 + $0x828] sm:$0xff]
        %v1405 = vld [vmem:[%s1040 + $0x830] sm:$0xff]
        %v1406 = vld [vmem:[%s1040 + $0x838] sm:$0xff]
        %v1407 = vld [vmem:[%s1040 + $0x840] sm:$0xff]
        %v1408 = vld [vmem:[%s1040 + $0x848] sm:$0xff]
        %v1409 = vld [vmem:[%s1040 + $0x850] sm:$0xff]
        %v1410 = vld [vmem:[%s1040 + $0x858] sm:$0xff]
        %v1411 = vld [vmem:[%s1040 + $0x860] sm:$0xff]
        %v1412 = vld [vmem:[%s1040 + $0x868] sm:$0xff]
        %v1413 = vld [vmem:[%s1040 + $0x870] sm:$0xff]
        %v1414 = vld [vmem:[%s1040 + $0x878] sm:$0xff]
        %v1415 = vld [vmem:[%s1040 + $0x880] sm:$0xff]
        %v1416 = vld [vmem:[%s1040 + $0x888] sm:$0xff]
        %v1417 = vld [vmem:[%s1040 + $0x890] sm:$0xff]
        %v1418 = vld [vmem:[%s1040 + $0x898] sm:$0xff]
        %v1419 = vld [vmem:[%s1040 + $0x8a0] sm:$0xff]
        %v1420 = vld [vmem:[%s1040 + $0x8a8] sm:$0xff]
        %v1421 = vld [vmem:[%s1040 + $0x8b0] sm:$0xff]
        %v1422 = vld [vmem:[%s1040 + $0x8b8] sm:$0xff]
        %v1423 = vld [vmem:[%s1040 + $0x8c0] sm:$0xff]
        %v1424 = vld [vmem:[%s1040 + $0x8c8] sm:$0xff]
        %v1425 = vld [vmem:[%s1040 + $0x8d0] sm:$0xff]
        %v1426 = vld [vmem:[%s1040 + $0x8d8] sm:$0xff]
        %v1427 = vld [vmem:[%s1040 + $0x8e0] sm:$0xff]
        %v1428 = vld [vmem:[%s1040 + $0x8e8] sm:$0xff]
        %v1429 = vld [vmem:[%s1040 + $0x8f0] sm:$0xff]
        %v1430 = vld [vmem:[%s1040 + $0x8f8] sm:$0xff]
        %v1431 = vld [vmem:[%s1040 + $0x900] sm:$0xff]
        %v1432 = vld [vmem:[%s1040 + $0x908] sm:$0xff]
        %v1433 = vld [vmem:[%s1040 + $0x910] sm:$0xff]
        %v1434 = vld [vmem:[%s1040 + $0x918] sm:$0xff]
        %v1435 = vld [vmem:[%s1040 + $0x920] sm:$0xff]
        %v1436 = vld [vmem:[%s1040 + $0x928] sm:$0xff]
        %v1437 = vld [vmem:[%s1040 + $0x930] sm:$0xff]
        %v1438 = vld [vmem:[%s1040 + $0x938] sm:$0xff]
        %v1439 = vld [vmem:[%s1040 + $0x940] sm:$0xff]
        %v1440 = vld [vmem:[%s1040 + $0x948] sm:$0xff]
        %v1441 = vld [vmem:[%s1040 + $0x950] sm:$0xff]
        %v1442 = vld [vmem:[%s1040 + $0x958] sm:$0xff]
        %v1443 = vld [vmem:[%s1040 + $0x960] sm:$0xff]
        %v1444 = vld [vmem:[%s1040 + $0x968] sm:$0xff]
        %v1445 = vld [vmem:[%s1040 + $0x970] sm:$0xff]
        %v1446 = vld [vmem:[%s1040 + $0x978] sm:$0xff]
        %v1447 = vld [vmem:[%s1040 + $0x980] sm:$0xff]
        %v1448 = vld [vmem:[%s1040 + $0x988] sm:$0xff]
        %v1449 = vld [vmem:[%s1040 + $0x990] sm:$0xff]
        %v1450 = vld [vmem:[%s1040 + $0x998] sm:$0xff]
        %v1451 = vld [vmem:[%s1040 + $0x9a0] sm:$0xff]
        %v1452 = vld [vmem:[%s1040 + $0x9a8] sm:$0xff]
        %v1453 = vld [vmem:[%s1040 + $0x9b0] sm:$0xff]
        %v1454 = vld [vmem:[%s1040 + $0x9b8] sm:$0xff]
        %v1455 = vld [vmem:[%s1040 + $0x9c0] sm:$0xff]
        %v1456 = vld [vmem:[%s1040 + $0x9c8] sm:$0xff]
        %v1457 = vld [vmem:[%s1040 + $0x9d0] sm:$0xff]
        %v1458 = vld [vmem:[%s1040 + $0x9d8] sm:$0xff]
        %v1459 = vld [vmem:[%s1040 + $0x9e0] sm:$0xff]
        %v1460 = vld [vmem:[%s1040 + $0x9e8] sm:$0xff]
        %v1461 = vld [vmem:[%s1040 + $0x9f0] sm:$0xff]
        %v1462 = vld [vmem:[%s1040 + $0x9f8] sm:$0xff]
        %v1463 = vld [vmem:[%s1040 + $0xa00] sm:$0xff]
        %v1464 = vld [vmem:[%s1040 + $0xa08] sm:$0xff]
        %v1465 = vld [vmem:[%s1040 + $0xa10] sm:$0xff]
        %v1466 = vld [vmem:[%s1040 + $0xa18] sm:$0xff]
        %v1467 = vld [vmem:[%s1040 + $0xa20] sm:$0xff]
        %v1468 = vld [vmem:[%s1040 + $0xa28] sm:$0xff]
        %v1469 = vld [vmem:[%s1040 + $0xa30] sm:$0xff]
        %v1470 = vld [vmem:[%s1040 + $0xa38] sm:$0xff]
        %v1471 = vld [vmem:[%s1040 + $0xa40] sm:$0xff]
        %v1472 = vld [vmem:[%s1040 + $0xa48] sm:$0xff]
        %v1473 = vld [vmem:[%s1040 + $0xa50] sm:$0xff]
        %v1474 = vld [vmem:[%s1040 + $0xa58] sm:$0xff]
        %v1475 = vld [vmem:[%s1040 + $0xa60] sm:$0xff]
        %v1476 = vld [vmem:[%s1040 + $0xa68] sm:$0xff]
        %v1477 = vld [vmem:[%s1040 + $0xa70] sm:$0xff]
        %v1478 = vld [vmem:[%s1040 + $0xa78] sm:$0xff]
        %v1479 = vld [vmem:[%s1040 + $0xa80] sm:$0xff]
        %v1480 = vld [vmem:[%s1040 + $0xa88] sm:$0xff]
        %v1481 = vld [vmem:[%s1040 + $0xa90] sm:$0xff]
        %v1482 = vld [vmem:[%s1040 + $0xa98] sm:$0xff]
        %v1483 = vld [vmem:[%s1040 + $0xaa0] sm:$0xff]
        %v1484 = vld [vmem:[%s1040 + $0xaa8] sm:$0xff]
        %v1485 = vld [vmem:[%s1040 + $0xab0] sm:$0xff]
        %v1486 = vld [vmem:[%s1040 + $0xab8] sm:$0xff]
        %v1487 = vld [vmem:[%s1040 + $0xac0] sm:$0xff]
        %v1488 = vld [vmem:[%s1040 + $0xac8] sm:$0xff]
        %v1489 = vld [vmem:[%s1040 + $0xad0] sm:$0xff]
        %v1490 = vld [vmem:[%s1040 + $0xad8] sm:$0xff]
        %v1491 = vld [vmem:[%s1040 + $0xae0] sm:$0xff]
        %v1492 = vld [vmem:[%s1040 + $0xae8] sm:$0xff]
        %v1493 = vld [vmem:[%s1040 + $0xaf0] sm:$0xff]
        %v1494 = vld [vmem:[%s1040 + $0xaf8] sm:$0xff]
        %v1495 = vld [vmem:[%s1040 + $0xb00] sm:$0xff]
        %v1496 = vld [vmem:[%s1040 + $0xb08] sm:$0xff]
        %v1497 = vld [vmem:[%s1040 + $0xb10] sm:$0xff]
        %v1498 = vld [vmem:[%s1040 + $0xb18] sm:$0xff]
        %v1499 = vld [vmem:[%s1040 + $0xb20] sm:$0xff]
        %v1500 = vld [vmem:[%s1040 + $0xb28] sm:$0xff]
        %v1501 = vld [vmem:[%s1040 + $0xb30] sm:$0xff]
        %v1502 = vld [vmem:[%s1040 + $0xb38] sm:$0xff]
        %v1503 = vld [vmem:[%s1040 + $0xb40] sm:$0xff]
        %v1504 = vld [vmem:[%s1040 + $0xb48] sm:$0xff]
        %v1505 = vld [vmem:[%s1040 + $0xb50] sm:$0xff]
        %v1506 = vld [vmem:[%s1040 + $0xb58] sm:$0xff]
        %v1507 = vld [vmem:[%s1040 + $0xb60] sm:$0xff]
        %v1508 = vld [vmem:[%s1040 + $0xb68] sm:$0xff]
        %v1509 = vld [vmem:[%s1040 + $0xb70] sm:$0xff]
        %v1510 = vld [vmem:[%s1040 + $0xb78] sm:$0xff]
        %v1511 = vld [vmem:[%s1040 + $0xb80] sm:$0xff]
        %v1512 = vld [vmem:[%s1040 + $0xb88] sm:$0xff]
        %v1513 = vld [vmem:[%s1040 + $0xb90] sm:$0xff]
        %v1514 = vld [vmem:[%s1040 + $0xb98] sm:$0xff]
        %v1515 = vld [vmem:[%s1040 + $0xba0] sm:$0xff]
        %v1516 = vld [vmem:[%s1040 + $0xba8] sm:$0xff]
        %v1517 = vld [vmem:[%s1040 + $0xbb0] sm:$0xff]
        %v1518 = vld [vmem:[%s1040 + $0xbb8] sm:$0xff]
        %v1519 = vld [vmem:[%s1040 + $0xbc0] sm:$0xff]
        %v1520 = vld [vmem:[%s1040 + $0xbc8] sm:$0xff]
        %v1521 = vld [vmem:[%s1040 + $0xbd0] sm:$0xff]
        %v1522 = vld [vmem:[%s1040 + $0xbd8] sm:$0xff]
        %v1523 = vld [vmem:[%s1040 + $0xbe0] sm:$0xff]
        %v1524 = vld [vmem:[%s1040 + $0xbe8] sm:$0xff]
        %v1525 = vld [vmem:[%s1040 + $0xbf0] sm:$0xff]
        %v1526 = vld [vmem:[%s1040 + $0xbf8] sm:$0xff]
        %1527 = vmatpush.msra.mxu0 %v1203
        %1528 = vmatpush.msra.mxu0 %v1199
        %1529 = vmatpush.msra.mxu0 %v1195
        %1530 = vmatpush.msra.mxu0 %v1191
        %1531 = vmatpush.msra.mxu0 %v1187
        %1532 = vmatpush.msra.mxu0 %v1183
        %1533 = vmatpush.msra.mxu0 %v1179
        %1534 = vmatpush.msra.mxu0 %v1175
        %1535 = vmatpush.msra.mxu0 %v1171
        %1536 = vmatpush.msra.mxu0 %v1167
        %1537 = vmatpush.msra.mxu0 %v1163
        %1538 = vmatpush.msra.mxu0 %v1159
        %1539 = vmatpush.msra.mxu0 %v1155
        %1540 = vmatpush.msra.mxu0 %v1151
        %1541 = vmatpush.msra.mxu0 %v1147
        %1542 = vmatpush.msra.mxu0 %v1143
        %1543 = vmatmul.f32.gmra.mxu0 %v1119
        %v1544 = vpop.f32.mrf.mxu0
        %v1545 = vadd.f32 0.0, %v1544
        %1546 = vmatmul.f32.gmra.mxu0 %v1125
        %v1547 = vpop.f32.mrf.mxu0
        %v1548 = vadd.f32 0.0, %v1547
        %1549 = vmatmul.f32.gmra.mxu0 %v1131
        %v1550 = vpop.f32.mrf.mxu0
        %v1551 = vadd.f32 0.0, %v1550
        %1552 = vmatmul.f32.gmra.mxu0 %v1137
        %v1553 = vpop.f32.mrf.mxu0
        %v1554 = vadd.f32 0.0, %v1553
        %1555 = vdwg.mxu0
        %1556 = vmatpush.msra.mxu0 %v1267
        %1557 = vmatpush.msra.mxu0 %v1263
        %1558 = vmatpush.msra.mxu0 %v1259
        %1559 = vmatpush.msra.mxu0 %v1255
        %1560 = vmatpush.msra.mxu0 %v1251
        %1561 = vmatpush.msra.mxu0 %v1247
        %1562 = vmatpush.msra.mxu0 %v1243
        %1563 = vmatpush.msra.mxu0 %v1239
        %1564 = vmatpush.msra.mxu0 %v1235
        %1565 = vmatpush.msra.mxu0 %v1231
        %1566 = vmatpush.msra.mxu0 %v1227
        %1567 = vmatpush.msra.mxu0 %v1223
        %1568 = vmatpush.msra.mxu0 %v1219
        %1569 = vmatpush.msra.mxu0 %v1215
        %1570 = vmatpush.msra.mxu0 %v1211
        %1571 = vmatpush.msra.mxu0 %v1207
        %1572 = vmatmul.f32.gmra.mxu0 %v1120
        %v1573 = vpop.f32.mrf.mxu0
        %v1574 = vadd.f32 %v1545, %v1573
        %1575 = vmatmul.f32.gmra.mxu0 %v1126
        %v1576 = vpop.f32.mrf.mxu0
        %v1577 = vadd.f32 %v1548, %v1576
        %1578 = vmatmul.f32.gmra.mxu0 %v1132
        %v1579 = vpop.f32.mrf.mxu0
        %v1580 = vadd.f32 %v1551, %v1579
        %1581 = vmatmul.f32.gmra.mxu0 %v1138
        %v1582 = vpop.f32.mrf.mxu0
        %v1583 = vadd.f32 %v1554, %v1582
        %1584 = vdwg.mxu0
        %1585 = vmatpush.msra.mxu0 %v1331
        %1586 = vmatpush.msra.mxu0 %v1327
        %1587 = vmatpush.msra.mxu0 %v1323
        %1588 = vmatpush.msra.mxu0 %v1319
        %1589 = vmatpush.msra.mxu0 %v1315
        %1590 = vmatpush.msra.mxu0 %v1311
        %1591 = vmatpush.msra.mxu0 %v1307
        %1592 = vmatpush.msra.mxu0 %v1303
        %1593 = vmatpush.msra.mxu0 %v1299
        %1594 = vmatpush.msra.mxu0 %v1295
        %1595 = vmatpush.msra.mxu0 %v1291
        %1596 = vmatpush.msra.mxu0 %v1287
        %1597 = vmatpush.msra.mxu0 %v1283
        %1598 = vmatpush.msra.mxu0 %v1279
        %1599 = vmatpush.msra.mxu0 %v1275
        %1600 = vmatpush.msra.mxu0 %v1271
        %1601 = vmatmul.f32.gmra.mxu0 %v1121
        %v1602 = vpop.f32.mrf.mxu0
        %v1603 = vadd.f32 %v1574, %v1602
        %1604 = vmatmul.f32.gmra.mxu0 %v1127
        %v1605 = vpop.f32.mrf.mxu0
        %v1606 = vadd.f32 %v1577, %v1605
        %1607 = vmatmul.f32.gmra.mxu0 %v1133
        %v1608 = vpop.f32.mrf.mxu0
        %v1609 = vadd.f32 %v1580, %v1608
        %1610 = vmatmul.f32.gmra.mxu0 %v1139
        %v1611 = vpop.f32.mrf.mxu0
        %v1612 = vadd.f32 %v1583, %v1611
        %1613 = vdwg.mxu0
        %1614 = vmatpush.msra.mxu0 %v1395
        %1615 = vmatpush.msra.mxu0 %v1391
        %1616 = vmatpush.msra.mxu0 %v1387
        %1617 = vmatpush.msra.mxu0 %v1383
        %1618 = vmatpush.msra.mxu0 %v1379
        %1619 = vmatpush.msra.mxu0 %v1375
        %1620 = vmatpush.msra.mxu0 %v1371
        %1621 = vmatpush.msra.mxu0 %v1367
        %1622 = vmatpush.msra.mxu0 %v1363
        %1623 = vmatpush.msra.mxu0 %v1359
        %1624 = vmatpush.msra.mxu0 %v1355
        %1625 = vmatpush.msra.mxu0 %v1351
        %1626 = vmatpush.msra.mxu0 %v1347
        %1627 = vmatpush.msra.mxu0 %v1343
        %1628 = vmatpush.msra.mxu0 %v1339
        %1629 = vmatpush.msra.mxu0 %v1335
        %1630 = vmatmul.f32.gmra.mxu0 %v1122
        %v1631 = vpop.f32.mrf.mxu0
        %v1632 = vadd.f32 %v1603, %v1631
        %1633 = vmatmul.f32.gmra.mxu0 %v1128
        %v1634 = vpop.f32.mrf.mxu0
        %v1635 = vadd.f32 %v1606, %v1634
        %1636 = vmatmul.f32.gmra.mxu0 %v1134
        %v1637 = vpop.f32.mrf.mxu0
        %v1638 = vadd.f32 %v1609, %v1637
        %1639 = vmatmul.f32.gmra.mxu0 %v1140
        %v1640 = vpop.f32.mrf.mxu0
        %v1641 = vadd.f32 %v1612, %v1640
        %1642 = vdwg.mxu0
        %1643 = vmatpush.msra.mxu0 %v1459
        %1644 = vmatpush.msra.mxu0 %v1455
        %1645 = vmatpush.msra.mxu0 %v1451
        %1646 = vmatpush.msra.mxu0 %v1447
        %1647 = vmatpush.msra.mxu0 %v1443
        %1648 = vmatpush.msra.mxu0 %v1439
        %1649 = vmatpush.msra.mxu0 %v1435
        %1650 = vmatpush.msra.mxu0 %v1431
        %1651 = vmatpush.msra.mxu0 %v1427
        %1652 = vmatpush.msra.mxu0 %v1423
        %1653 = vmatpush.msra.mxu0 %v1419
        %1654 = vmatpush.msra.mxu0 %v1415
        %1655 = vmatpush.msra.mxu0 %v1411
        %1656 = vmatpush.msra.mxu0 %v1407
        %1657 = vmatpush.msra.mxu0 %v1403
        %1658 = vmatpush.msra.mxu0 %v1399
        %1659 = vmatmul.f32.gmra.mxu0 %v1123
        %v1660 = vpop.f32.mrf.mxu0
        %v1661 = vadd.f32 %v1632, %v1660
        %1662 = vmatmul.f32.gmra.mxu0 %v1129
        %v1663 = vpop.f32.mrf.mxu0
        %v1664 = vadd.f32 %v1635, %v1663
        %1665 = vmatmul.f32.gmra.mxu0 %v1135
        %v1666 = vpop.f32.mrf.mxu0
        %v1667 = vadd.f32 %v1638, %v1666
        %1668 = vmatmul.f32.gmra.mxu0 %v1141
        %v1669 = vpop.f32.mrf.mxu0
        %v1670 = vadd.f32 %v1641, %v1669
        %1671 = vdwg.mxu0
        %1672 = vmatpush.msra.mxu0 %v1523
        %1673 = vmatpush.msra.mxu0 %v1519
        %1674 = vmatpush.msra.mxu0 %v1515
        %1675 = vmatpush.msra.mxu0 %v1511
        %1676 = vmatpush.msra.mxu0 %v1507
        %1677 = vmatpush.msra.mxu0 %v1503
        %1678 = vmatpush.msra.mxu0 %v1499
        %1679 = vmatpush.msra.mxu0 %v1495
        %1680 = vmatpush.msra.mxu0 %v1491
        %1681 = vmatpush.msra.mxu0 %v1487
        %1682 = vmatpush.msra.mxu0 %v1483
        %1683 = vmatpush.msra.mxu0 %v1479
        %1684 = vmatpush.msra.mxu0 %v1475
        %1685 = vmatpush.msra.mxu0 %v1471
        %1686 = vmatpush.msra.mxu0 %v1467
        %1687 = vmatpush.msra.mxu0 %v1463
        %1688 = vmatmul.f32.gmra.mxu0 %v1124
        %v1689 = vpop.f32.mrf.mxu0
        %v1690 = vadd.f32 %v1661, %v1689
        %1691 = vmatmul.f32.gmra.mxu0 %v1130
        %v1692 = vpop.f32.mrf.mxu0
        %v1693 = vadd.f32 %v1664, %v1692
        %1694 = vmatmul.f32.gmra.mxu0 %v1136
        %v1695 = vpop.f32.mrf.mxu0
        %v1696 = vadd.f32 %v1667, %v1695
        %1697 = vmatmul.f32.gmra.mxu0 %v1142
        %v1698 = vpop.f32.mrf.mxu0
        %v1699 = vadd.f32 %v1670, %v1698
        %1700 = vdwg.mxu0
        %1701 = vmatpush.msra.mxu0 %v1204
        %1702 = vmatpush.msra.mxu0 %v1200
        %1703 = vmatpush.msra.mxu0 %v1196
        %1704 = vmatpush.msra.mxu0 %v1192
        %1705 = vmatpush.msra.mxu0 %v1188
        %1706 = vmatpush.msra.mxu0 %v1184
        %1707 = vmatpush.msra.mxu0 %v1180
        %1708 = vmatpush.msra.mxu0 %v1176
        %1709 = vmatpush.msra.mxu0 %v1172
        %1710 = vmatpush.msra.mxu0 %v1168
        %1711 = vmatpush.msra.mxu0 %v1164
        %1712 = vmatpush.msra.mxu0 %v1160
        %1713 = vmatpush.msra.mxu0 %v1156
        %1714 = vmatpush.msra.mxu0 %v1152
        %1715 = vmatpush.msra.mxu0 %v1148
        %1716 = vmatpush.msra.mxu0 %v1144
        %1717 = vmatmul.f32.gmra.mxu0 %v1119
        %v1718 = vpop.f32.mrf.mxu0
        %v1719 = vadd.f32 0.0, %v1718
        %1720 = vmatmul.f32.gmra.mxu0 %v1125
        %v1721 = vpop.f32.mrf.mxu0
        %v1722 = vadd.f32 0.0, %v1721
        %1723 = vmatmul.f32.gmra.mxu0 %v1131
        %v1724 = vpop.f32.mrf.mxu0
        %v1725 = vadd.f32 0.0, %v1724
        %1726 = vmatmul.f32.gmra.mxu0 %v1137
        %v1727 = vpop.f32.mrf.mxu0
        %v1728 = vadd.f32 0.0, %v1727
        %1729 = vdwg.mxu0
        %1730 = vmatpush.msra.mxu0 %v1268
        %1731 = vmatpush.msra.mxu0 %v1264
        %1732 = vmatpush.msra.mxu0 %v1260
        %1733 = vmatpush.msra.mxu0 %v1256
        %1734 = vmatpush.msra.mxu0 %v1252
        %1735 = vmatpush.msra.mxu0 %v1248
        %1736 = vmatpush.msra.mxu0 %v1244
        %1737 = vmatpush.msra.mxu0 %v1240
        %1738 = vmatpush.msra.mxu0 %v1236
        %1739 = vmatpush.msra.mxu0 %v1232
        %1740 = vmatpush.msra.mxu0 %v1228
        %1741 = vmatpush.msra.mxu0 %v1224
        %1742 = vmatpush.msra.mxu0 %v1220
        %1743 = vmatpush.msra.mxu0 %v1216
        %1744 = vmatpush.msra.mxu0 %v1212
        %1745 = vmatpush.msra.mxu0 %v1208
        %1746 = vmatmul.f32.gmra.mxu0 %v1120
        %v1747 = vpop.f32.mrf.mxu0
        %v1748 = vadd.f32 %v1719, %v1747
        %1749 = vmatmul.f32.gmra.mxu0 %v1126
        %v1750 = vpop.f32.mrf.mxu0
        %v1751 = vadd.f32 %v1722, %v1750
        %1752 = vmatmul.f32.gmra.mxu0 %v1132
        %v1753 = vpop.f32.mrf.mxu0
        %v1754 = vadd.f32 %v1725, %v1753
        %1755 = vmatmul.f32.gmra.mxu0 %v1138
        %v1756 = vpop.f32.mrf.mxu0
        %v1757 = vadd.f32 %v1728, %v1756
        %1758 = vdwg.mxu0
        %1759 = vmatpush.msra.mxu0 %v1332
        %1760 = vmatpush.msra.mxu0 %v1328
        %1761 = vmatpush.msra.mxu0 %v1324
        %1762 = vmatpush.msra.mxu0 %v1320
        %1763 = vmatpush.msra.mxu0 %v1316
        %1764 = vmatpush.msra.mxu0 %v1312
        %1765 = vmatpush.msra.mxu0 %v1308
        %1766 = vmatpush.msra.mxu0 %v1304
        %1767 = vmatpush.msra.mxu0 %v1300
        %1768 = vmatpush.msra.mxu0 %v1296
        %1769 = vmatpush.msra.mxu0 %v1292
        %1770 = vmatpush.msra.mxu0 %v1288
        %1771 = vmatpush.msra.mxu0 %v1284
        %1772 = vmatpush.msra.mxu0 %v1280
        %1773 = vmatpush.msra.mxu0 %v1276
        %1774 = vmatpush.msra.mxu0 %v1272
        %1775 = vmatmul.f32.gmra.mxu0 %v1121
        %v1776 = vpop.f32.mrf.mxu0
        %v1777 = vadd.f32 %v1748, %v1776
        %1778 = vmatmul.f32.gmra.mxu0 %v1127
        %v1779 = vpop.f32.mrf.mxu0
        %v1780 = vadd.f32 %v1751, %v1779
        %1781 = vmatmul.f32.gmra.mxu0 %v1133
        %v1782 = vpop.f32.mrf.mxu0
        %v1783 = vadd.f32 %v1754, %v1782
        %1784 = vmatmul.f32.gmra.mxu0 %v1139
        %v1785 = vpop.f32.mrf.mxu0
        %v1786 = vadd.f32 %v1757, %v1785
        %1787 = vdwg.mxu0
        %1788 = vmatpush.msra.mxu0 %v1396
        %1789 = vmatpush.msra.mxu0 %v1392
        %1790 = vmatpush.msra.mxu0 %v1388
        %1791 = vmatpush.msra.mxu0 %v1384
        %1792 = vmatpush.msra.mxu0 %v1380
        %1793 = vmatpush.msra.mxu0 %v1376
        %1794 = vmatpush.msra.mxu0 %v1372
        %1795 = vmatpush.msra.mxu0 %v1368
        %1796 = vmatpush.msra.mxu0 %v1364
        %1797 = vmatpush.msra.mxu0 %v1360
        %1798 = vmatpush.msra.mxu0 %v1356
        %1799 = vmatpush.msra.mxu0 %v1352
        %1800 = vmatpush.msra.mxu0 %v1348
        %1801 = vmatpush.msra.mxu0 %v1344
        %1802 = vmatpush.msra.mxu0 %v1340
        %1803 = vmatpush.msra.mxu0 %v1336
        %1804 = vmatmul.f32.gmra.mxu0 %v1122
        %v1805 = vpop.f32.mrf.mxu0
        %v1806 = vadd.f32 %v1777, %v1805
        %1807 = vmatmul.f32.gmra.mxu0 %v1128
        %v1808 = vpop.f32.mrf.mxu0
        %v1809 = vadd.f32 %v1780, %v1808
        %1810 = vmatmul.f32.gmra.mxu0 %v1134
        %v1811 = vpop.f32.mrf.mxu0
        %v1812 = vadd.f32 %v1783, %v1811
        %1813 = vmatmul.f32.gmra.mxu0 %v1140
        %v1814 = vpop.f32.mrf.mxu0
        %v1815 = vadd.f32 %v1786, %v1814
        %1816 = vdwg.mxu0
        %1817 = vmatpush.msra.mxu0 %v1460
        %1818 = vmatpush.msra.mxu0 %v1456
        %1819 = vmatpush.msra.mxu0 %v1452
        %1820 = vmatpush.msra.mxu0 %v1448
        %1821 = vmatpush.msra.mxu0 %v1444
        %1822 = vmatpush.msra.mxu0 %v1440
        %1823 = vmatpush.msra.mxu0 %v1436
        %1824 = vmatpush.msra.mxu0 %v1432
        %1825 = vmatpush.msra.mxu0 %v1428
        %1826 = vmatpush.msra.mxu0 %v1424
        %1827 = vmatpush.msra.mxu0 %v1420
        %1828 = vmatpush.msra.mxu0 %v1416
        %1829 = vmatpush.msra.mxu0 %v1412
        %1830 = vmatpush.msra.mxu0 %v1408
        %1831 = vmatpush.msra.mxu0 %v1404
        %1832 = vmatpush.msra.mxu0 %v1400
        %1833 = vmatmul.f32.gmra.mxu0 %v1123
        %v1834 = vpop.f32.mrf.mxu0
        %v1835 = vadd.f32 %v1806, %v1834
        %1836 = vmatmul.f32.gmra.mxu0 %v1129
        %v1837 = vpop.f32.mrf.mxu0
        %v1838 = vadd.f32 %v1809, %v1837
        %1839 = vmatmul.f32.gmra.mxu0 %v1135
        %v1840 = vpop.f32.mrf.mxu0
        %v1841 = vadd.f32 %v1812, %v1840
        %1842 = vmatmul.f32.gmra.mxu0 %v1141
        %v1843 = vpop.f32.mrf.mxu0
        %v1844 = vadd.f32 %v1815, %v1843
        %1845 = vdwg.mxu0
        %1846 = vmatpush.msra.mxu0 %v1524
        %1847 = vmatpush.msra.mxu0 %v1520
        %1848 = vmatpush.msra.mxu0 %v1516
        %1849 = vmatpush.msra.mxu0 %v1512
        %1850 = vmatpush.msra.mxu0 %v1508
        %1851 = vmatpush.msra.mxu0 %v1504
        %1852 = vmatpush.msra.mxu0 %v1500
        %1853 = vmatpush.msra.mxu0 %v1496
        %1854 = vmatpush.msra.mxu0 %v1492
        %1855 = vmatpush.msra.mxu0 %v1488
        %1856 = vmatpush.msra.mxu0 %v1484
        %1857 = vmatpush.msra.mxu0 %v1480
        %1858 = vmatpush.msra.mxu0 %v1476
        %1859 = vmatpush.msra.mxu0 %v1472
        %1860 = vmatpush.msra.mxu0 %v1468
        %1861 = vmatpush.msra.mxu0 %v1464
        %1862 = vmatmul.f32.gmra.mxu0 %v1124
        %v1863 = vpop.f32.mrf.mxu0
        %v1864 = vadd.f32 %v1835, %v1863
        %1865 = vmatmul.f32.gmra.mxu0 %v1130
        %v1866 = vpop.f32.mrf.mxu0
        %v1867 = vadd.f32 %v1838, %v1866
        %1868 = vmatmul.f32.gmra.mxu0 %v1136
        %v1869 = vpop.f32.mrf.mxu0
        %v1870 = vadd.f32 %v1841, %v1869
        %1871 = vmatmul.f32.gmra.mxu0 %v1142
        %v1872 = vpop.f32.mrf.mxu0
        %v1873 = vadd.f32 %v1844, %v1872
        %1874 = vdwg.mxu0
        %1875 = vmatpush.msra.mxu0 %v1205
        %1876 = vmatpush.msra.mxu0 %v1201
        %1877 = vmatpush.msra.mxu0 %v1197
        %1878 = vmatpush.msra.mxu0 %v1193
        %1879 = vmatpush.msra.mxu0 %v1189
        %1880 = vmatpush.msra.mxu0 %v1185
        %1881 = vmatpush.msra.mxu0 %v1181
        %1882 = vmatpush.msra.mxu0 %v1177
        %1883 = vmatpush.msra.mxu0 %v1173
        %1884 = vmatpush.msra.mxu0 %v1169
        %1885 = vmatpush.msra.mxu0 %v1165
        %1886 = vmatpush.msra.mxu0 %v1161
        %1887 = vmatpush.msra.mxu0 %v1157
        %1888 = vmatpush.msra.mxu0 %v1153
        %1889 = vmatpush.msra.mxu0 %v1149
        %1890 = vmatpush.msra.mxu0 %v1145
        %1891 = vmatmul.f32.gmra.mxu0 %v1119
        %v1892 = vpop.f32.mrf.mxu0
        %v1893 = vadd.f32 0.0, %v1892
        %1894 = vmatmul.f32.gmra.mxu0 %v1125
        %v1895 = vpop.f32.mrf.mxu0
        %v1896 = vadd.f32 0.0, %v1895
        %1897 = vmatmul.f32.gmra.mxu0 %v1131
        %v1898 = vpop.f32.mrf.mxu0
        %v1899 = vadd.f32 0.0, %v1898
        %1900 = vmatmul.f32.gmra.mxu0 %v1137
        %v1901 = vpop.f32.mrf.mxu0
        %v1902 = vadd.f32 0.0, %v1901
        %1903 = vdwg.mxu0
        %1904 = vmatpush.msra.mxu0 %v1269
        %1905 = vmatpush.msra.mxu0 %v1265
        %1906 = vmatpush.msra.mxu0 %v1261
        %1907 = vmatpush.msra.mxu0 %v1257
        %1908 = vmatpush.msra.mxu0 %v1253
        %1909 = vmatpush.msra.mxu0 %v1249
        %1910 = vmatpush.msra.mxu0 %v1245
        %1911 = vmatpush.msra.mxu0 %v1241
        %1912 = vmatpush.msra.mxu0 %v1237
        %1913 = vmatpush.msra.mxu0 %v1233
        %1914 = vmatpush.msra.mxu0 %v1229
        %1915 = vmatpush.msra.mxu0 %v1225
        %1916 = vmatpush.msra.mxu0 %v1221
        %1917 = vmatpush.msra.mxu0 %v1217
        %1918 = vmatpush.msra.mxu0 %v1213
        %1919 = vmatpush.msra.mxu0 %v1209
        %1920 = vmatmul.f32.gmra.mxu0 %v1120
        %v1921 = vpop.f32.mrf.mxu0
        %v1922 = vadd.f32 %v1893, %v1921
        %1923 = vmatmul.f32.gmra.mxu0 %v1126
        %v1924 = vpop.f32.mrf.mxu0
        %v1925 = vadd.f32 %v1896, %v1924
        %1926 = vmatmul.f32.gmra.mxu0 %v1132
        %v1927 = vpop.f32.mrf.mxu0
        %v1928 = vadd.f32 %v1899, %v1927
        %1929 = vmatmul.f32.gmra.mxu0 %v1138
        %v1930 = vpop.f32.mrf.mxu0
        %v1931 = vadd.f32 %v1902, %v1930
        %1932 = vdwg.mxu0
        %1933 = vmatpush.msra.mxu0 %v1333
        %1934 = vmatpush.msra.mxu0 %v1329
        %1935 = vmatpush.msra.mxu0 %v1325
        %1936 = vmatpush.msra.mxu0 %v1321
        %1937 = vmatpush.msra.mxu0 %v1317
        %1938 = vmatpush.msra.mxu0 %v1313
        %1939 = vmatpush.msra.mxu0 %v1309
        %1940 = vmatpush.msra.mxu0 %v1305
        %1941 = vmatpush.msra.mxu0 %v1301
        %1942 = vmatpush.msra.mxu0 %v1297
        %1943 = vmatpush.msra.mxu0 %v1293
        %1944 = vmatpush.msra.mxu0 %v1289
        %1945 = vmatpush.msra.mxu0 %v1285
        %1946 = vmatpush.msra.mxu0 %v1281
        %1947 = vmatpush.msra.mxu0 %v1277
        %1948 = vmatpush.msra.mxu0 %v1273
        %1949 = vmatmul.f32.gmra.mxu0 %v1121
        %v1950 = vpop.f32.mrf.mxu0
        %v1951 = vadd.f32 %v1922, %v1950
        %1952 = vmatmul.f32.gmra.mxu0 %v1127
        %v1953 = vpop.f32.mrf.mxu0
        %v1954 = vadd.f32 %v1925, %v1953
        %1955 = vmatmul.f32.gmra.mxu0 %v1133
        %v1956 = vpop.f32.mrf.mxu0
        %v1957 = vadd.f32 %v1928, %v1956
        %1958 = vmatmul.f32.gmra.mxu0 %v1139
        %v1959 = vpop.f32.mrf.mxu0
        %v1960 = vadd.f32 %v1931, %v1959
        %1961 = vdwg.mxu0
        %1962 = vmatpush.msra.mxu0 %v1397
        %1963 = vmatpush.msra.mxu0 %v1393
        %1964 = vmatpush.msra.mxu0 %v1389
        %1965 = vmatpush.msra.mxu0 %v1385
        %1966 = vmatpush.msra.mxu0 %v1381
        %1967 = vmatpush.msra.mxu0 %v1377
        %1968 = vmatpush.msra.mxu0 %v1373
        %1969 = vmatpush.msra.mxu0 %v1369
        %1970 = vmatpush.msra.mxu0 %v1365
        %1971 = vmatpush.msra.mxu0 %v1361
        %1972 = vmatpush.msra.mxu0 %v1357
        %1973 = vmatpush.msra.mxu0 %v1353
        %1974 = vmatpush.msra.mxu0 %v1349
        %1975 = vmatpush.msra.mxu0 %v1345
        %1976 = vmatpush.msra.mxu0 %v1341
        %1977 = vmatpush.msra.mxu0 %v1337
        %1978 = vmatmul.f32.gmra.mxu0 %v1122
        %v1979 = vpop.f32.mrf.mxu0
        %v1980 = vadd.f32 %v1951, %v1979
        %1981 = vmatmul.f32.gmra.mxu0 %v1128
        %v1982 = vpop.f32.mrf.mxu0
        %v1983 = vadd.f32 %v1954, %v1982
        %1984 = vmatmul.f32.gmra.mxu0 %v1134
        %v1985 = vpop.f32.mrf.mxu0
        %v1986 = vadd.f32 %v1957, %v1985
        %1987 = vmatmul.f32.gmra.mxu0 %v1140
        %v1988 = vpop.f32.mrf.mxu0
        %v1989 = vadd.f32 %v1960, %v1988
        %1990 = vdwg.mxu0
        %1991 = vmatpush.msra.mxu0 %v1461
        %1992 = vmatpush.msra.mxu0 %v1457
        %1993 = vmatpush.msra.mxu0 %v1453
        %1994 = vmatpush.msra.mxu0 %v1449
        %1995 = vmatpush.msra.mxu0 %v1445
        %1996 = vmatpush.msra.mxu0 %v1441
        %1997 = vmatpush.msra.mxu0 %v1437
        %1998 = vmatpush.msra.mxu0 %v1433
        %1999 = vmatpush.msra.mxu0 %v1429
        %2000 = vmatpush.msra.mxu0 %v1425
        %2001 = vmatpush.msra.mxu0 %v1421
        %2002 = vmatpush.msra.mxu0 %v1417
        %2003 = vmatpush.msra.mxu0 %v1413
        %2004 = vmatpush.msra.mxu0 %v1409
        %2005 = vmatpush.msra.mxu0 %v1405
        %2006 = vmatpush.msra.mxu0 %v1401
        %2007 = vmatmul.f32.gmra.mxu0 %v1123
        %v2008 = vpop.f32.mrf.mxu0
        %v2009 = vadd.f32 %v1980, %v2008
        %2010 = vmatmul.f32.gmra.mxu0 %v1129
        %v2011 = vpop.f32.mrf.mxu0
        %v2012 = vadd.f32 %v1983, %v2011
        %2013 = vmatmul.f32.gmra.mxu0 %v1135
        %v2014 = vpop.f32.mrf.mxu0
        %v2015 = vadd.f32 %v1986, %v2014
        %2016 = vmatmul.f32.gmra.mxu0 %v1141
        %v2017 = vpop.f32.mrf.mxu0
        %v2018 = vadd.f32 %v1989, %v2017
        %2019 = vdwg.mxu0
        %2020 = vmatpush.msra.mxu0 %v1525
        %2021 = vmatpush.msra.mxu0 %v1521
        %2022 = vmatpush.msra.mxu0 %v1517
        %2023 = vmatpush.msra.mxu0 %v1513
        %2024 = vmatpush.msra.mxu0 %v1509
        %2025 = vmatpush.msra.mxu0 %v1505
        %2026 = vmatpush.msra.mxu0 %v1501
        %2027 = vmatpush.msra.mxu0 %v1497
        %2028 = vmatpush.msra.mxu0 %v1493
        %2029 = vmatpush.msra.mxu0 %v1489
        %2030 = vmatpush.msra.mxu0 %v1485
        %2031 = vmatpush.msra.mxu0 %v1481
        %2032 = vmatpush.msra.mxu0 %v1477
        %2033 = vmatpush.msra.mxu0 %v1473
        %2034 = vmatpush.msra.mxu0 %v1469
        %2035 = vmatpush.msra.mxu0 %v1465
        %2036 = vmatmul.f32.gmra.mxu0 %v1124
        %v2037 = vpop.f32.mrf.mxu0
        %v2038 = vadd.f32 %v2009, %v2037
        %2039 = vmatmul.f32.gmra.mxu0 %v1130
        %v2040 = vpop.f32.mrf.mxu0
        %v2041 = vadd.f32 %v2012, %v2040
        %2042 = vmatmul.f32.gmra.mxu0 %v1136
        %v2043 = vpop.f32.mrf.mxu0
        %v2044 = vadd.f32 %v2015, %v2043
        %2045 = vmatmul.f32.gmra.mxu0 %v1142
        %v2046 = vpop.f32.mrf.mxu0
        %v2047 = vadd.f32 %v2018, %v2046
        %2048 = vdwg.mxu0
        %2049 = vmatpush.msra.mxu0 %v1206
        %2050 = vmatpush.msra.mxu0 %v1202
        %2051 = vmatpush.msra.mxu0 %v1198
        %2052 = vmatpush.msra.mxu0 %v1194
        %2053 = vmatpush.msra.mxu0 %v1190
        %2054 = vmatpush.msra.mxu0 %v1186
        %2055 = vmatpush.msra.mxu0 %v1182
        %2056 = vmatpush.msra.mxu0 %v1178
        %2057 = vmatpush.msra.mxu0 %v1174
        %2058 = vmatpush.msra.mxu0 %v1170
        %2059 = vmatpush.msra.mxu0 %v1166
        %2060 = vmatpush.msra.mxu0 %v1162
        %2061 = vmatpush.msra.mxu0 %v1158
        %2062 = vmatpush.msra.mxu0 %v1154
        %2063 = vmatpush.msra.mxu0 %v1150
        %2064 = vmatpush.msra.mxu0 %v1146
        %2065 = vmatmul.f32.gmra.mxu0 %v1119
        %v2066 = vpop.f32.mrf.mxu0
        %v2067 = vadd.f32 0.0, %v2066
        %2068 = vmatmul.f32.gmra.mxu0 %v1125
        %v2069 = vpop.f32.mrf.mxu0
        %v2070 = vadd.f32 0.0, %v2069
        %2071 = vmatmul.f32.gmra.mxu0 %v1131
        %v2072 = vpop.f32.mrf.mxu0
        %v2073 = vadd.f32 0.0, %v2072
        %2074 = vmatmul.f32.gmra.mxu0 %v1137
        %v2075 = vpop.f32.mrf.mxu0
        %v2076 = vadd.f32 0.0, %v2075
        %2077 = vdwg.mxu0
        %2078 = vmatpush.msra.mxu0 %v1270
        %2079 = vmatpush.msra.mxu0 %v1266
        %2080 = vmatpush.msra.mxu0 %v1262
        %2081 = vmatpush.msra.mxu0 %v1258
        %2082 = vmatpush.msra.mxu0 %v1254
        %2083 = vmatpush.msra.mxu0 %v1250
        %2084 = vmatpush.msra.mxu0 %v1246
        %2085 = vmatpush.msra.mxu0 %v1242
        %2086 = vmatpush.msra.mxu0 %v1238
        %2087 = vmatpush.msra.mxu0 %v1234
        %2088 = vmatpush.msra.mxu0 %v1230
        %2089 = vmatpush.msra.mxu0 %v1226
        %2090 = vmatpush.msra.mxu0 %v1222
        %2091 = vmatpush.msra.mxu0 %v1218
        %2092 = vmatpush.msra.mxu0 %v1214
        %2093 = vmatpush.msra.mxu0 %v1210
        %2094 = vmatmul.f32.gmra.mxu0 %v1120
        %v2095 = vpop.f32.mrf.mxu0
        %v2096 = vadd.f32 %v2067, %v2095
        %2097 = vmatmul.f32.gmra.mxu0 %v1126
        %v2098 = vpop.f32.mrf.mxu0
        %v2099 = vadd.f32 %v2070, %v2098
        %2100 = vmatmul.f32.gmra.mxu0 %v1132
        %v2101 = vpop.f32.mrf.mxu0
        %v2102 = vadd.f32 %v2073, %v2101
        %2103 = vmatmul.f32.gmra.mxu0 %v1138
        %v2104 = vpop.f32.mrf.mxu0
        %v2105 = vadd.f32 %v2076, %v2104
        %2106 = vdwg.mxu0
        %2107 = vmatpush.msra.mxu0 %v1334
        %2108 = vmatpush.msra.mxu0 %v1330
        %2109 = vmatpush.msra.mxu0 %v1326
        %2110 = vmatpush.msra.mxu0 %v1322
        %2111 = vmatpush.msra.mxu0 %v1318
        %2112 = vmatpush.msra.mxu0 %v1314
        %2113 = vmatpush.msra.mxu0 %v1310
        %2114 = vmatpush.msra.mxu0 %v1306
        %2115 = vmatpush.msra.mxu0 %v1302
        %2116 = vmatpush.msra.mxu0 %v1298
        %2117 = vmatpush.msra.mxu0 %v1294
        %2118 = vmatpush.msra.mxu0 %v1290
        %2119 = vmatpush.msra.mxu0 %v1286
        %2120 = vmatpush.msra.mxu0 %v1282
        %2121 = vmatpush.msra.mxu0 %v1278
        %2122 = vmatpush.msra.mxu0 %v1274
        %2123 = vmatmul.f32.gmra.mxu0 %v1121
        %v2124 = vpop.f32.mrf.mxu0
        %v2125 = vadd.f32 %v2096, %v2124
        %2126 = vmatmul.f32.gmra.mxu0 %v1127
        %v2127 = vpop.f32.mrf.mxu0
        %v2128 = vadd.f32 %v2099, %v2127
        %2129 = vmatmul.f32.gmra.mxu0 %v1133
        %v2130 = vpop.f32.mrf.mxu0
        %v2131 = vadd.f32 %v2102, %v2130
        %2132 = vmatmul.f32.gmra.mxu0 %v1139
        %v2133 = vpop.f32.mrf.mxu0
        %v2134 = vadd.f32 %v2105, %v2133
        %2135 = vdwg.mxu0
        %2136 = vmatpush.msra.mxu0 %v1398
        %2137 = vmatpush.msra.mxu0 %v1394
        %2138 = vmatpush.msra.mxu0 %v1390
        %2139 = vmatpush.msra.mxu0 %v1386
        %2140 = vmatpush.msra.mxu0 %v1382
        %2141 = vmatpush.msra.mxu0 %v1378
        %2142 = vmatpush.msra.mxu0 %v1374
        %2143 = vmatpush.msra.mxu0 %v1370
        %2144 = vmatpush.msra.mxu0 %v1366
        %2145 = vmatpush.msra.mxu0 %v1362
        %2146 = vmatpush.msra.mxu0 %v1358
        %2147 = vmatpush.msra.mxu0 %v1354
        %2148 = vmatpush.msra.mxu0 %v1350
        %2149 = vmatpush.msra.mxu0 %v1346
        %2150 = vmatpush.msra.mxu0 %v1342
        %2151 = vmatpush.msra.mxu0 %v1338
        %2152 = vmatmul.f32.gmra.mxu0 %v1122
        %v2153 = vpop.f32.mrf.mxu0
        %v2154 = vadd.f32 %v2125, %v2153
        %2155 = vmatmul.f32.gmra.mxu0 %v1128
        %v2156 = vpop.f32.mrf.mxu0
        %v2157 = vadd.f32 %v2128, %v2156
        %2158 = vmatmul.f32.gmra.mxu0 %v1134
        %v2159 = vpop.f32.mrf.mxu0
        %v2160 = vadd.f32 %v2131, %v2159
        %2161 = vmatmul.f32.gmra.mxu0 %v1140
        %v2162 = vpop.f32.mrf.mxu0
        %v2163 = vadd.f32 %v2134, %v2162
        %2164 = vdwg.mxu0
        %2165 = vmatpush.msra.mxu0 %v1462
        %2166 = vmatpush.msra.mxu0 %v1458
        %2167 = vmatpush.msra.mxu0 %v1454
        %2168 = vmatpush.msra.mxu0 %v1450
        %2169 = vmatpush.msra.mxu0 %v1446
        %2170 = vmatpush.msra.mxu0 %v1442
        %2171 = vmatpush.msra.mxu0 %v1438
        %2172 = vmatpush.msra.mxu0 %v1434
        %2173 = vmatpush.msra.mxu0 %v1430
        %2174 = vmatpush.msra.mxu0 %v1426
        %2175 = vmatpush.msra.mxu0 %v1422
        %2176 = vmatpush.msra.mxu0 %v1418
        %2177 = vmatpush.msra.mxu0 %v1414
        %2178 = vmatpush.msra.mxu0 %v1410
        %2179 = vmatpush.msra.mxu0 %v1406
        %2180 = vmatpush.msra.mxu0 %v1402
        %2181 = vmatmul.f32.gmra.mxu0 %v1123
        %v2182 = vpop.f32.mrf.mxu0
        %v2183 = vadd.f32 %v2154, %v2182
        %2184 = vmatmul.f32.gmra.mxu0 %v1129
        %v2185 = vpop.f32.mrf.mxu0
        %v2186 = vadd.f32 %v2157, %v2185
        %2187 = vmatmul.f32.gmra.mxu0 %v1135
        %v2188 = vpop.f32.mrf.mxu0
        %v2189 = vadd.f32 %v2160, %v2188
        %2190 = vmatmul.f32.gmra.mxu0 %v1141
        %v2191 = vpop.f32.mrf.mxu0
        %v2192 = vadd.f32 %v2163, %v2191
        %2193 = vdwg.mxu0
        %2194 = vmatpush.msra.mxu0 %v1526
        %2195 = vmatpush.msra.mxu0 %v1522
        %2196 = vmatpush.msra.mxu0 %v1518
        %2197 = vmatpush.msra.mxu0 %v1514
        %2198 = vmatpush.msra.mxu0 %v1510
        %2199 = vmatpush.msra.mxu0 %v1506
        %2200 = vmatpush.msra.mxu0 %v1502
        %2201 = vmatpush.msra.mxu0 %v1498
        %2202 = vmatpush.msra.mxu0 %v1494
        %2203 = vmatpush.msra.mxu0 %v1490
        %2204 = vmatpush.msra.mxu0 %v1486
        %2205 = vmatpush.msra.mxu0 %v1482
        %2206 = vmatpush.msra.mxu0 %v1478
        %2207 = vmatpush.msra.mxu0 %v1474
        %2208 = vmatpush.msra.mxu0 %v1470
        %2209 = vmatpush.msra.mxu0 %v1466
        %2210 = vmatmul.f32.gmra.mxu0 %v1124
        %v2211 = vpop.f32.mrf.mxu0
        %v2212 = vadd.f32 %v2183, %v2211
        %2213 = vmatmul.f32.gmra.mxu0 %v1130
        %v2214 = vpop.f32.mrf.mxu0
        %v2215 = vadd.f32 %v2186, %v2214
        %2216 = vmatmul.f32.gmra.mxu0 %v1136
        %v2217 = vpop.f32.mrf.mxu0
        %v2218 = vadd.f32 %v2189, %v2217
        %2219 = vmatmul.f32.gmra.mxu0 %v1142
        %v2220 = vpop.f32.mrf.mxu0
        %v2221 = vadd.f32 %v2192, %v2220
        %2222 = vdwg.mxu0
        %v2223 = vadd.f32 %v1103, %v1690
        %v2224 = vadd.f32 %v1104, %v1864
        %v2225 = vadd.f32 %v1105, %v2038
        %v2226 = vadd.f32 %v1106, %v2212
        %v2227 = vadd.f32 %v1107, %v1693
        %v2228 = vadd.f32 %v1108, %v1867
        %v2229 = vadd.f32 %v1109, %v2041
        %v2230 = vadd.f32 %v1110, %v2215
        %v2231 = vadd.f32 %v1111, %v1696
        %v2232 = vadd.f32 %v1112, %v1870
        %v2233 = vadd.f32 %v1113, %v2044
        %v2234 = vadd.f32 %v1114, %v2218
        %v2235 = vadd.f32 %v1115, %v1699
        %v2236 = vadd.f32 %v1116, %v1873
        %v2237 = vadd.f32 %v1117, %v2047
        %v2238 = vadd.f32 %v1118, %v2221
        %2239 = vst [vmem:[#allocation2] sm:$0xff] %v2223
        %2240 = vst [vmem:[#allocation2 + $0x8] sm:$0xff] %v2224
        %2241 = vst [vmem:[#allocation2 + $0x10] sm:$0xff] %v2225
        %2242 = vst [vmem:[#allocation2 + $0x18] sm:$0xff] %v2226
        %2243 = vst [vmem:[#allocation2 + $0x20] sm:$0xff] %v2227
        %2244 = vst [vmem:[#allocation2 + $0x28] sm:$0xff] %v2228
        %2245 = vst [vmem:[#allocation2 + $0x30] sm:$0xff] %v2229
        %2246 = vst [vmem:[#allocation2 + $0x38] sm:$0xff] %v2230
        %2247 = vst [vmem:[#allocation2 + $0x40] sm:$0xff] %v2231
        %2248 = vst [vmem:[#allocation2 + $0x48] sm:$0xff] %v2232
        %2249 = vst [vmem:[#allocation2 + $0x50] sm:$0xff] %v2233
        %2250 = vst [vmem:[#allocation2 + $0x58] sm:$0xff] %v2234
        %2251 = vst [vmem:[#allocation2 + $0x60] sm:$0xff] %v2235
        %2252 = vst [vmem:[#allocation2 + $0x68] sm:$0xff] %v2236
        %2253 = vst [vmem:[#allocation2 + $0x70] sm:$0xff] %v2237
        %2254 = vst [vmem:[#allocation2 + $0x78] sm:$0xff] %v2238
        %p2255 = scmp.eq.s32.totalorder %s19, 5
        // Predicated region
        $region83: #{forward.2} parent=69 // pred_check
          %p2256 = pneg %p2255
        $region84: #{forward.2} parent=69 // pred_check_branch
          %2258 = sbr.rel (%p2256) target = $region86
        $region85: #{forward.2} parent=69 // pred_region
          %v2259 = vld [vmem:[#allocation2] sm:$0xff]
          %v2260 = vld [vmem:[#allocation2 + $0x8] sm:$0xff]
          %v2261 = vld [vmem:[#allocation2 + $0x10] sm:$0xff]
          %v2262 = vld [vmem:[#allocation2 + $0x18] sm:$0xff]
          %v2263 = vld [vmem:[#allocation2 + $0x20] sm:$0xff]
          %v2264 = vld [vmem:[#allocation2 + $0x28] sm:$0xff]
          %v2265 = vld [vmem:[#allocation2 + $0x30] sm:$0xff]
          %v2266 = vld [vmem:[#allocation2 + $0x38] sm:$0xff]
          %v2267 = vld [vmem:[#allocation2 + $0x40] sm:$0xff]
          %v2268 = vld [vmem:[#allocation2 + $0x48] sm:$0xff]
          %v2269 = vld [vmem:[#allocation2 + $0x50] sm:$0xff]
          %v2270 = vld [vmem:[#allocation2 + $0x58] sm:$0xff]
          %v2271 = vld [vmem:[#allocation2 + $0x60] sm:$0xff]
          %v2272 = vld [vmem:[#allocation2 + $0x68] sm:$0xff]
          %v2273 = vld [vmem:[#allocation2 + $0x70] sm:$0xff]
          %v2274 = vld [vmem:[#allocation2 + $0x78] sm:$0xff]
          %v2275 = vld [vmem:[%s1075] sm:$0xf]
          %v2277 = vperm.slane %v2275, 0
          %v2278 = vperm.slane %v2275, 1
          %v2279 = vperm.slane %v2275, 2
          %v2280 = vperm.slane %v2275, 3
          %v2285 = vadd.f32 %v2259, %v2277
          %v2286 = vadd.f32 %v2260, %v2278
          %v2287 = vadd.f32 %v2261, %v2279
          %v2288 = vadd.f32 %v2262, %v2280
          %v2289 = vadd.f32 %v2263, %v2277
          %v2290 = vadd.f32 %v2264, %v2278
          %v2291 = vadd.f32 %v2265, %v2279
          %v2292 = vadd.f32 %v2266, %v2280
          %v2293 = vadd.f32 %v2267, %v2277
          %v2294 = vadd.f32 %v2268, %v2278
          %v2295 = vadd.f32 %v2269, %v2279
          %v2296 = vadd.f32 %v2270, %v2280
          %v2297 = vadd.f32 %v2271, %v2277
          %v2298 = vadd.f32 %v2272, %v2278
          %v2299 = vadd.f32 %v2273, %v2279
          %v2300 = vadd.f32 %v2274, %v2280
          %v2301 = vmax.f32 %v2285, 0.0
          %v2302 = vmax.f32 %v2286, 0.0
          %v2303 = vmax.f32 %v2287, 0.0
          %v2304 = vmax.f32 %v2288, 0.0
          %v2305 = vmax.f32 %v2289, 0.0
          %v2306 = vmax.f32 %v2290, 0.0
          %v2307 = vmax.f32 %v2291, 0.0
          %v2308 = vmax.f32 %v2292, 0.0
          %v2309 = vmax.f32 %v2293, 0.0
          %v2310 = vmax.f32 %v2294, 0.0
          %v2311 = vmax.f32 %v2295, 0.0
          %v2312 = vmax.f32 %v2296, 0.0
          %v2313 = vmax.f32 %v2297, 0.0
          %v2314 = vmax.f32 %v2298, 0.0
          %v2315 = vmax.f32 %v2299, 0.0
          %v2316 = vmax.f32 %v2300, 0.0
          %v2321 = vrot.slane %v2301, 1
          %v2322 = vrot.slane %v2302, 1
          %v2323 = vrot.slane %v2303, 1
          %v2324 = vrot.slane %v2304, 1
          %v2329 = vmax.f32 %v2301, %v2321
          %v2330 = vmax.f32 %v2302, %v2322
          %v2331 = vmax.f32 %v2303, %v2323
          %v2332 = vmax.f32 %v2304, %v2324
          %v2337 = vrot.slane %v2329, 4
          %v2338 = vrot.slane %v2330, 4
          %v2339 = vrot.slane %v2331, 4
          %v2340 = vrot.slane %v2332, 4
          %v2345 = vmax.f32 %v2329, %v2337
          %v2346 = vmax.f32 %v2330, %v2338
          %v2347 = vmax.f32 %v2331, %v2339
          %v2348 = vmax.f32 %v2332, %v2340
          %v2353 = vrot.slane %v2346, 7
          %v2354 = vrot.slane %v2347, 6
          %v2355 = vrot.slane %v2348, 5
          %vm2356 = vcmask 1040384
          %v2357 = vsel %vm2356, %v2345, %v2353
          %vm2358 = vcmask 1042434
          %v2359 = vsel %vm2358, %v2354, %v2355
          %vm2360 = vcmask 1041408
          %v2361 = vsel %vm2360, %v2357, %v2359
          %v2363 = vlaneseq
          %vm2364 = vcmp.ge.s32.totalorder %v2363, 0
          %vm2365 = vcmp.lt.s32.totalorder %v2363, 512
          %vm2366 = vmand %vm2364, %vm2365
          %2367 = vst.msk [vmem:[%s1081] ss:$8 sm:$0xf] %vm2366, %v2361
          %2368 = vst.msk [vmem:[%s1081] ss:$8 sm:$0x0] %vm2366, %v2361
          %2369 = vst [vmem:[#allocation1] sm:$0xff] %v2345
          %2370 = vst [vmem:[#allocation1 + $0x9] sm:$0xff] %v2346
          %2371 = vst [vmem:[#allocation1 + $0x12] sm:$0xff] %v2347
          %2372 = vst [vmem:[#allocation1 + $0x1b] sm:$0xff] %v2348
          %s2373 = scalar_lea.vmem [#allocation1], 2
          %v2374 = vld [vmem:[%s2373] ss:$9 sm:$0xff]
          %s2376 = scalar_lea.vmem %s1081, 1
          %2377 = vst.msk [vmem:[%s2376] ss:$8 sm:$0xf] %vm2366, %v2374
          %2378 = vst.msk [vmem:[%s2376] ss:$8 sm:$0x0] %vm2366, %v2374
          %v2383 = vrot.slane %v2305, 1
          %v2384 = vrot.slane %v2306, 1
          %v2385 = vrot.slane %v2307, 1
          %v2386 = vrot.slane %v2308, 1
          %v2391 = vmax.f32 %v2305, %v2383
          %v2392 = vmax.f32 %v2306, %v2384
          %v2393 = vmax.f32 %v2307, %v2385
          %v2394 = vmax.f32 %v2308, %v2386
          %v2399 = vrot.slane %v2391, 4
          %v2400 = vrot.slane %v2392, 4
          %v2401 = vrot.slane %v2393, 4
          %v2402 = vrot.slane %v2394, 4
          %v2407 = vmax.f32 %v2391, %v2399
          %v2408 = vmax.f32 %v2392, %v2400
          %v2409 = vmax.f32 %v2393, %v2401
          %v2410 = vmax.f32 %v2394, %v2402
          %v2415 = vrot.slane %v2408, 7
          %v2416 = vrot.slane %v2409, 6
          %v2417 = vrot.slane %v2410, 5
          %v2418 = vsel %vm2356, %v2407, %v2415
          %v2419 = vsel %vm2358, %v2416, %v2417
          %v2420 = vsel %vm2360, %v2418, %v2419
          %s2422 = scalar_lea.vmem %s1081, 2
          %2423 = vst.msk [vmem:[%s2422] ss:$8 sm:$0xf] %vm2366, %v2420
          %2424 = vst.msk [vmem:[%s2422] ss:$8 sm:$0x0] %vm2366, %v2420
          %2425 = vst [vmem:[#allocation1] sm:$0xff] %v2407
          %2426 = vst [vmem:[#allocation1 + $0x9] sm:$0xff] %v2408
          %2427 = vst [vmem:[#allocation1 + $0x12] sm:$0xff] %v2409
          %2428 = vst [vmem:[#allocation1 + $0x1b] sm:$0xff] %v2410
          %s2429 = scalar_lea.vmem [#allocation1], 2
          %v2430 = vld [vmem:[%s2429] ss:$9 sm:$0xff]
          %s2432 = scalar_lea.vmem %s1081, 3
          %2433 = vst.msk [vmem:[%s2432] ss:$8 sm:$0xf] %vm2366, %v2430
          %2434 = vst.msk [vmem:[%s2432] ss:$8 sm:$0x0] %vm2366, %v2430
          %v2439 = vrot.slane %v2309, 1
          %v2440 = vrot.slane %v2310, 1
          %v2441 = vrot.slane %v2311, 1
          %v2442 = vrot.slane %v2312, 1
          %v2447 = vmax.f32 %v2309, %v2439
          %v2448 = vmax.f32 %v2310, %v2440
          %v2449 = vmax.f32 %v2311, %v2441
          %v2450 = vmax.f32 %v2312, %v2442
          %v2455 = vrot.slane %v2447, 4
          %v2456 = vrot.slane %v2448, 4
          %v2457 = vrot.slane %v2449, 4
          %v2458 = vrot.slane %v2450, 4
          %v2463 = vmax.f32 %v2447, %v2455
          %v2464 = vmax.f32 %v2448, %v2456
          %v2465 = vmax.f32 %v2449, %v2457
          %v2466 = vmax.f32 %v2450, %v2458
          %v2471 = vrot.slane %v2464, 7
          %v2472 = vrot.slane %v2465, 6
          %v2473 = vrot.slane %v2466, 5
          %v2474 = vsel %vm2356, %v2463, %v2471
          %v2475 = vsel %vm2358, %v2472, %v2473
          %v2476 = vsel %vm2360, %v2474, %v2475
          %s2478 = scalar_lea.vmem %s1081, 4
          %2479 = vst.msk [vmem:[%s2478] ss:$8 sm:$0xf] %vm2366, %v2476
          %2480 = vst.msk [vmem:[%s2478] ss:$8 sm:$0x0] %vm2366, %v2476
          %2481 = vst [vmem:[#allocation1] sm:$0xff] %v2463
          %2482 = vst [vmem:[#allocation1 + $0x9] sm:$0xff] %v2464
          %2483 = vst [vmem:[#allocation1 + $0x12] sm:$0xff] %v2465
          %2484 = vst [vmem:[#allocation1 + $0x1b] sm:$0xff] %v2466
          %s2485 = scalar_lea.vmem [#allocation1], 2
          %v2486 = vld [vmem:[%s2485] ss:$9 sm:$0xff]
          %s2488 = scalar_lea.vmem %s1081, 5
          %2489 = vst.msk [vmem:[%s2488] ss:$8 sm:$0xf] %vm2366, %v2486
          %2490 = vst.msk [vmem:[%s2488] ss:$8 sm:$0x0] %vm2366, %v2486
          %v2495 = vrot.slane %v2313, 1
          %v2496 = vrot.slane %v2314, 1
          %v2497 = vrot.slane %v2315, 1
          %v2498 = vrot.slane %v2316, 1
          %v2503 = vmax.f32 %v2313, %v2495
          %v2504 = vmax.f32 %v2314, %v2496
          %v2505 = vmax.f32 %v2315, %v2497
          %v2506 = vmax.f32 %v2316, %v2498
          %v2511 = vrot.slane %v2503, 4
          %v2512 = vrot.slane %v2504, 4
          %v2513 = vrot.slane %v2505, 4
          %v2514 = vrot.slane %v2506, 4
          %v2519 = vmax.f32 %v2503, %v2511
          %v2520 = vmax.f32 %v2504, %v2512
          %v2521 = vmax.f32 %v2505, %v2513
          %v2522 = vmax.f32 %v2506, %v2514
          %v2527 = vrot.slane %v2520, 7
          %v2528 = vrot.slane %v2521, 6
          %v2529 = vrot.slane %v2522, 5
          %v2530 = vsel %vm2356, %v2519, %v2527
          %v2531 = vsel %vm2358, %v2528, %v2529
          %v2532 = vsel %vm2360, %v2530, %v2531
          %s2534 = scalar_lea.vmem %s1081, 6
          %2535 = vst.msk [vmem:[%s2534] ss:$8 sm:$0xf] %vm2366, %v2532
          %2536 = vst.msk [vmem:[%s2534] ss:$8 sm:$0x0] %vm2366, %v2532
          %2537 = vst [vmem:[#allocation1] sm:$0xff] %v2519
          %2538 = vst [vmem:[#allocation1 + $0x9] sm:$0xff] %v2520
          %2539 = vst [vmem:[#allocation1 + $0x12] sm:$0xff] %v2521
          %2540 = vst [vmem:[#allocation1 + $0x1b] sm:$0xff] %v2522
          %s2541 = scalar_lea.vmem [#allocation1], 2
          %v2542 = vld [vmem:[%s2541] ss:$9 sm:$0xff]
          %s2544 = scalar_lea.vmem %s1081, 7
          %2545 = vst.msk [vmem:[%s2544] ss:$8 sm:$0xf] %vm2366, %v2542
          %2546 = vst.msk [vmem:[%s2544] ss:$8 sm:$0x0] %vm2366, %v2542
        $region86: #{forward.2} parent=69 // pred_fallthru
          _
        %s2547 = smul.u32 4, %s18
        %p2548 = scmp.lt.s32.totalorder %s2547, 7
        %s2549 = scalar_select %p2548, %s2547, 7
        %s2550 = smul.addr %s2549, 8
        %s2551 = scalar_lea.vmem %s3, %s2550
        // Predicated region
        $region87: #{forward.2} parent=69 // pred_check
          %p2552 = pneg %p124
        $region88: #{forward.2} parent=69 // pred_check_branch
          %2554 = sbr.rel (%p2552) target = $region90
        $region89: #{forward.2} parent=69 // pred_region
          %s2555 = smul.u32 4, %s18
        $region90: #{forward.2} parent=69 // pred_fallthru
          _
      $region70: #{forward.2} parent=5 // pred_fallthru
        _
      %p2556 = scmp.le.s32.totalorder 2, %s9
      // Predicated region
      $region91: #{forward.2} parent=5 // pred_check
        %p2557 = pneg %p2556
      $region92: #{forward.2} parent=5 // pred_check_branch
        %2559 = sbr.rel (%p2557) target = $region94
      $region93: #{forward.2} parent=5 // pred_region
        %s2560 = ssub.s32 %s9, 2
        // Predicated region
        $region95: #{forward.2} parent=93 // pred_check
          %p2561 = pneg %p130
        $region96: #{forward.2} parent=93 // pred_check_branch
          %2563 = sbr.rel (%p2561) target = $region98
        $region97: #{forward.2} parent=93 // pred_region
          %s2564 = smul.u32 4, %s20
          %p2565 = scmp.lt.s32.totalorder %s2564, 7
          %s2566 = scalar_select %p2565, %s2564, 7
          %s2567 = smul.addr %s2566, 8
          %s2568 = scalar_lea.vmem %s3, %s2567
        $region98: #{forward.2} parent=93 // pred_fallthru
          _
      $region94: #{forward.2} parent=5 // pred_fallthru
        _
    $region6: #{forward.2} parent=1 // loop_footer
      %s13 = sadd.s32 1, %s9
    $region7: #{forward.2} parent=1 // loop_footer_branch
      %8 = sbr.rel target = $region3
    $region8: #{forward.2} parent=1 // loop_exit
      _

// kernel: forward.3
$region0: #{forward.3}
  #allocation0 [shape = 'u32[]', space=smem, size = 0x4, offset = 0x4, fixed_abs, tag = 'smem constant byte address 0x4 - core index']
  #allocation1 [shape = 'u32[72,128]{1,0:T(1,128)}', space=vmem, size = 0x9000, scoped, tag = 'internal scratch']
  #allocation2 [shape = 'f32[1,1]{1,0:T(1,128)S(1)}', space=vmem, size = 0x200, scoped, tag = 'scoped memory for forward.3']
  %s0 = inlined_call_operand.vmem [shape: f32[2,4096], index: 0, kind: input, shape index: {}]
  %s1 = inlined_call_operand.hbm [shape: f32[4096,256], index: 1, kind: input, shape index: {}]
  %s2 = inlined_call_operand.vmem [shape: f32[1,256], index: 2, kind: input, shape index: {}]
  %s3 = inlined_call_operand.vmem [shape: f32[1,256], index: 3, kind: input, shape index: {}]
  %s4 = inlined_call_operand.<no memory space> [shape: f32[1,1], index: 4, kind: input, shape index: {}]
  %s5 = inlined_call_operand.vmem [shape: f32[2,1], index: 5, kind: output, shape index: {}]
  %s6 = sld [smem:[#allocation0]]
  $region34: #{forward.3} parent=0
    _
  %s8 = ssub.s32 1, %s6
  %s9 = scalar_select 0, %s8, %s6
  %v10 = vstv %s4
  %11 = vst [vmem:[#allocation2] sm:$0x1] %v10
  $region1: #{forward.3} parent=0
    #allocation3 [shape = 'u8[4194304]{0}', space=vmem, size = 0x400000, scoped, tag = 'input window, operand 1, single buffered']
    #allocation4 [shape = 's32[1]{0}', space=sflag, size = 0x4, scoped, tag = 'scoped memory for forward.3']
    %12 = vsyncpa [#allocation4], 0
    // Predicated region
    $region2: #{forward.3} parent=1 // pred_check
      _
    $region3: #{forward.3} parent=1 // pred_check_branch
      %14 = sbr.rel (0) target = $region5
    $region4: #{forward.3} parent=1 // pred_region
      _
    $region5: #{forward.3} parent=1 // pred_fallthru
      _
    // Predicated region
    $region6: #{forward.3} parent=1 // pred_check
      _
    $region7: #{forward.3} parent=1 // pred_check_branch
      %16 = sbr.rel (0) target = $region9
    $region8: #{forward.3} parent=1 // pred_region
      %18 = vsyncadd [#allocation4], 0
      %s19 = sshll.u32 %s1, 4
      %s20 = int_to_ptr.hbm [resolvable:$true] %s19
      %s21 = sshll.u32 [#allocation3], 4
      %s22 = int_to_ptr.vmem [resolvable:$true] %s21
      %27 = dma.hbm_to_vmem [thread:$0]  %s20, 131072, %s22, [#allocation4], 256, 256, 16
    $region9: #{forward.3} parent=1 // pred_fallthru
      _
    // Predicated region
    $region10: #{forward.3} parent=1 // pred_check
      _
    $region11: #{forward.3} parent=1 // pred_check_branch
      %29 = sbr.rel (0) target = $region13
    $region12: #{forward.3} parent=1 // pred_region
      _
    $region13: #{forward.3} parent=1 // pred_fallthru
      _
    // Predicated region
    $region14: #{forward.3} parent=1 // pred_check
      _
    $region15: #{forward.3} parent=1 // pred_check_branch
      %31 = sbr.rel (0) target = $region17
    $region16: #{forward.3} parent=1 // pred_region
      _
    $region17: #{forward.3} parent=1 // pred_fallthru
      _
    // Predicated region
    $region18: #{forward.3} parent=1 // pred_check
      _
    $region19: #{forward.3} parent=1 // pred_check_branch
      %33 = sbr.rel (0) target = $region21
    $region20: #{forward.3} parent=1 // pred_region
      _
    $region21: #{forward.3} parent=1 // pred_fallthru
      _
    // Predicated region
    $region22: #{forward.3} parent=1 // pred_check
      _
    $region23: #{forward.3} parent=1 // pred_check_branch
      %35 = sbr.rel (0) target = $region25
    $region24: #{forward.3} parent=1 // pred_region
      %37 = dma.done [#allocation4], 131072
    $region25: #{forward.3} parent=1 // pred_fallthru
      _
    %v38 = vld [vmem:[%s0] sm:$0xff]
    %v39 = vld [vmem:[%s0 + $0x8] sm:$0xff]
    %v40 = vld [vmem:[%s0 + $0x10] sm:$0xff]
    %v41 = vld [vmem:[%s0 + $0x18] sm:$0xff]
    %v42 = vld [vmem:[%s0 + $0x20] sm:$0xff]
    %v43 = vld [vmem:[%s0 + $0x28] sm:$0xff]
    %v44 = vld [vmem:[%s0 + $0x30] sm:$0xff]
    %v45 = vld [vmem:[%s0 + $0x38] sm:$0xff]
    %v46 = vld [vmem:[#allocation3] sm:$0xff]
    %v47 = vld [vmem:[#allocation3 + $0x8] sm:$0xff]
    %v48 = vld [vmem:[#allocation3 + $0x10] sm:$0xff]
    %v49 = vld [vmem:[#allocation3 + $0x18] sm:$0xff]
    %v50 = vld [vmem:[#allocation3 + $0x20] sm:$0xff]
    %v51 = vld [vmem:[#allocation3 + $0x28] sm:$0xff]
    %v52 = vld [vmem:[#allocation3 + $0x30] sm:$0xff]
    %v53 = vld [vmem:[#allocation3 + $0x38] sm:$0xff]
    %v54 = vld [vmem:[#allocation3 + $0x40] sm:$0xff]
    %v55 = vld [vmem:[#allocation3 + $0x48] sm:$0xff]
    %v56 = vld [vmem:[#allocation3 + $0x50] sm:$0xff]
    %v57 = vld [vmem:[#allocation3 + $0x58] sm:$0xff]
    %v58 = vld [vmem:[#allocation3 + $0x60] sm:$0xff]
    %v59 = vld [vmem:[#allocation3 + $0x68] sm:$0xff]
    %v60 = vld [vmem:[#allocation3 + $0x70] sm:$0xff]
    %v61 = vld [vmem:[#allocation3 + $0x78] sm:$0xff]
    %v62 = vld [vmem:[#allocation3 + $0x80] sm:$0xff]
    %v63 = vld [vmem:[#allocation3 + $0x88] sm:$0xff]
    %v64 = vld [vmem:[#allocation3 + $0x90] sm:$0xff]
    %v65 = vld [vmem:[#allocation3 + $0x98] sm:$0xff]
    %v66 = vld [vmem:[#allocation3 + $0xa0] sm:$0xff]
    %v67 = vld [vmem:[#allocation3 + $0xa8] sm:$0xff]
    %v68 = vld [vmem:[#allocation3 + $0xb0] sm:$0xff]
    %v69 = vld [vmem:[#allocation3 + $0xb8] sm:$0xff]
    %v70 = vld [vmem:[#allocation3 + $0xc0] sm:$0xff]
    %v71 = vld [vmem:[#allocation3 + $0xc8] sm:$0xff]
    %v72 = vld [vmem:[#allocation3 + $0xd0] sm:$0xff]
    %v73 = vld [vmem:[#allocation3 + $0xd8] sm:$0xff]
    %v74 = vld [vmem:[#allocation3 + $0xe0] sm:$0xff]
    %v75 = vld [vmem:[#allocation3 + $0xe8] sm:$0xff]
    %v76 = vld [vmem:[#allocation3 + $0xf0] sm:$0xff]
    %v77 = vld [vmem:[#allocation3 + $0xf8] sm:$0xff]
    %v78 = vld [vmem:[#allocation3 + $0x100] sm:$0xff]
    %v79 = vld [vmem:[#allocation3 + $0x108] sm:$0xff]
    %v80 = vld [vmem:[#allocation3 + $0x110] sm:$0xff]
    %v81 = vld [vmem:[#allocation3 + $0x118] sm:$0xff]
    %v82 = vld [vmem:[#allocation3 + $0x120] sm:$0xff]
    %v83 = vld [vmem:[#allocation3 + $0x128] sm:$0xff]
    %v84 = vld [vmem:[#allocation3 + $0x130] sm:$0xff]
    %v85 = vld [vmem:[#allocation3 + $0x138] sm:$0xff]
    %v86 = vld [vmem:[#allocation3 + $0x140] sm:$0xff]
    %v87 = vld [vmem:[#allocation3 + $0x148] sm:$0xff]
    %v88 = vld [vmem:[#allocation3 + $0x150] sm:$0xff]
    %v89 = vld [vmem:[#allocation3 + $0x158] sm:$0xff]
    %v90 = vld [vmem:[#allocation3 + $0x160] sm:$0xff]
    %v91 = vld [vmem:[#allocation3 + $0x168] sm:$0xff]
    %v92 = vld [vmem:[#allocation3 + $0x170] sm:$0xff]
    %v93 = vld [vmem:[#allocation3 + $0x178] sm:$0xff]
    %v94 = vld [vmem:[#allocation3 + $0x180] sm:$0xff]
    %v95 = vld [vmem:[#allocation3 + $0x188] sm:$0xff]
    %v96 = vld [vmem:[#allocation3 + $0x190] sm:$0xff]
    %v97 = vld [vmem:[#allocation3 + $0x198] sm:$0xff]
    %v98 = vld [vmem:[#allocation3 + $0x1a0] sm:$0xff]
    %v99 = vld [vmem:[#allocation3 + $0x1a8] sm:$0xff]
    %v100 = vld [vmem:[#allocation3 + $0x1b0] sm:$0xff]
    %v101 = vld [vmem:[#allocation3 + $0x1b8] sm:$0xff]
    %v102 = vld [vmem:[#allocation3 + $0x1c0] sm:$0xff]
    %v103 = vld [vmem:[#allocation3 + $0x1c8] sm:$0xff]
    %v104 = vld [vmem:[#allocation3 + $0x1d0] sm:$0xff]
    %v105 = vld [vmem:[#allocation3 + $0x1d8] sm:$0xff]
    %v106 = vld [vmem:[#allocation3 + $0x1e0] sm:$0xff]
    %v107 = vld [vmem:[#allocation3 + $0x1e8] sm:$0xff]
    %v108 = vld [vmem:[#allocation3 + $0x1f0] sm:$0xff]
    %v109 = vld [vmem:[#allocation3 + $0x1f8] sm:$0xff]
    %v110 = vld [vmem:[#allocation3 + $0x200] sm:$0xff]
    %v111 = vld [vmem:[#allocation3 + $0x208] sm:$0xff]
    %v112 = vld [vmem:[#allocation3 + $0x210] sm:$0xff]
    %v113 = vld [vmem:[#allocation3 + $0x218] sm:$0xff]
    %v114 = vld [vmem:[#allocation3 + $0x220] sm:$0xff]
    %v115 = vld [vmem:[#allocation3 + $0x228] sm:$0xff]
    %v116 = vld [vmem:[#allocation3 + $0x230] sm:$0xff]
    %v117 = vld [vmem:[#allocation3 + $0x238] sm:$0xff]
    %v118 = vld [vmem:[#allocation3 + $0x240] sm:$0xff]
    %v119 = vld [vmem:[#allocation3 + $0x248] sm:$0xff]
    %v120 = vld [vmem:[#allocation3 + $0x250] sm:$0xff]
    %v121 = vld [vmem:[#allocation3 + $0x258] sm:$0xff]
    %v122 = vld [vmem:[#allocation3 + $0x260] sm:$0xff]
    %v123 = vld [vmem:[#allocation3 + $0x268] sm:$0xff]
    %v124 = vld [vmem:[#allocation3 + $0x270] sm:$0xff]
    %v125 = vld [vmem:[#allocation3 + $0x278] sm:$0xff]
    %v126 = vld [vmem:[#allocation3 + $0x280] sm:$0xff]
    %v127 = vld [vmem:[#allocation3 + $0x288] sm:$0xff]
    %v128 = vld [vmem:[#allocation3 + $0x290] sm:$0xff]
    %v129 = vld [vmem:[#allocation3 + $0x298] sm:$0xff]
    %v130 = vld [vmem:[#allocation3 + $0x2a0] sm:$0xff]
    %v131 = vld [vmem:[#allocation3 + $0x2a8] sm:$0xff]
    %v132 = vld [vmem:[#allocation3 + $0x2b0] sm:$0xff]
    %v133 = vld [vmem:[#allocation3 + $0x2b8] sm:$0xff]
    %v134 = vld [vmem:[#allocation3 + $0x2c0] sm:$0xff]
    %v135 = vld [vmem:[#allocation3 + $0x2c8] sm:$0xff]
    %v136 = vld [vmem:[#allocation3 + $0x2d0] sm:$0xff]
    %v137 = vld [vmem:[#allocation3 + $0x2d8] sm:$0xff]
    %v138 = vld [vmem:[#allocation3 + $0x2e0] sm:$0xff]
    %v139 = vld [vmem:[#allocation3 + $0x2e8] sm:$0xff]
    %v140 = vld [vmem:[#allocation3 + $0x2f0] sm:$0xff]
    %v141 = vld [vmem:[#allocation3 + $0x2f8] sm:$0xff]
    %v142 = vld [vmem:[#allocation3 + $0x300] sm:$0xff]
    %v143 = vld [vmem:[#allocation3 + $0x308] sm:$0xff]
    %v144 = vld [vmem:[#allocation3 + $0x310] sm:$0xff]
    %v145 = vld [vmem:[#allocation3 + $0x318] sm:$0xff]
    %v146 = vld [vmem:[#allocation3 + $0x320] sm:$0xff]
    %v147 = vld [vmem:[#allocation3 + $0x328] sm:$0xff]
    %v148 = vld [vmem:[#allocation3 + $0x330] sm:$0xff]
    %v149 = vld [vmem:[#allocation3 + $0x338] sm:$0xff]
    %v150 = vld [vmem:[#allocation3 + $0x340] sm:$0xff]
    %v151 = vld [vmem:[#allocation3 + $0x348] sm:$0xff]
    %v152 = vld [vmem:[#allocation3 + $0x350] sm:$0xff]
    %v153 = vld [vmem:[#allocation3 + $0x358] sm:$0xff]
    %v154 = vld [vmem:[#allocation3 + $0x360] sm:$0xff]
    %v155 = vld [vmem:[#allocation3 + $0x368] sm:$0xff]
    %v156 = vld [vmem:[#allocation3 + $0x370] sm:$0xff]
    %v157 = vld [vmem:[#allocation3 + $0x378] sm:$0xff]
    %v158 = vld [vmem:[#allocation3 + $0x380] sm:$0xff]
    %v159 = vld [vmem:[#allocation3 + $0x388] sm:$0xff]
    %v160 = vld [vmem:[#allocation3 + $0x390] sm:$0xff]
    %v161 = vld [vmem:[#allocation3 + $0x398] sm:$0xff]
    %v162 = vld [vmem:[#allocation3 + $0x3a0] sm:$0xff]
    %v163 = vld [vmem:[#allocation3 + $0x3a8] sm:$0xff]
    %v164 = vld [vmem:[#allocation3 + $0x3b0] sm:$0xff]
    %v165 = vld [vmem:[#allocation3 + $0x3b8] sm:$0xff]
    %v166 = vld [vmem:[#allocation3 + $0x3c0] sm:$0xff]
    %v167 = vld [vmem:[#allocation3 + $0x3c8] sm:$0xff]
    %v168 = vld [vmem:[#allocation3 + $0x3d0] sm:$0xff]
    %v169 = vld [vmem:[#allocation3 + $0x3d8] sm:$0xff]
    %v170 = vld [vmem:[#allocation3 + $0x3e0] sm:$0xff]
    %v171 = vld [vmem:[#allocation3 + $0x3e8] sm:$0xff]
    %v172 = vld [vmem:[#allocation3 + $0x3f0] sm:$0xff]
    %v173 = vld [vmem:[#allocation3 + $0x3f8] sm:$0xff]
    %v174 = vld [vmem:[#allocation3 + $0x400] sm:$0xff]
    %v175 = vld [vmem:[#allocation3 + $0x408] sm:$0xff]
    %v176 = vld [vmem:[#allocation3 + $0x410] sm:$0xff]
    %v177 = vld [vmem:[#allocation3 + $0x418] sm:$0xff]
    %v178 = vld [vmem:[#allocation3 + $0x420] sm:$0xff]
    %v179 = vld [vmem:[#allocation3 + $0x428] sm:$0xff]
    %v180 = vld [vmem:[#allocation3 + $0x430] sm:$0xff]
    %v181 = vld [vmem:[#allocation3 + $0x438] sm:$0xff]
    %v182 = vld [vmem:[#allocation3 + $0x440] sm:$0xff]
    %v183 = vld [vmem:[#allocation3 + $0x448] sm:$0xff]
    %v184 = vld [vmem:[#allocation3 + $0x450] sm:$0xff]
    %v185 = vld [vmem:[#allocation3 + $0x458] sm:$0xff]
    %v186 = vld [vmem:[#allocation3 + $0x460] sm:$0xff]
    %v187 = vld [vmem:[#allocation3 + $0x468] sm:$0xff]
    %v188 = vld [vmem:[#allocation3 + $0x470] sm:$0xff]
    %v189 = vld [vmem:[#allocation3 + $0x478] sm:$0xff]
    %v190 = vld [vmem:[#allocation3 + $0x480] sm:$0xff]
    %v191 = vld [vmem:[#allocation3 + $0x488] sm:$0xff]
    %v192 = vld [vmem:[#allocation3 + $0x490] sm:$0xff]
    %v193 = vld [vmem:[#allocation3 + $0x498] sm:$0xff]
    %v194 = vld [vmem:[#allocation3 + $0x4a0] sm:$0xff]
    %v195 = vld [vmem:[#allocation3 + $0x4a8] sm:$0xff]
    %v196 = vld [vmem:[#allocation3 + $0x4b0] sm:$0xff]
    %v197 = vld [vmem:[#allocation3 + $0x4b8] sm:$0xff]
    %v198 = vld [vmem:[#allocation3 + $0x4c0] sm:$0xff]
    %v199 = vld [vmem:[#allocation3 + $0x4c8] sm:$0xff]
    %v200 = vld [vmem:[#allocation3 + $0x4d0] sm:$0xff]
    %v201 = vld [vmem:[#allocation3 + $0x4d8] sm:$0xff]
    %v202 = vld [vmem:[#allocation3 + $0x4e0] sm:$0xff]
    %v203 = vld [vmem:[#allocation3 + $0x4e8] sm:$0xff]
    %v204 = vld [vmem:[#allocation3 + $0x4f0] sm:$0xff]
    %v205 = vld [vmem:[#allocation3 + $0x4f8] sm:$0xff]
    %v206 = vld [vmem:[#allocation3 + $0x500] sm:$0xff]
    %v207 = vld [vmem:[#allocation3 + $0x508] sm:$0xff]
    %v208 = vld [vmem:[#allocation3 + $0x510] sm:$0xff]
    %v209 = vld [vmem:[#allocation3 + $0x518] sm:$0xff]
    %v210 = vld [vmem:[#allocation3 + $0x520] sm:$0xff]
    %v211 = vld [vmem:[#allocation3 + $0x528] sm:$0xff]
    %v212 = vld [vmem:[#allocation3 + $0x530] sm:$0xff]
    %v213 = vld [vmem:[#allocation3 + $0x538] sm:$0xff]
    %v214 = vld [vmem:[#allocation3 + $0x540] sm:$0xff]
    %v215 = vld [vmem:[#allocation3 + $0x548] sm:$0xff]
    %v216 = vld [vmem:[#allocation3 + $0x550] sm:$0xff]
    %v217 = vld [vmem:[#allocation3 + $0x558] sm:$0xff]
    %v218 = vld [vmem:[#allocation3 + $0x560] sm:$0xff]
    %v219 = vld [vmem:[#allocation3 + $0x568] sm:$0xff]
    %v220 = vld [vmem:[#allocation3 + $0x570] sm:$0xff]
    %v221 = vld [vmem:[#allocation3 + $0x578] sm:$0xff]
    %v222 = vld [vmem:[#allocation3 + $0x580] sm:$0xff]
    %v223 = vld [vmem:[#allocation3 + $0x588] sm:$0xff]
    %v224 = vld [vmem:[#allocation3 + $0x590] sm:$0xff]
    %v225 = vld [vmem:[#allocation3 + $0x598] sm:$0xff]
    %v226 = vld [vmem:[#allocation3 + $0x5a0] sm:$0xff]
    %v227 = vld [vmem:[#allocation3 + $0x5a8] sm:$0xff]
    %v228 = vld [vmem:[#allocation3 + $0x5b0] sm:$0xff]
    %v229 = vld [vmem:[#allocation3 + $0x5b8] sm:$0xff]
    %v230 = vld [vmem:[#allocation3 + $0x5c0] sm:$0xff]
    %v231 = vld [vmem:[#allocation3 + $0x5c8] sm:$0xff]
    %v232 = vld [vmem:[#allocation3 + $0x5d0] sm:$0xff]
    %v233 = vld [vmem:[#allocation3 + $0x5d8] sm:$0xff]
    %v234 = vld [vmem:[#allocation3 + $0x5e0] sm:$0xff]
    %v235 = vld [vmem:[#allocation3 + $0x5e8] sm:$0xff]
    %v236 = vld [vmem:[#allocation3 + $0x5f0] sm:$0xff]
    %v237 = vld [vmem:[#allocation3 + $0x5f8] sm:$0xff]
    %v238 = vld [vmem:[#allocation3 + $0x600] sm:$0xff]
    %v239 = vld [vmem:[#allocation3 + $0x608] sm:$0xff]
    %v240 = vld [vmem:[#allocation3 + $0x610] sm:$0xff]
    %v241 = vld [vmem:[#allocation3 + $0x618] sm:$0xff]
    %v242 = vld [vmem:[#allocation3 + $0x620] sm:$0xff]
    %v243 = vld [vmem:[#allocation3 + $0x628] sm:$0xff]
    %v244 = vld [vmem:[#allocation3 + $0x630] sm:$0xff]
    %v245 = vld [vmem:[#allocation3 + $0x638] sm:$0xff]
    %v246 = vld [vmem:[#allocation3 + $0x640] sm:$0xff]
    %v247 = vld [vmem:[#allocation3 + $0x648] sm:$0xff]
    %v248 = vld [vmem:[#allocation3 + $0x650] sm:$0xff]
    %v249 = vld [vmem:[#allocation3 + $0x658] sm:$0xff]
    %v250 = vld [vmem:[#allocation3 + $0x660] sm:$0xff]
    %v251 = vld [vmem:[#allocation3 + $0x668] sm:$0xff]
    %v252 = vld [vmem:[#allocation3 + $0x670] sm:$0xff]
    %v253 = vld [vmem:[#allocation3 + $0x678] sm:$0xff]
    %v254 = vld [vmem:[#allocation3 + $0x680] sm:$0xff]
    %v255 = vld [vmem:[#allocation3 + $0x688] sm:$0xff]
    %v256 = vld [vmem:[#allocation3 + $0x690] sm:$0xff]
    %v257 = vld [vmem:[#allocation3 + $0x698] sm:$0xff]
    %v258 = vld [vmem:[#allocation3 + $0x6a0] sm:$0xff]
    %v259 = vld [vmem:[#allocation3 + $0x6a8] sm:$0xff]
    %v260 = vld [vmem:[#allocation3 + $0x6b0] sm:$0xff]
    %v261 = vld [vmem:[#allocation3 + $0x6b8] sm:$0xff]
    %v262 = vld [vmem:[#allocation3 + $0x6c0] sm:$0xff]
    %v263 = vld [vmem:[#allocation3 + $0x6c8] sm:$0xff]
    %v264 = vld [vmem:[#allocation3 + $0x6d0] sm:$0xff]
    %v265 = vld [vmem:[#allocation3 + $0x6d8] sm:$0xff]
    %v266 = vld [vmem:[#allocation3 + $0x6e0] sm:$0xff]
    %v267 = vld [vmem:[#allocation3 + $0x6e8] sm:$0xff]
    %v268 = vld [vmem:[#allocation3 + $0x6f0] sm:$0xff]
    %v269 = vld [vmem:[#allocation3 + $0x6f8] sm:$0xff]
    %v270 = vld [vmem:[#allocation3 + $0x700] sm:$0xff]
    %v271 = vld [vmem:[#allocation3 + $0x708] sm:$0xff]
    %v272 = vld [vmem:[#allocation3 + $0x710] sm:$0xff]
    %v273 = vld [vmem:[#allocation3 + $0x718] sm:$0xff]
    %v274 = vld [vmem:[#allocation3 + $0x720] sm:$0xff]
    %v275 = vld [vmem:[#allocation3 + $0x728] sm:$0xff]
    %v276 = vld [vmem:[#allocation3 + $0x730] sm:$0xff]
    %v277 = vld [vmem:[#allocation3 + $0x738] sm:$0xff]
    %v278 = vld [vmem:[#allocation3 + $0x740] sm:$0xff]
    %v279 = vld [vmem:[#allocation3 + $0x748] sm:$0xff]
    %v280 = vld [vmem:[#allocation3 + $0x750] sm:$0xff]
    %v281 = vld [vmem:[#allocation3 + $0x758] sm:$0xff]
    %v282 = vld [vmem:[#allocation3 + $0x760] sm:$0xff]
    %v283 = vld [vmem:[#allocation3 + $0x768] sm:$0xff]
    %v284 = vld [vmem:[#allocation3 + $0x770] sm:$0xff]
    %v285 = vld [vmem:[#allocation3 + $0x778] sm:$0xff]
    %v286 = vld [vmem:[#allocation3 + $0x780] sm:$0xff]
    %v287 = vld [vmem:[#allocation3 + $0x788] sm:$0xff]
    %v288 = vld [vmem:[#allocation3 + $0x790] sm:$0xff]
    %v289 = vld [vmem:[#allocation3 + $0x798] sm:$0xff]
    %v290 = vld [vmem:[#allocation3 + $0x7a0] sm:$0xff]
    %v291 = vld [vmem:[#allocation3 + $0x7a8] sm:$0xff]
    %v292 = vld [vmem:[#allocation3 + $0x7b0] sm:$0xff]
    %v293 = vld [vmem:[#allocation3 + $0x7b8] sm:$0xff]
    %v294 = vld [vmem:[#allocation3 + $0x7c0] sm:$0xff]
    %v295 = vld [vmem:[#allocation3 + $0x7c8] sm:$0xff]
    %v296 = vld [vmem:[#allocation3 + $0x7d0] sm:$0xff]
    %v297 = vld [vmem:[#allocation3 + $0x7d8] sm:$0xff]
    %v298 = vld [vmem:[#allocation3 + $0x7e0] sm:$0xff]
    %v299 = vld [vmem:[#allocation3 + $0x7e8] sm:$0xff]
    %v300 = vld [vmem:[#allocation3 + $0x7f0] sm:$0xff]
    %v301 = vld [vmem:[#allocation3 + $0x7f8] sm:$0xff]
    %v302 = vld [vmem:[#allocation3 + $0x800] sm:$0xff]
    %v303 = vld [vmem:[#allocation3 + $0x808] sm:$0xff]
    %v304 = vld [vmem:[#allocation3 + $0x810] sm:$0xff]
    %v305 = vld [vmem:[#allocation3 + $0x818] sm:$0xff]
    %v306 = vld [vmem:[#allocation3 + $0x820] sm:$0xff]
    %v307 = vld [vmem:[#allocation3 + $0x828] sm:$0xff]
    %v308 = vld [vmem:[#allocation3 + $0x830] sm:$0xff]
    %v309 = vld [vmem:[#allocation3 + $0x838] sm:$0xff]
    %v310 = vld [vmem:[#allocation3 + $0x840] sm:$0xff]
    %v311 = vld [vmem:[#allocation3 + $0x848] sm:$0xff]
    %v312 = vld [vmem:[#allocation3 + $0x850] sm:$0xff]
    %v313 = vld [vmem:[#allocation3 + $0x858] sm:$0xff]
    %v314 = vld [vmem:[#allocation3 + $0x860] sm:$0xff]
    %v315 = vld [vmem:[#allocation3 + $0x868] sm:$0xff]
    %v316 = vld [vmem:[#allocation3 + $0x870] sm:$0xff]
    %v317 = vld [vmem:[#allocation3 + $0x878] sm:$0xff]
    %v318 = vld [vmem:[#allocation3 + $0x880] sm:$0xff]
    %v319 = vld [vmem:[#allocation3 + $0x888] sm:$0xff]
    %v320 = vld [vmem:[#allocation3 + $0x890] sm:$0xff]
    %v321 = vld [vmem:[#allocation3 + $0x898] sm:$0xff]
    %v322 = vld [vmem:[#allocation3 + $0x8a0] sm:$0xff]
    %v323 = vld [vmem:[#allocation3 + $0x8a8] sm:$0xff]
    %v324 = vld [vmem:[#allocation3 + $0x8b0] sm:$0xff]
    %v325 = vld [vmem:[#allocation3 + $0x8b8] sm:$0xff]
    %v326 = vld [vmem:[#allocation3 + $0x8c0] sm:$0xff]
    %v327 = vld [vmem:[#allocation3 + $0x8c8] sm:$0xff]
    %v328 = vld [vmem:[#allocation3 + $0x8d0] sm:$0xff]
    %v329 = vld [vmem:[#allocation3 + $0x8d8] sm:$0xff]
    %v330 = vld [vmem:[#allocation3 + $0x8e0] sm:$0xff]
    %v331 = vld [vmem:[#allocation3 + $0x8e8] sm:$0xff]
    %v332 = vld [vmem:[#allocation3 + $0x8f0] sm:$0xff]
    %v333 = vld [vmem:[#allocation3 + $0x8f8] sm:$0xff]
    %v334 = vld [vmem:[#allocation3 + $0x900] sm:$0xff]
    %v335 = vld [vmem:[#allocation3 + $0x908] sm:$0xff]
    %v336 = vld [vmem:[#allocation3 + $0x910] sm:$0xff]
    %v337 = vld [vmem:[#allocation3 + $0x918] sm:$0xff]
    %v338 = vld [vmem:[#allocation3 + $0x920] sm:$0xff]
    %v339 = vld [vmem:[#allocation3 + $0x928] sm:$0xff]
    %v340 = vld [vmem:[#allocation3 + $0x930] sm:$0xff]
    %v341 = vld [vmem:[#allocation3 + $0x938] sm:$0xff]
    %v342 = vld [vmem:[#allocation3 + $0x940] sm:$0xff]
    %v343 = vld [vmem:[#allocation3 + $0x948] sm:$0xff]
    %v344 = vld [vmem:[#allocation3 + $0x950] sm:$0xff]
    %v345 = vld [vmem:[#allocation3 + $0x958] sm:$0xff]
    %v346 = vld [vmem:[#allocation3 + $0x960] sm:$0xff]
    %v347 = vld [vmem:[#allocation3 + $0x968] sm:$0xff]
    %v348 = vld [vmem:[#allocation3 + $0x970] sm:$0xff]
    %v349 = vld [vmem:[#allocation3 + $0x978] sm:$0xff]
    %v350 = vld [vmem:[#allocation3 + $0x980] sm:$0xff]
    %v351 = vld [vmem:[#allocation3 + $0x988] sm:$0xff]
    %v352 = vld [vmem:[#allocation3 + $0x990] sm:$0xff]
    %v353 = vld [vmem:[#allocation3 + $0x998] sm:$0xff]
    %v354 = vld [vmem:[#allocation3 + $0x9a0] sm:$0xff]
    %v355 = vld [vmem:[#allocation3 + $0x9a8] sm:$0xff]
    %v356 = vld [vmem:[#allocation3 + $0x9b0] sm:$0xff]
    %v357 = vld [vmem:[#allocation3 + $0x9b8] sm:$0xff]
    %v358 = vld [vmem:[#allocation3 + $0x9c0] sm:$0xff]
    %v359 = vld [vmem:[#allocation3 + $0x9c8] sm:$0xff]
    %v360 = vld [vmem:[#allocation3 + $0x9d0] sm:$0xff]
    %v361 = vld [vmem:[#allocation3 + $0x9d8] sm:$0xff]
    %v362 = vld [vmem:[#allocation3 + $0x9e0] sm:$0xff]
    %v363 = vld [vmem:[#allocation3 + $0x9e8] sm:$0xff]
    %v364 = vld [vmem:[#allocation3 + $0x9f0] sm:$0xff]
    %v365 = vld [vmem:[#allocation3 + $0x9f8] sm:$0xff]
    %v366 = vld [vmem:[#allocation3 + $0xa00] sm:$0xff]
    %v367 = vld [vmem:[#allocation3 + $0xa08] sm:$0xff]
    %v368 = vld [vmem:[#allocation3 + $0xa10] sm:$0xff]
    %v369 = vld [vmem:[#allocation3 + $0xa18] sm:$0xff]
    %v370 = vld [vmem:[#allocation3 + $0xa20] sm:$0xff]
    %v371 = vld [vmem:[#allocation3 + $0xa28] sm:$0xff]
    %v372 = vld [vmem:[#allocation3 + $0xa30] sm:$0xff]
    %v373 = vld [vmem:[#allocation3 + $0xa38] sm:$0xff]
    %v374 = vld [vmem:[#allocation3 + $0xa40] sm:$0xff]
    %v375 = vld [vmem:[#allocation3 + $0xa48] sm:$0xff]
    %v376 = vld [vmem:[#allocation3 + $0xa50] sm:$0xff]
    %v377 = vld [vmem:[#allocation3 + $0xa58] sm:$0xff]
    %v378 = vld [vmem:[#allocation3 + $0xa60] sm:$0xff]
    %v379 = vld [vmem:[#allocation3 + $0xa68] sm:$0xff]
    %v380 = vld [vmem:[#allocation3 + $0xa70] sm:$0xff]
    %v381 = vld [vmem:[#allocation3 + $0xa78] sm:$0xff]
    %v382 = vld [vmem:[#allocation3 + $0xa80] sm:$0xff]
    %v383 = vld [vmem:[#allocation3 + $0xa88] sm:$0xff]
    %v384 = vld [vmem:[#allocation3 + $0xa90] sm:$0xff]
    %v385 = vld [vmem:[#allocation3 + $0xa98] sm:$0xff]
    %v386 = vld [vmem:[#allocation3 + $0xaa0] sm:$0xff]
    %v387 = vld [vmem:[#allocation3 + $0xaa8] sm:$0xff]
    %v388 = vld [vmem:[#allocation3 + $0xab0] sm:$0xff]
    %v389 = vld [vmem:[#allocation3 + $0xab8] sm:$0xff]
    %v390 = vld [vmem:[#allocation3 + $0xac0] sm:$0xff]
    %v391 = vld [vmem:[#allocation3 + $0xac8] sm:$0xff]
    %v392 = vld [vmem:[#allocation3 + $0xad0] sm:$0xff]
    %v393 = vld [vmem:[#allocation3 + $0xad8] sm:$0xff]
    %v394 = vld [vmem:[#allocation3 + $0xae0] sm:$0xff]
    %v395 = vld [vmem:[#allocation3 + $0xae8] sm:$0xff]
    %v396 = vld [vmem:[#allocation3 + $0xaf0] sm:$0xff]
    %v397 = vld [vmem:[#allocation3 + $0xaf8] sm:$0xff]
    %v398 = vld [vmem:[#allocation3 + $0xb00] sm:$0xff]
    %v399 = vld [vmem:[#allocation3 + $0xb08] sm:$0xff]
    %v400 = vld [vmem:[#allocation3 + $0xb10] sm:$0xff]
    %v401 = vld [vmem:[#allocation3 + $0xb18] sm:$0xff]
    %v402 = vld [vmem:[#allocation3 + $0xb20] sm:$0xff]
    %v403 = vld [vmem:[#allocation3 + $0xb28] sm:$0xff]
    %v404 = vld [vmem:[#allocation3 + $0xb30] sm:$0xff]
    %v405 = vld [vmem:[#allocation3 + $0xb38] sm:$0xff]
    %v406 = vld [vmem:[#allocation3 + $0xb40] sm:$0xff]
    %v407 = vld [vmem:[#allocation3 + $0xb48] sm:$0xff]
    %v408 = vld [vmem:[#allocation3 + $0xb50] sm:$0xff]
    %v409 = vld [vmem:[#allocation3 + $0xb58] sm:$0xff]
    %v410 = vld [vmem:[#allocation3 + $0xb60] sm:$0xff]
    %v411 = vld [vmem:[#allocation3 + $0xb68] sm:$0xff]
    %v412 = vld [vmem:[#allocation3 + $0xb70] sm:$0xff]
    %v413 = vld [vmem:[#allocation3 + $0xb78] sm:$0xff]
    %v414 = vld [vmem:[#allocation3 + $0xb80] sm:$0xff]
    %v415 = vld [vmem:[#allocation3 + $0xb88] sm:$0xff]
    %v416 = vld [vmem:[#allocation3 + $0xb90] sm:$0xff]
    %v417 = vld [vmem:[#allocation3 + $0xb98] sm:$0xff]
    %v418 = vld [vmem:[#allocation3 + $0xba0] sm:$0xff]
    %v419 = vld [vmem:[#allocation3 + $0xba8] sm:$0xff]
    %v420 = vld [vmem:[#allocation3 + $0xbb0] sm:$0xff]
    %v421 = vld [vmem:[#allocation3 + $0xbb8] sm:$0xff]
    %v422 = vld [vmem:[#allocation3 + $0xbc0] sm:$0xff]
    %v423 = vld [vmem:[#allocation3 + $0xbc8] sm:$0xff]
    %v424 = vld [vmem:[#allocation3 + $0xbd0] sm:$0xff]
    %v425 = vld [vmem:[#allocation3 + $0xbd8] sm:$0xff]
    %v426 = vld [vmem:[#allocation3 + $0xbe0] sm:$0xff]
    %v427 = vld [vmem:[#allocation3 + $0xbe8] sm:$0xff]
    %v428 = vld [vmem:[#allocation3 + $0xbf0] sm:$0xff]
    %v429 = vld [vmem:[#allocation3 + $0xbf8] sm:$0xff]
    %v430 = vld [vmem:[#allocation3 + $0xc00] sm:$0xff]
    %v431 = vld [vmem:[#allocation3 + $0xc08] sm:$0xff]
    %v432 = vld [vmem:[#allocation3 + $0xc10] sm:$0xff]
    %v433 = vld [vmem:[#allocation3 + $0xc18] sm:$0xff]
    %v434 = vld [vmem:[#allocation3 + $0xc20] sm:$0xff]
    %v435 = vld [vmem:[#allocation3 + $0xc28] sm:$0xff]
    %v436 = vld [vmem:[#allocation3 + $0xc30] sm:$0xff]
    %v437 = vld [vmem:[#allocation3 + $0xc38] sm:$0xff]
    %v438 = vld [vmem:[#allocation3 + $0xc40] sm:$0xff]
    %v439 = vld [vmem:[#allocation3 + $0xc48] sm:$0xff]
    %v440 = vld [vmem:[#allocation3 + $0xc50] sm:$0xff]
    %v441 = vld [vmem:[#allocation3 + $0xc58] sm:$0xff]
    %v442 = vld [vmem:[#allocation3 + $0xc60] sm:$0xff]
    %v443 = vld [vmem:[#allocation3 + $0xc68] sm:$0xff]
    %v444 = vld [vmem:[#allocation3 + $0xc70] sm:$0xff]
    %v445 = vld [vmem:[#allocation3 + $0xc78] sm:$0xff]
    %v446 = vld [vmem:[#allocation3 + $0xc80] sm:$0xff]
    %v447 = vld [vmem:[#allocation3 + $0xc88] sm:$0xff]
    %v448 = vld [vmem:[#allocation3 + $0xc90] sm:$0xff]
    %v449 = vld [vmem:[#allocation3 + $0xc98] sm:$0xff]
    %v450 = vld [vmem:[#allocation3 + $0xca0] sm:$0xff]
    %v451 = vld [vmem:[#allocation3 + $0xca8] sm:$0xff]
    %v452 = vld [vmem:[#allocation3 + $0xcb0] sm:$0xff]
    %v453 = vld [vmem:[#allocation3 + $0xcb8] sm:$0xff]
    %v454 = vld [vmem:[#allocation3 + $0xcc0] sm:$0xff]
    %v455 = vld [vmem:[#allocation3 + $0xcc8] sm:$0xff]
    %v456 = vld [vmem:[#allocation3 + $0xcd0] sm:$0xff]
    %v457 = vld [vmem:[#allocation3 + $0xcd8] sm:$0xff]
    %v458 = vld [vmem:[#allocation3 + $0xce0] sm:$0xff]
    %v459 = vld [vmem:[#allocation3 + $0xce8] sm:$0xff]
    %v460 = vld [vmem:[#allocation3 + $0xcf0] sm:$0xff]
    %v461 = vld [vmem:[#allocation3 + $0xcf8] sm:$0xff]
    %v462 = vld [vmem:[#allocation3 + $0xd00] sm:$0xff]
    %v463 = vld [vmem:[#allocation3 + $0xd08] sm:$0xff]
    %v464 = vld [vmem:[#allocation3 + $0xd10] sm:$0xff]
    %v465 = vld [vmem:[#allocation3 + $0xd18] sm:$0xff]
    %v466 = vld [vmem:[#allocation3 + $0xd20] sm:$0xff]
    %v467 = vld [vmem:[#allocation3 + $0xd28] sm:$0xff]
    %v468 = vld [vmem:[#allocation3 + $0xd30] sm:$0xff]
    %v469 = vld [vmem:[#allocation3 + $0xd38] sm:$0xff]
    %v470 = vld [vmem:[#allocation3 + $0xd40] sm:$0xff]
    %v471 = vld [vmem:[#allocation3 + $0xd48] sm:$0xff]
    %v472 = vld [vmem:[#allocation3 + $0xd50] sm:$0xff]
    %v473 = vld [vmem:[#allocation3 + $0xd58] sm:$0xff]
    %v474 = vld [vmem:[#allocation3 + $0xd60] sm:$0xff]
    %v475 = vld [vmem:[#allocation3 + $0xd68] sm:$0xff]
    %v476 = vld [vmem:[#allocation3 + $0xd70] sm:$0xff]
    %v477 = vld [vmem:[#allocation3 + $0xd78] sm:$0xff]
    %v478 = vld [vmem:[#allocation3 + $0xd80] sm:$0xff]
    %v479 = vld [vmem:[#allocation3 + $0xd88] sm:$0xff]
    %v480 = vld [vmem:[#allocation3 + $0xd90] sm:$0xff]
    %v481 = vld [vmem:[#allocation3 + $0xd98] sm:$0xff]
    %v482 = vld [vmem:[#allocation3 + $0xda0] sm:$0xff]
    %v483 = vld [vmem:[#allocation3 + $0xda8] sm:$0xff]
    %v484 = vld [vmem:[#allocation3 + $0xdb0] sm:$0xff]
    %v485 = vld [vmem:[#allocation3 + $0xdb8] sm:$0xff]
    %v486 = vld [vmem:[#allocation3 + $0xdc0] sm:$0xff]
    %v487 = vld [vmem:[#allocation3 + $0xdc8] sm:$0xff]
    %v488 = vld [vmem:[#allocation3 + $0xdd0] sm:$0xff]
    %v489 = vld [vmem:[#allocation3 + $0xdd8] sm:$0xff]
    %v490 = vld [vmem:[#allocation3 + $0xde0] sm:$0xff]
    %v491 = vld [vmem:[#allocation3 + $0xde8] sm:$0xff]
    %v492 = vld [vmem:[#allocation3 + $0xdf0] sm:$0xff]
    %v493 = vld [vmem:[#allocation3 + $0xdf8] sm:$0xff]
    %v494 = vld [vmem:[#allocation3 + $0xe00] sm:$0xff]
    %v495 = vld [vmem:[#allocation3 + $0xe08] sm:$0xff]
    %v496 = vld [vmem:[#allocation3 + $0xe10] sm:$0xff]
    %v497 = vld [vmem:[#allocation3 + $0xe18] sm:$0xff]
    %v498 = vld [vmem:[#allocation3 + $0xe20] sm:$0xff]
    %v499 = vld [vmem:[#allocation3 + $0xe28] sm:$0xff]
    %v500 = vld [vmem:[#allocation3 + $0xe30] sm:$0xff]
    %v501 = vld [vmem:[#allocation3 + $0xe38] sm:$0xff]
    %v502 = vld [vmem:[#allocation3 + $0xe40] sm:$0xff]
    %v503 = vld [vmem:[#allocation3 + $0xe48] sm:$0xff]
    %v504 = vld [vmem:[#allocation3 + $0xe50] sm:$0xff]
    %v505 = vld [vmem:[#allocation3 + $0xe58] sm:$0xff]
    %v506 = vld [vmem:[#allocation3 + $0xe60] sm:$0xff]
    %v507 = vld [vmem:[#allocation3 + $0xe68] sm:$0xff]
    %v508 = vld [vmem:[#allocation3 + $0xe70] sm:$0xff]
    %v509 = vld [vmem:[#allocation3 + $0xe78] sm:$0xff]
    %v510 = vld [vmem:[#allocation3 + $0xe80] sm:$0xff]
    %v511 = vld [vmem:[#allocation3 + $0xe88] sm:$0xff]
    %v512 = vld [vmem:[#allocation3 + $0xe90] sm:$0xff]
    %v513 = vld [vmem:[#allocation3 + $0xe98] sm:$0xff]
    %v514 = vld [vmem:[#allocation3 + $0xea0] sm:$0xff]
    %v515 = vld [vmem:[#allocation3 + $0xea8] sm:$0xff]
    %v516 = vld [vmem:[#allocation3 + $0xeb0] sm:$0xff]
    %v517 = vld [vmem:[#allocation3 + $0xeb8] sm:$0xff]
    %v518 = vld [vmem:[#allocation3 + $0xec0] sm:$0xff]
    %v519 = vld [vmem:[#allocation3 + $0xec8] sm:$0xff]
    %v520 = vld [vmem:[#allocation3 + $0xed0] sm:$0xff]
    %v521 = vld [vmem:[#allocation3 + $0xed8] sm:$0xff]
    %v522 = vld [vmem:[#allocation3 + $0xee0] sm:$0xff]
    %v523 = vld [vmem:[#allocation3 + $0xee8] sm:$0xff]
    %v524 = vld [vmem:[#allocation3 + $0xef0] sm:$0xff]
    %v525 = vld [vmem:[#allocation3 + $0xef8] sm:$0xff]
    %v526 = vld [vmem:[#allocation3 + $0xf00] sm:$0xff]
    %v527 = vld [vmem:[#allocation3 + $0xf08] sm:$0xff]
    %v528 = vld [vmem:[#allocation3 + $0xf10] sm:$0xff]
    %v529 = vld [vmem:[#allocation3 + $0xf18] sm:$0xff]
    %v530 = vld [vmem:[#allocation3 + $0xf20] sm:$0xff]
    %v531 = vld [vmem:[#allocation3 + $0xf28] sm:$0xff]
    %v532 = vld [vmem:[#allocation3 + $0xf30] sm:$0xff]
    %v533 = vld [vmem:[#allocation3 + $0xf38] sm:$0xff]
    %v534 = vld [vmem:[#allocation3 + $0xf40] sm:$0xff]
    %v535 = vld [vmem:[#allocation3 + $0xf48] sm:$0xff]
    %v536 = vld [vmem:[#allocation3 + $0xf50] sm:$0xff]
    %v537 = vld [vmem:[#allocation3 + $0xf58] sm:$0xff]
    %v538 = vld [vmem:[#allocation3 + $0xf60] sm:$0xff]
    %v539 = vld [vmem:[#allocation3 + $0xf68] sm:$0xff]
    %v540 = vld [vmem:[#allocation3 + $0xf70] sm:$0xff]
    %v541 = vld [vmem:[#allocation3 + $0xf78] sm:$0xff]
    %v542 = vld [vmem:[#allocation3 + $0xf80] sm:$0xff]
    %v543 = vld [vmem:[#allocation3 + $0xf88] sm:$0xff]
    %v544 = vld [vmem:[#allocation3 + $0xf90] sm:$0xff]
    %v545 = vld [vmem:[#allocation3 + $0xf98] sm:$0xff]
    %v546 = vld [vmem:[#allocation3 + $0xfa0] sm:$0xff]
    %v547 = vld [vmem:[#allocation3 + $0xfa8] sm:$0xff]
    %v548 = vld [vmem:[#allocation3 + $0xfb0] sm:$0xff]
    %v549 = vld [vmem:[#allocation3 + $0xfb8] sm:$0xff]
    %v550 = vld [vmem:[#allocation3 + $0xfc0] sm:$0xff]
    %v551 = vld [vmem:[#allocation3 + $0xfc8] sm:$0xff]
    %v552 = vld [vmem:[#allocation3 + $0xfd0] sm:$0xff]
    %v553 = vld [vmem:[#allocation3 + $0xfd8] sm:$0xff]
    %v554 = vld [vmem:[#allocation3 + $0xfe0] sm:$0xff]
    %v555 = vld [vmem:[#allocation3 + $0xfe8] sm:$0xff]
    %v556 = vld [vmem:[#allocation3 + $0xff0] sm:$0xff]
    %v557 = vld [vmem:[#allocation3 + $0xff8] sm:$0xff]
    %v558 = vld [vmem:[#allocation3 + $0x1000] sm:$0xff]
    %v559 = vld [vmem:[#allocation3 + $0x1008] sm:$0xff]
    %v560 = vld [vmem:[#allocation3 + $0x1010] sm:$0xff]
    %v561 = vld [vmem:[#allocation3 + $0x1018] sm:$0xff]
    %v562 = vld [vmem:[#allocation3 + $0x1020] sm:$0xff]
    %v563 = vld [vmem:[#allocation3 + $0x1028] sm:$0xff]
    %v564 = vld [vmem:[#allocation3 + $0x1030] sm:$0xff]
    %v565 = vld [vmem:[#allocation3 + $0x1038] sm:$0xff]
    %v566 = vld [vmem:[#allocation3 + $0x1040] sm:$0xff]
    %v567 = vld [vmem:[#allocation3 + $0x1048] sm:$0xff]
    %v568 = vld [vmem:[#allocation3 + $0x1050] sm:$0xff]
    %v569 = vld [vmem:[#allocation3 + $0x1058] sm:$0xff]
    %v570 = vld [vmem:[#allocation3 + $0x1060] sm:$0xff]
    %v571 = vld [vmem:[#allocation3 + $0x1068] sm:$0xff]
    %v572 = vld [vmem:[#allocation3 + $0x1070] sm:$0xff]
    %v573 = vld [vmem:[#allocation3 + $0x1078] sm:$0xff]
    %v574 = vld [vmem:[#allocation3 + $0x1080] sm:$0xff]
    %v575 = vld [vmem:[#allocation3 + $0x1088] sm:$0xff]
    %v576 = vld [vmem:[#allocation3 + $0x1090] sm:$0xff]
    %v577 = vld [vmem:[#allocation3 + $0x1098] sm:$0xff]
    %v578 = vld [vmem:[#allocation3 + $0x10a0] sm:$0xff]
    %v579 = vld [vmem:[#allocation3 + $0x10a8] sm:$0xff]
    %v580 = vld [vmem:[#allocation3 + $0x10b0] sm:$0xff]
    %v581 = vld [vmem:[#allocation3 + $0x10b8] sm:$0xff]
    %v582 = vld [vmem:[#allocation3 + $0x10c0] sm:$0xff]
    %v583 = vld [vmem:[#allocation3 + $0x10c8] sm:$0xff]
    %v584 = vld [vmem:[#allocation3 + $0x10d0] sm:$0xff]
    %v585 = vld [vmem:[#allocation3 + $0x10d8] sm:$0xff]
    %v586 = vld [vmem:[#allocation3 + $0x10e0] sm:$0xff]
    %v587 = vld [vmem:[#allocation3 + $0x10e8] sm:$0xff]
    %v588 = vld [vmem:[#allocation3 + $0x10f0] sm:$0xff]
    %v589 = vld [vmem:[#allocation3 + $0x10f8] sm:$0xff]
    %v590 = vld [vmem:[#allocation3 + $0x1100] sm:$0xff]
    %v591 = vld [vmem:[#allocation3 + $0x1108] sm:$0xff]
    %v592 = vld [vmem:[#allocation3 + $0x1110] sm:$0xff]
    %v593 = vld [vmem:[#allocation3 + $0x1118] sm:$0xff]
    %v594 = vld [vmem:[#allocation3 + $0x1120] sm:$0xff]
    %v595 = vld [vmem:[#allocation3 + $0x1128] sm:$0xff]
    %v596 = vld [vmem:[#allocation3 + $0x1130] sm:$0xff]
    %v597 = vld [vmem:[#allocation3 + $0x1138] sm:$0xff]
    %v598 = vld [vmem:[#allocation3 + $0x1140] sm:$0xff]
    %v599 = vld [vmem:[#allocation3 + $0x1148] sm:$0xff]
    %v600 = vld [vmem:[#allocation3 + $0x1150] sm:$0xff]
    %v601 = vld [vmem:[#allocation3 + $0x1158] sm:$0xff]
    %v602 = vld [vmem:[#allocation3 + $0x1160] sm:$0xff]
    %v603 = vld [vmem:[#allocation3 + $0x1168] sm:$0xff]
    %v604 = vld [vmem:[#allocation3 + $0x1170] sm:$0xff]
    %v605 = vld [vmem:[#allocation3 + $0x1178] sm:$0xff]
    %v606 = vld [vmem:[#allocation3 + $0x1180] sm:$0xff]
    %v607 = vld [vmem:[#allocation3 + $0x1188] sm:$0xff]
    %v608 = vld [vmem:[#allocation3 + $0x1190] sm:$0xff]
    %v609 = vld [vmem:[#allocation3 + $0x1198] sm:$0xff]
    %v610 = vld [vmem:[#allocation3 + $0x11a0] sm:$0xff]
    %v611 = vld [vmem:[#allocation3 + $0x11a8] sm:$0xff]
    %v612 = vld [vmem:[#allocation3 + $0x11b0] sm:$0xff]
    %v613 = vld [vmem:[#allocation3 + $0x11b8] sm:$0xff]
    %v614 = vld [vmem:[#allocation3 + $0x11c0] sm:$0xff]
    %v615 = vld [vmem:[#allocation3 + $0x11c8] sm:$0xff]
    %v616 = vld [vmem:[#allocation3 + $0x11d0] sm:$0xff]
    %v617 = vld [vmem:[#allocation3 + $0x11d8] sm:$0xff]
    %v618 = vld [vmem:[#allocation3 + $0x11e0] sm:$0xff]
    %v619 = vld [vmem:[#allocation3 + $0x11e8] sm:$0xff]
    %v620 = vld [vmem:[#allocation3 + $0x11f0] sm:$0xff]
    %v621 = vld [vmem:[#allocation3 + $0x11f8] sm:$0xff]
    %v622 = vld [vmem:[#allocation3 + $0x1200] sm:$0xff]
    %v623 = vld [vmem:[#allocation3 + $0x1208] sm:$0xff]
    %v624 = vld [vmem:[#allocation3 + $0x1210] sm:$0xff]
    %v625 = vld [vmem:[#allocation3 + $0x1218] sm:$0xff]
    %v626 = vld [vmem:[#allocation3 + $0x1220] sm:$0xff]
    %v627 = vld [vmem:[#allocation3 + $0x1228] sm:$0xff]
    %v628 = vld [vmem:[#allocation3 + $0x1230] sm:$0xff]
    %v629 = vld [vmem:[#allocation3 + $0x1238] sm:$0xff]
    %v630 = vld [vmem:[#allocation3 + $0x1240] sm:$0xff]
    %v631 = vld [vmem:[#allocation3 + $0x1248] sm:$0xff]
    %v632 = vld [vmem:[#allocation3 + $0x1250] sm:$0xff]
    %v633 = vld [vmem:[#allocation3 + $0x1258] sm:$0xff]
    %v634 = vld [vmem:[#allocation3 + $0x1260] sm:$0xff]
    %v635 = vld [vmem:[#allocation3 + $0x1268] sm:$0xff]
    %v636 = vld [vmem:[#allocation3 + $0x1270] sm:$0xff]
    %v637 = vld [vmem:[#allocation3 + $0x1278] sm:$0xff]
    %v638 = vld [vmem:[#allocation3 + $0x1280] sm:$0xff]
    %v639 = vld [vmem:[#allocation3 + $0x1288] sm:$0xff]
    %v640 = vld [vmem:[#allocation3 + $0x1290] sm:$0xff]
    %v641 = vld [vmem:[#allocation3 + $0x1298] sm:$0xff]
    %v642 = vld [vmem:[#allocation3 + $0x12a0] sm:$0xff]
    %v643 = vld [vmem:[#allocation3 + $0x12a8] sm:$0xff]
    %v644 = vld [vmem:[#allocation3 + $0x12b0] sm:$0xff]
    %v645 = vld [vmem:[#allocation3 + $0x12b8] sm:$0xff]
    %v646 = vld [vmem:[#allocation3 + $0x12c0] sm:$0xff]
    %v647 = vld [vmem:[#allocation3 + $0x12c8] sm:$0xff]
    %v648 = vld [vmem:[#allocation3 + $0x12d0] sm:$0xff]
    %v649 = vld [vmem:[#allocation3 + $0x12d8] sm:$0xff]
    %v650 = vld [vmem:[#allocation3 + $0x12e0] sm:$0xff]
    %v651 = vld [vmem:[#allocation3 + $0x12e8] sm:$0xff]
    %v652 = vld [vmem:[#allocation3 + $0x12f0] sm:$0xff]
    %v653 = vld [vmem:[#allocation3 + $0x12f8] sm:$0xff]
    %v654 = vld [vmem:[#allocation3 + $0x1300] sm:$0xff]
    %v655 = vld [vmem:[#allocation3 + $0x1308] sm:$0xff]
    %v656 = vld [vmem:[#allocation3 + $0x1310] sm:$0xff]
    %v657 = vld [vmem:[#allocation3 + $0x1318] sm:$0xff]
    %v658 = vld [vmem:[#allocation3 + $0x1320] sm:$0xff]
    %v659 = vld [vmem:[#allocation3 + $0x1328] sm:$0xff]
    %v660 = vld [vmem:[#allocation3 + $0x1330] sm:$0xff]
    %v661 = vld [vmem:[#allocation3 + $0x1338] sm:$0xff]
    %v662 = vld [vmem:[#allocation3 + $0x1340] sm:$0xff]
    %v663 = vld [vmem:[#allocation3 + $0x1348] sm:$0xff]
    %v664 = vld [vmem:[#allocation3 + $0x1350] sm:$0xff]
    %v665 = vld [vmem:[#allocation3 + $0x1358] sm:$0xff]
    %v666 = vld [vmem:[#allocation3 + $0x1360] sm:$0xff]
    %v667 = vld [vmem:[#allocation3 + $0x1368] sm:$0xff]
    %v668 = vld [vmem:[#allocation3 + $0x1370] sm:$0xff]
    %v669 = vld [vmem:[#allocation3 + $0x1378] sm:$0xff]
    %v670 = vld [vmem:[#allocation3 + $0x1380] sm:$0xff]
    %v671 = vld [vmem:[#allocation3 + $0x1388] sm:$0xff]
    %v672 = vld [vmem:[#allocation3 + $0x1390] sm:$0xff]
    %v673 = vld [vmem:[#allocation3 + $0x1398] sm:$0xff]
    %v674 = vld [vmem:[#allocation3 + $0x13a0] sm:$0xff]
    %v675 = vld [vmem:[#allocation3 + $0x13a8] sm:$0xff]
    %v676 = vld [vmem:[#allocation3 + $0x13b0] sm:$0xff]
    %v677 = vld [vmem:[#allocation3 + $0x13b8] sm:$0xff]
    %v678 = vld [vmem:[#allocation3 + $0x13c0] sm:$0xff]
    %v679 = vld [vmem:[#allocation3 + $0x13c8] sm:$0xff]
    %v680 = vld [vmem:[#allocation3 + $0x13d0] sm:$0xff]
    %v681 = vld [vmem:[#allocation3 + $0x13d8] sm:$0xff]
    %v682 = vld [vmem:[#allocation3 + $0x13e0] sm:$0xff]
    %v683 = vld [vmem:[#allocation3 + $0x13e8] sm:$0xff]
    %v684 = vld [vmem:[#allocation3 + $0x13f0] sm:$0xff]
    %v685 = vld [vmem:[#allocation3 + $0x13f8] sm:$0xff]
    %v686 = vld [vmem:[#allocation3 + $0x1400] sm:$0xff]
    %v687 = vld [vmem:[#allocation3 + $0x1408] sm:$0xff]
    %v688 = vld [vmem:[#allocation3 + $0x1410] sm:$0xff]
    %v689 = vld [vmem:[#allocation3 + $0x1418] sm:$0xff]
    %v690 = vld [vmem:[#allocation3 + $0x1420] sm:$0xff]
    %v691 = vld [vmem:[#allocation3 + $0x1428] sm:$0xff]
    %v692 = vld [vmem:[#allocation3 + $0x1430] sm:$0xff]
    %v693 = vld [vmem:[#allocation3 + $0x1438] sm:$0xff]
    %v694 = vld [vmem:[#allocation3 + $0x1440] sm:$0xff]
    %v695 = vld [vmem:[#allocation3 + $0x1448] sm:$0xff]
    %v696 = vld [vmem:[#allocation3 + $0x1450] sm:$0xff]
    %v697 = vld [vmem:[#allocation3 + $0x1458] sm:$0xff]
    %v698 = vld [vmem:[#allocation3 + $0x1460] sm:$0xff]
    %v699 = vld [vmem:[#allocation3 + $0x1468] sm:$0xff]
    %v700 = vld [vmem:[#allocation3 + $0x1470] sm:$0xff]
    %v701 = vld [vmem:[#allocation3 + $0x1478] sm:$0xff]
    %v702 = vld [vmem:[#allocation3 + $0x1480] sm:$0xff]
    %v703 = vld [vmem:[#allocation3 + $0x1488] sm:$0xff]
    %v704 = vld [vmem:[#allocation3 + $0x1490] sm:$0xff]
    %v705 = vld [vmem:[#allocation3 + $0x1498] sm:$0xff]
    %v706 = vld [vmem:[#allocation3 + $0x14a0] sm:$0xff]
    %v707 = vld [vmem:[#allocation3 + $0x14a8] sm:$0xff]
    %v708 = vld [vmem:[#allocation3 + $0x14b0] sm:$0xff]
    %v709 = vld [vmem:[#allocation3 + $0x14b8] sm:$0xff]
    %v710 = vld [vmem:[#allocation3 + $0x14c0] sm:$0xff]
    %v711 = vld [vmem:[#allocation3 + $0x14c8] sm:$0xff]
    %v712 = vld [vmem:[#allocation3 + $0x14d0] sm:$0xff]
    %v713 = vld [vmem:[#allocation3 + $0x14d8] sm:$0xff]
    %v714 = vld [vmem:[#allocation3 + $0x14e0] sm:$0xff]
    %v715 = vld [vmem:[#allocation3 + $0x14e8] sm:$0xff]
    %v716 = vld [vmem:[#allocation3 + $0x14f0] sm:$0xff]
    %v717 = vld [vmem:[#allocation3 + $0x14f8] sm:$0xff]
    %v718 = vld [vmem:[#allocation3 + $0x1500] sm:$0xff]
    %v719 = vld [vmem:[#allocation3 + $0x1508] sm:$0xff]
    %v720 = vld [vmem:[#allocation3 + $0x1510] sm:$0xff]
    %v721 = vld [vmem:[#allocation3 + $0x1518] sm:$0xff]
    %v722 = vld [vmem:[#allocation3 + $0x1520] sm:$0xff]
    %v723 = vld [vmem:[#allocation3 + $0x1528] sm:$0xff]
    %v724 = vld [vmem:[#allocation3 + $0x1530] sm:$0xff]
    %v725 = vld [vmem:[#allocation3 + $0x1538] sm:$0xff]
    %v726 = vld [vmem:[#allocation3 + $0x1540] sm:$0xff]
    %v727 = vld [vmem:[#allocation3 + $0x1548] sm:$0xff]
    %v728 = vld [vmem:[#allocation3 + $0x1550] sm:$0xff]
    %v729 = vld [vmem:[#allocation3 + $0x1558] sm:$0xff]
    %v730 = vld [vmem:[#allocation3 + $0x1560] sm:$0xff]
    %v731 = vld [vmem:[#allocation3 + $0x1568] sm:$0xff]
    %v732 = vld [vmem:[#allocation3 + $0x1570] sm:$0xff]
    %v733 = vld [vmem:[#allocation3 + $0x1578] sm:$0xff]
    %v734 = vld [vmem:[#allocation3 + $0x1580] sm:$0xff]
    %v735 = vld [vmem:[#allocation3 + $0x1588] sm:$0xff]
    %v736 = vld [vmem:[#allocation3 + $0x1590] sm:$0xff]
    %v737 = vld [vmem:[#allocation3 + $0x1598] sm:$0xff]
    %v738 = vld [vmem:[#allocation3 + $0x15a0] sm:$0xff]
    %v739 = vld [vmem:[#allocation3 + $0x15a8] sm:$0xff]
    %v740 = vld [vmem:[#allocation3 + $0x15b0] sm:$0xff]
    %v741 = vld [vmem:[#allocation3 + $0x15b8] sm:$0xff]
    %v742 = vld [vmem:[#allocation3 + $0x15c0] sm:$0xff]
    %v743 = vld [vmem:[#allocation3 + $0x15c8] sm:$0xff]
    %v744 = vld [vmem:[#allocation3 + $0x15d0] sm:$0xff]
    %v745 = vld [vmem:[#allocation3 + $0x15d8] sm:$0xff]
    %v746 = vld [vmem:[#allocation3 + $0x15e0] sm:$0xff]
    %v747 = vld [vmem:[#allocation3 + $0x15e8] sm:$0xff]
    %v748 = vld [vmem:[#allocation3 + $0x15f0] sm:$0xff]
    %v749 = vld [vmem:[#allocation3 + $0x15f8] sm:$0xff]
    %v750 = vld [vmem:[#allocation3 + $0x1600] sm:$0xff]
    %v751 = vld [vmem:[#allocation3 + $0x1608] sm:$0xff]
    %v752 = vld [vmem:[#allocation3 + $0x1610] sm:$0xff]
    %v753 = vld [vmem:[#allocation3 + $0x1618] sm:$0xff]
    %v754 = vld [vmem:[#allocation3 + $0x1620] sm:$0xff]
    %v755 = vld [vmem:[#allocation3 + $0x1628] sm:$0xff]
    %v756 = vld [vmem:[#allocation3 + $0x1630] sm:$0xff]
    %v757 = vld [vmem:[#allocation3 + $0x1638] sm:$0xff]
    %v758 = vld [vmem:[#allocation3 + $0x1640] sm:$0xff]
    %v759 = vld [vmem:[#allocation3 + $0x1648] sm:$0xff]
    %v760 = vld [vmem:[#allocation3 + $0x1650] sm:$0xff]
    %v761 = vld [vmem:[#allocation3 + $0x1658] sm:$0xff]
    %v762 = vld [vmem:[#allocation3 + $0x1660] sm:$0xff]
    %v763 = vld [vmem:[#allocation3 + $0x1668] sm:$0xff]
    %v764 = vld [vmem:[#allocation3 + $0x1670] sm:$0xff]
    %v765 = vld [vmem:[#allocation3 + $0x1678] sm:$0xff]
    %v766 = vld [vmem:[#allocation3 + $0x1680] sm:$0xff]
    %v767 = vld [vmem:[#allocation3 + $0x1688] sm:$0xff]
    %v768 = vld [vmem:[#allocation3 + $0x1690] sm:$0xff]
    %v769 = vld [vmem:[#allocation3 + $0x1698] sm:$0xff]
    %v770 = vld [vmem:[#allocation3 + $0x16a0] sm:$0xff]
    %v771 = vld [vmem:[#allocation3 + $0x16a8] sm:$0xff]
    %v772 = vld [vmem:[#allocation3 + $0x16b0] sm:$0xff]
    %v773 = vld [vmem:[#allocation3 + $0x16b8] sm:$0xff]
    %v774 = vld [vmem:[#allocation3 + $0x16c0] sm:$0xff]
    %v775 = vld [vmem:[#allocation3 + $0x16c8] sm:$0xff]
    %v776 = vld [vmem:[#allocation3 + $0x16d0] sm:$0xff]
    %v777 = vld [vmem:[#allocation3 + $0x16d8] sm:$0xff]
    %v778 = vld [vmem:[#allocation3 + $0x16e0] sm:$0xff]
    %v779 = vld [vmem:[#allocation3 + $0x16e8] sm:$0xff]
    %v780 = vld [vmem:[#allocation3 + $0x16f0] sm:$0xff]
    %v781 = vld [vmem:[#allocation3 + $0x16f8] sm:$0xff]
    %v782 = vld [vmem:[#allocation3 + $0x1700] sm:$0xff]
    %v783 = vld [vmem:[#allocation3 + $0x1708] sm:$0xff]
    %v784 = vld [vmem:[#allocation3 + $0x1710] sm:$0xff]
    %v785 = vld [vmem:[#allocation3 + $0x1718] sm:$0xff]
    %v786 = vld [vmem:[#allocation3 + $0x1720] sm:$0xff]
    %v787 = vld [vmem:[#allocation3 + $0x1728] sm:$0xff]
    %v788 = vld [vmem:[#allocation3 + $0x1730] sm:$0xff]
    %v789 = vld [vmem:[#allocation3 + $0x1738] sm:$0xff]
    %v790 = vld [vmem:[#allocation3 + $0x1740] sm:$0xff]
    %v791 = vld [vmem:[#allocation3 + $0x1748] sm:$0xff]
    %v792 = vld [vmem:[#allocation3 + $0x1750] sm:$0xff]
    %v793 = vld [vmem:[#allocation3 + $0x1758] sm:$0xff]
    %v794 = vld [vmem:[#allocation3 + $0x1760] sm:$0xff]
    %v795 = vld [vmem:[#allocation3 + $0x1768] sm:$0xff]
    %v796 = vld [vmem:[#allocation3 + $0x1770] sm:$0xff]
    %v797 = vld [vmem:[#allocation3 + $0x1778] sm:$0xff]
    %v798 = vld [vmem:[#allocation3 + $0x1780] sm:$0xff]
    %v799 = vld [vmem:[#allocation3 + $0x1788] sm:$0xff]
    %v800 = vld [vmem:[#allocation3 + $0x1790] sm:$0xff]
    %v801 = vld [vmem:[#allocation3 + $0x1798] sm:$0xff]
    %v802 = vld [vmem:[#allocation3 + $0x17a0] sm:$0xff]
    %v803 = vld [vmem:[#allocation3 + $0x17a8] sm:$0xff]
    %v804 = vld [vmem:[#allocation3 + $0x17b0] sm:$0xff]
    %v805 = vld [vmem:[#allocation3 + $0x17b8] sm:$0xff]
    %v806 = vld [vmem:[#allocation3 + $0x17c0] sm:$0xff]
    %v807 = vld [vmem:[#allocation3 + $0x17c8] sm:$0xff]
    %v808 = vld [vmem:[#allocation3 + $0x17d0] sm:$0xff]
    %v809 = vld [vmem:[#allocation3 + $0x17d8] sm:$0xff]
    %v810 = vld [vmem:[#allocation3 + $0x17e0] sm:$0xff]
    %v811 = vld [vmem:[#allocation3 + $0x17e8] sm:$0xff]
    %v812 = vld [vmem:[#allocation3 + $0x17f0] sm:$0xff]
    %v813 = vld [vmem:[#allocation3 + $0x17f8] sm:$0xff]
    %v814 = vld [vmem:[#allocation3 + $0x1800] sm:$0xff]
    %v815 = vld [vmem:[#allocation3 + $0x1808] sm:$0xff]
    %v816 = vld [vmem:[#allocation3 + $0x1810] sm:$0xff]
    %v817 = vld [vmem:[#allocation3 + $0x1818] sm:$0xff]
    %v818 = vld [vmem:[#allocation3 + $0x1820] sm:$0xff]
    %v819 = vld [vmem:[#allocation3 + $0x1828] sm:$0xff]
    %v820 = vld [vmem:[#allocation3 + $0x1830] sm:$0xff]
    %v821 = vld [vmem:[#allocation3 + $0x1838] sm:$0xff]
    %v822 = vld [vmem:[#allocation3 + $0x1840] sm:$0xff]
    %v823 = vld [vmem:[#allocation3 + $0x1848] sm:$0xff]
    %v824 = vld [vmem:[#allocation3 + $0x1850] sm:$0xff]
    %v825 = vld [vmem:[#allocation3 + $0x1858] sm:$0xff]
    %v826 = vld [vmem:[#allocation3 + $0x1860] sm:$0xff]
    %v827 = vld [vmem:[#allocation3 + $0x1868] sm:$0xff]
    %v828 = vld [vmem:[#allocation3 + $0x1870] sm:$0xff]
    %v829 = vld [vmem:[#allocation3 + $0x1878] sm:$0xff]
    %v830 = vld [vmem:[#allocation3 + $0x1880] sm:$0xff]
    %v831 = vld [vmem:[#allocation3 + $0x1888] sm:$0xff]
    %v832 = vld [vmem:[#allocation3 + $0x1890] sm:$0xff]
    %v833 = vld [vmem:[#allocation3 + $0x1898] sm:$0xff]
    %v834 = vld [vmem:[#allocation3 + $0x18a0] sm:$0xff]
    %v835 = vld [vmem:[#allocation3 + $0x18a8] sm:$0xff]
    %v836 = vld [vmem:[#allocation3 + $0x18b0] sm:$0xff]
    %v837 = vld [vmem:[#allocation3 + $0x18b8] sm:$0xff]
    %v838 = vld [vmem:[#allocation3 + $0x18c0] sm:$0xff]
    %v839 = vld [vmem:[#allocation3 + $0x18c8] sm:$0xff]
    %v840 = vld [vmem:[#allocation3 + $0x18d0] sm:$0xff]
    %v841 = vld [vmem:[#allocation3 + $0x18d8] sm:$0xff]
    %v842 = vld [vmem:[#allocation3 + $0x18e0] sm:$0xff]
    %v843 = vld [vmem:[#allocation3 + $0x18e8] sm:$0xff]
    %v844 = vld [vmem:[#allocation3 + $0x18f0] sm:$0xff]
    %v845 = vld [vmem:[#allocation3 + $0x18f8] sm:$0xff]
    %v846 = vld [vmem:[#allocation3 + $0x1900] sm:$0xff]
    %v847 = vld [vmem:[#allocation3 + $0x1908] sm:$0xff]
    %v848 = vld [vmem:[#allocation3 + $0x1910] sm:$0xff]
    %v849 = vld [vmem:[#allocation3 + $0x1918] sm:$0xff]
    %v850 = vld [vmem:[#allocation3 + $0x1920] sm:$0xff]
    %v851 = vld [vmem:[#allocation3 + $0x1928] sm:$0xff]
    %v852 = vld [vmem:[#allocation3 + $0x1930] sm:$0xff]
    %v853 = vld [vmem:[#allocation3 + $0x1938] sm:$0xff]
    %v854 = vld [vmem:[#allocation3 + $0x1940] sm:$0xff]
    %v855 = vld [vmem:[#allocation3 + $0x1948] sm:$0xff]
    %v856 = vld [vmem:[#allocation3 + $0x1950] sm:$0xff]
    %v857 = vld [vmem:[#allocation3 + $0x1958] sm:$0xff]
    %v858 = vld [vmem:[#allocation3 + $0x1960] sm:$0xff]
    %v859 = vld [vmem:[#allocation3 + $0x1968] sm:$0xff]
    %v860 = vld [vmem:[#allocation3 + $0x1970] sm:$0xff]
    %v861 = vld [vmem:[#allocation3 + $0x1978] sm:$0xff]
    %v862 = vld [vmem:[#allocation3 + $0x1980] sm:$0xff]
    %v863 = vld [vmem:[#allocation3 + $0x1988] sm:$0xff]
    %v864 = vld [vmem:[#allocation3 + $0x1990] sm:$0xff]
    %v865 = vld [vmem:[#allocation3 + $0x1998] sm:$0xff]
    %v866 = vld [vmem:[#allocation3 + $0x19a0] sm:$0xff]
    %v867 = vld [vmem:[#allocation3 + $0x19a8] sm:$0xff]
    %v868 = vld [vmem:[#allocation3 + $0x19b0] sm:$0xff]
    %v869 = vld [vmem:[#allocation3 + $0x19b8] sm:$0xff]
    %v870 = vld [vmem:[#allocation3 + $0x19c0] sm:$0xff]
    %v871 = vld [vmem:[#allocation3 + $0x19c8] sm:$0xff]
    %v872 = vld [vmem:[#allocation3 + $0x19d0] sm:$0xff]
    %v873 = vld [vmem:[#allocation3 + $0x19d8] sm:$0xff]
    %v874 = vld [vmem:[#allocation3 + $0x19e0] sm:$0xff]
    %v875 = vld [vmem:[#allocation3 + $0x19e8] sm:$0xff]
    %v876 = vld [vmem:[#allocation3 + $0x19f0] sm:$0xff]
    %v877 = vld [vmem:[#allocation3 + $0x19f8] sm:$0xff]
    %v878 = vld [vmem:[#allocation3 + $0x1a00] sm:$0xff]
    %v879 = vld [vmem:[#allocation3 + $0x1a08] sm:$0xff]
    %v880 = vld [vmem:[#allocation3 + $0x1a10] sm:$0xff]
    %v881 = vld [vmem:[#allocation3 + $0x1a18] sm:$0xff]
    %v882 = vld [vmem:[#allocation3 + $0x1a20] sm:$0xff]
    %v883 = vld [vmem:[#allocation3 + $0x1a28] sm:$0xff]
    %v884 = vld [vmem:[#allocation3 + $0x1a30] sm:$0xff]
    %v885 = vld [vmem:[#allocation3 + $0x1a38] sm:$0xff]
    %v886 = vld [vmem:[#allocation3 + $0x1a40] sm:$0xff]
    %v887 = vld [vmem:[#allocation3 + $0x1a48] sm:$0xff]
    %v888 = vld [vmem:[#allocation3 + $0x1a50] sm:$0xff]
    %v889 = vld [vmem:[#allocation3 + $0x1a58] sm:$0xff]
    %v890 = vld [vmem:[#allocation3 + $0x1a60] sm:$0xff]
    %v891 = vld [vmem:[#allocation3 + $0x1a68] sm:$0xff]
    %v892 = vld [vmem:[#allocation3 + $0x1a70] sm:$0xff]
    %v893 = vld [vmem:[#allocation3 + $0x1a78] sm:$0xff]
    %v894 = vld [vmem:[#allocation3 + $0x1a80] sm:$0xff]
    %v895 = vld [vmem:[#allocation3 + $0x1a88] sm:$0xff]
    %v896 = vld [vmem:[#allocation3 + $0x1a90] sm:$0xff]
    %v897 = vld [vmem:[#allocation3 + $0x1a98] sm:$0xff]
    %v898 = vld [vmem:[#allocation3 + $0x1aa0] sm:$0xff]
    %v899 = vld [vmem:[#allocation3 + $0x1aa8] sm:$0xff]
    %v900 = vld [vmem:[#allocation3 + $0x1ab0] sm:$0xff]
    %v901 = vld [vmem:[#allocation3 + $0x1ab8] sm:$0xff]
    %v902 = vld [vmem:[#allocation3 + $0x1ac0] sm:$0xff]
    %v903 = vld [vmem:[#allocation3 + $0x1ac8] sm:$0xff]
    %v904 = vld [vmem:[#allocation3 + $0x1ad0] sm:$0xff]
    %v905 = vld [vmem:[#allocation3 + $0x1ad8] sm:$0xff]
    %v906 = vld [vmem:[#allocation3 + $0x1ae0] sm:$0xff]
    %v907 = vld [vmem:[#allocation3 + $0x1ae8] sm:$0xff]
    %v908 = vld [vmem:[#allocation3 + $0x1af0] sm:$0xff]
    %v909 = vld [vmem:[#allocation3 + $0x1af8] sm:$0xff]
    %v910 = vld [vmem:[#allocation3 + $0x1b00] sm:$0xff]
    %v911 = vld [vmem:[#allocation3 + $0x1b08] sm:$0xff]
    %v912 = vld [vmem:[#allocation3 + $0x1b10] sm:$0xff]
    %v913 = vld [vmem:[#allocation3 + $0x1b18] sm:$0xff]
    %v914 = vld [vmem:[#allocation3 + $0x1b20] sm:$0xff]
    %v915 = vld [vmem:[#allocation3 + $0x1b28] sm:$0xff]
    %v916 = vld [vmem:[#allocation3 + $0x1b30] sm:$0xff]
    %v917 = vld [vmem:[#allocation3 + $0x1b38] sm:$0xff]
    %v918 = vld [vmem:[#allocation3 + $0x1b40] sm:$0xff]
    %v919 = vld [vmem:[#allocation3 + $0x1b48] sm:$0xff]
    %v920 = vld [vmem:[#allocation3 + $0x1b50] sm:$0xff]
    %v921 = vld [vmem:[#allocation3 + $0x1b58] sm:$0xff]
    %v922 = vld [vmem:[#allocation3 + $0x1b60] sm:$0xff]
    %v923 = vld [vmem:[#allocation3 + $0x1b68] sm:$0xff]
    %v924 = vld [vmem:[#allocation3 + $0x1b70] sm:$0xff]
    %v925 = vld [vmem:[#allocation3 + $0x1b78] sm:$0xff]
    %v926 = vld [vmem:[#allocation3 + $0x1b80] sm:$0xff]
    %v927 = vld [vmem:[#allocation3 + $0x1b88] sm:$0xff]
    %v928 = vld [vmem:[#allocation3 + $0x1b90] sm:$0xff]
    %v929 = vld [vmem:[#allocation3 + $0x1b98] sm:$0xff]
    %v930 = vld [vmem:[#allocation3 + $0x1ba0] sm:$0xff]
    %v931 = vld [vmem:[#allocation3 + $0x1ba8] sm:$0xff]
    %v932 = vld [vmem:[#allocation3 + $0x1bb0] sm:$0xff]
    %v933 = vld [vmem:[#allocation3 + $0x1bb8] sm:$0xff]
    %v934 = vld [vmem:[#allocation3 + $0x1bc0] sm:$0xff]
    %v935 = vld [vmem:[#allocation3 + $0x1bc8] sm:$0xff]
    %v936 = vld [vmem:[#allocation3 + $0x1bd0] sm:$0xff]
    %v937 = vld [vmem:[#allocation3 + $0x1bd8] sm:$0xff]
    %v938 = vld [vmem:[#allocation3 + $0x1be0] sm:$0xff]
    %v939 = vld [vmem:[#allocation3 + $0x1be8] sm:$0xff]
    %v940 = vld [vmem:[#allocation3 + $0x1bf0] sm:$0xff]
    %v941 = vld [vmem:[#allocation3 + $0x1bf8] sm:$0xff]
    %v942 = vld [vmem:[#allocation3 + $0x1c00] sm:$0xff]
    %v943 = vld [vmem:[#allocation3 + $0x1c08] sm:$0xff]
    %v944 = vld [vmem:[#allocation3 + $0x1c10] sm:$0xff]
    %v945 = vld [vmem:[#allocation3 + $0x1c18] sm:$0xff]
    %v946 = vld [vmem:[#allocation3 + $0x1c20] sm:$0xff]
    %v947 = vld [vmem:[#allocation3 + $0x1c28] sm:$0xff]
    %v948 = vld [vmem:[#allocation3 + $0x1c30] sm:$0xff]
    %v949 = vld [vmem:[#allocation3 + $0x1c38] sm:$0xff]
    %v950 = vld [vmem:[#allocation3 + $0x1c40] sm:$0xff]
    %v951 = vld [vmem:[#allocation3 + $0x1c48] sm:$0xff]
    %v952 = vld [vmem:[#allocation3 + $0x1c50] sm:$0xff]
    %v953 = vld [vmem:[#allocation3 + $0x1c58] sm:$0xff]
    %v954 = vld [vmem:[#allocation3 + $0x1c60] sm:$0xff]
    %v955 = vld [vmem:[#allocation3 + $0x1c68] sm:$0xff]
    %v956 = vld [vmem:[#allocation3 + $0x1c70] sm:$0xff]
    %v957 = vld [vmem:[#allocation3 + $0x1c78] sm:$0xff]
    %v958 = vld [vmem:[#allocation3 + $0x1c80] sm:$0xff]
    %v959 = vld [vmem:[#allocation3 + $0x1c88] sm:$0xff]
    %v960 = vld [vmem:[#allocation3 + $0x1c90] sm:$0xff]
    %v961 = vld [vmem:[#allocation3 + $0x1c98] sm:$0xff]
    %v962 = vld [vmem:[#allocation3 + $0x1ca0] sm:$0xff]
    %v963 = vld [vmem:[#allocation3 + $0x1ca8] sm:$0xff]
    %v964 = vld [vmem:[#allocation3 + $0x1cb0] sm:$0xff]
    %v965 = vld [vmem:[#allocation3 + $0x1cb8] sm:$0xff]
    %v966 = vld [vmem:[#allocation3 + $0x1cc0] sm:$0xff]
    %v967 = vld [vmem:[#allocation3 + $0x1cc8] sm:$0xff]
    %v968 = vld [vmem:[#allocation3 + $0x1cd0] sm:$0xff]
    %v969 = vld [vmem:[#allocation3 + $0x1cd8] sm:$0xff]
    %v970 = vld [vmem:[#allocation3 + $0x1ce0] sm:$0xff]
    %v971 = vld [vmem:[#allocation3 + $0x1ce8] sm:$0xff]
    %v972 = vld [vmem:[#allocation3 + $0x1cf0] sm:$0xff]
    %v973 = vld [vmem:[#allocation3 + $0x1cf8] sm:$0xff]
    %v974 = vld [vmem:[#allocation3 + $0x1d00] sm:$0xff]
    %v975 = vld [vmem:[#allocation3 + $0x1d08] sm:$0xff]
    %v976 = vld [vmem:[#allocation3 + $0x1d10] sm:$0xff]
    %v977 = vld [vmem:[#allocation3 + $0x1d18] sm:$0xff]
    %v978 = vld [vmem:[#allocation3 + $0x1d20] sm:$0xff]
    %v979 = vld [vmem:[#allocation3 + $0x1d28] sm:$0xff]
    %v980 = vld [vmem:[#allocation3 + $0x1d30] sm:$0xff]
    %v981 = vld [vmem:[#allocation3 + $0x1d38] sm:$0xff]
    %v982 = vld [vmem:[#allocation3 + $0x1d40] sm:$0xff]
    %v983 = vld [vmem:[#allocation3 + $0x1d48] sm:$0xff]
    %v984 = vld [vmem:[#allocation3 + $0x1d50] sm:$0xff]
    %v985 = vld [vmem:[#allocation3 + $0x1d58] sm:$0xff]
    %v986 = vld [vmem:[#allocation3 + $0x1d60] sm:$0xff]
    %v987 = vld [vmem:[#allocation3 + $0x1d68] sm:$0xff]
    %v988 = vld [vmem:[#allocation3 + $0x1d70] sm:$0xff]
    %v989 = vld [vmem:[#allocation3 + $0x1d78] sm:$0xff]
    %v990 = vld [vmem:[#allocation3 + $0x1d80] sm:$0xff]
    %v991 = vld [vmem:[#allocation3 + $0x1d88] sm:$0xff]
    %v992 = vld [vmem:[#allocation3 + $0x1d90] sm:$0xff]
    %v993 = vld [vmem:[#allocation3 + $0x1d98] sm:$0xff]
    %v994 = vld [vmem:[#allocation3 + $0x1da0] sm:$0xff]
    %v995 = vld [vmem:[#allocation3 + $0x1da8] sm:$0xff]
    %v996 = vld [vmem:[#allocation3 + $0x1db0] sm:$0xff]
    %v997 = vld [vmem:[#allocation3 + $0x1db8] sm:$0xff]
    %v998 = vld [vmem:[#allocation3 + $0x1dc0] sm:$0xff]
    %v999 = vld [vmem:[#allocation3 + $0x1dc8] sm:$0xff]
    %v1000 = vld [vmem:[#allocation3 + $0x1dd0] sm:$0xff]
    %v1001 = vld [vmem:[#allocation3 + $0x1dd8] sm:$0xff]
    %v1002 = vld [vmem:[#allocation3 + $0x1de0] sm:$0xff]
    %v1003 = vld [vmem:[#allocation3 + $0x1de8] sm:$0xff]
    %v1004 = vld [vmem:[#allocation3 + $0x1df0] sm:$0xff]
    %v1005 = vld [vmem:[#allocation3 + $0x1df8] sm:$0xff]
    %v1006 = vld [vmem:[#allocation3 + $0x1e00] sm:$0xff]
    %v1007 = vld [vmem:[#allocation3 + $0x1e08] sm:$0xff]
    %v1008 = vld [vmem:[#allocation3 + $0x1e10] sm:$0xff]
    %v1009 = vld [vmem:[#allocation3 + $0x1e18] sm:$0xff]
    %v1010 = vld [vmem:[#allocation3 + $0x1e20] sm:$0xff]
    %v1011 = vld [vmem:[#allocation3 + $0x1e28] sm:$0xff]
    %v1012 = vld [vmem:[#allocation3 + $0x1e30] sm:$0xff]
    %v1013 = vld [vmem:[#allocation3 + $0x1e38] sm:$0xff]
    %v1014 = vld [vmem:[#allocation3 + $0x1e40] sm:$0xff]
    %v1015 = vld [vmem:[#allocation3 + $0x1e48] sm:$0xff]
    %v1016 = vld [vmem:[#allocation3 + $0x1e50] sm:$0xff]
    %v1017 = vld [vmem:[#allocation3 + $0x1e58] sm:$0xff]
    %v1018 = vld [vmem:[#allocation3 + $0x1e60] sm:$0xff]
    %v1019 = vld [vmem:[#allocation3 + $0x1e68] sm:$0xff]
    %v1020 = vld [vmem:[#allocation3 + $0x1e70] sm:$0xff]
    %v1021 = vld [vmem:[#allocation3 + $0x1e78] sm:$0xff]
    %v1022 = vld [vmem:[#allocation3 + $0x1e80] sm:$0xff]
    %v1023 = vld [vmem:[#allocation3 + $0x1e88] sm:$0xff]
    %v1024 = vld [vmem:[#allocation3 + $0x1e90] sm:$0xff]
    %v1025 = vld [vmem:[#allocation3 + $0x1e98] sm:$0xff]
    %v1026 = vld [vmem:[#allocation3 + $0x1ea0] sm:$0xff]
    %v1027 = vld [vmem:[#allocation3 + $0x1ea8] sm:$0xff]
    %v1028 = vld [vmem:[#allocation3 + $0x1eb0] sm:$0xff]
    %v1029 = vld [vmem:[#allocation3 + $0x1eb8] sm:$0xff]
    %v1030 = vld [vmem:[#allocation3 + $0x1ec0] sm:$0xff]
    %v1031 = vld [vmem:[#allocation3 + $0x1ec8] sm:$0xff]
    %v1032 = vld [vmem:[#allocation3 + $0x1ed0] sm:$0xff]
    %v1033 = vld [vmem:[#allocation3 + $0x1ed8] sm:$0xff]
    %v1034 = vld [vmem:[#allocation3 + $0x1ee0] sm:$0xff]
    %v1035 = vld [vmem:[#allocation3 + $0x1ee8] sm:$0xff]
    %v1036 = vld [vmem:[#allocation3 + $0x1ef0] sm:$0xff]
    %v1037 = vld [vmem:[#allocation3 + $0x1ef8] sm:$0xff]
    %v1038 = vld [vmem:[#allocation3 + $0x1f00] sm:$0xff]
    %v1039 = vld [vmem:[#allocation3 + $0x1f08] sm:$0xff]
    %v1040 = vld [vmem:[#allocation3 + $0x1f10] sm:$0xff]
    %v1041 = vld [vmem:[#allocation3 + $0x1f18] sm:$0xff]
    %v1042 = vld [vmem:[#allocation3 + $0x1f20] sm:$0xff]
    %v1043 = vld [vmem:[#allocation3 + $0x1f28] sm:$0xff]
    %v1044 = vld [vmem:[#allocation3 + $0x1f30] sm:$0xff]
    %v1045 = vld [vmem:[#allocation3 + $0x1f38] sm:$0xff]
    %v1046 = vld [vmem:[#allocation3 + $0x1f40] sm:$0xff]
    %v1047 = vld [vmem:[#allocation3 + $0x1f48] sm:$0xff]
    %v1048 = vld [vmem:[#allocation3 + $0x1f50] sm:$0xff]
    %v1049 = vld [vmem:[#allocation3 + $0x1f58] sm:$0xff]
    %v1050 = vld [vmem:[#allocation3 + $0x1f60] sm:$0xff]
    %v1051 = vld [vmem:[#allocation3 + $0x1f68] sm:$0xff]
    %v1052 = vld [vmem:[#allocation3 + $0x1f70] sm:$0xff]
    %v1053 = vld [vmem:[#allocation3 + $0x1f78] sm:$0xff]
    %v1054 = vld [vmem:[#allocation3 + $0x1f80] sm:$0xff]
    %v1055 = vld [vmem:[#allocation3 + $0x1f88] sm:$0xff]
    %v1056 = vld [vmem:[#allocation3 + $0x1f90] sm:$0xff]
    %v1057 = vld [vmem:[#allocation3 + $0x1f98] sm:$0xff]
    %v1058 = vld [vmem:[#allocation3 + $0x1fa0] sm:$0xff]
    %v1059 = vld [vmem:[#allocation3 + $0x1fa8] sm:$0xff]
    %v1060 = vld [vmem:[#allocation3 + $0x1fb0] sm:$0xff]
    %v1061 = vld [vmem:[#allocation3 + $0x1fb8] sm:$0xff]
    %v1062 = vld [vmem:[#allocation3 + $0x1fc0] sm:$0xff]
    %v1063 = vld [vmem:[#allocation3 + $0x1fc8] sm:$0xff]
    %v1064 = vld [vmem:[#allocation3 + $0x1fd0] sm:$0xff]
    %v1065 = vld [vmem:[#allocation3 + $0x1fd8] sm:$0xff]
    %v1066 = vld [vmem:[#allocation3 + $0x1fe0] sm:$0xff]
    %v1067 = vld [vmem:[#allocation3 + $0x1fe8] sm:$0xff]
    %v1068 = vld [vmem:[#allocation3 + $0x1ff0] sm:$0xff]
    %v1069 = vld [vmem:[#allocation3 + $0x1ff8] sm:$0xff]
    %v1070 = vld [vmem:[%s2] sm:$0x3]
    %v1072 = vperm.slane %v1070, 0
    %v1073 = vperm.slane %v1070, 1
    %1084 = vst [vmem:[#allocation1] ss:$4 sm:$0xff] %v38
    %s1085 = scalar_lea.vmem [#allocation1], 32
    %1086 = vst [vmem:[%s1085] ss:$4 sm:$0xff] %v39
    %v1087 = vld.sshfl [vmem:[#allocation1] sm:$0xff pattern:$0x73625140]
    %v1088 = vld.sshfl [vmem:[#allocation1 + $0x8] sm:$0xff pattern:$0x73625140]
    %v1089 = vld.sshfl [vmem:[#allocation1 + $0x10] sm:$0xff pattern:$0x73625140]
    %v1090 = vld.sshfl [vmem:[#allocation1 + $0x18] sm:$0xff pattern:$0x73625140]
    %v1091 = vld.sshfl [vmem:[#allocation1 + $0x20] sm:$0xff pattern:$0x73625140]
    %v1092 = vld.sshfl [vmem:[#allocation1 + $0x28] sm:$0xff pattern:$0x73625140]
    %v1093 = vld.sshfl [vmem:[#allocation1 + $0x30] sm:$0xff pattern:$0x73625140]
    %v1094 = vld.sshfl [vmem:[#allocation1 + $0x38] sm:$0xff pattern:$0x73625140]
    %1095 = vst [vmem:[#allocation1] ss:$4 sm:$0xff] %v40
    %1096 = vst [vmem:[%s1085] ss:$4 sm:$0xff] %v41
    %v1097 = vld.sshfl [vmem:[#allocation1] sm:$0xff pattern:$0x73625140]
    %v1098 = vld.sshfl [vmem:[#allocation1 + $0x8] sm:$0xff pattern:$0x73625140]
    %v1099 = vld.sshfl [vmem:[#allocation1 + $0x10] sm:$0xff pattern:$0x73625140]
    %v1100 = vld.sshfl [vmem:[#allocation1 + $0x18] sm:$0xff pattern:$0x73625140]
    %v1101 = vld.sshfl [vmem:[#allocation1 + $0x20] sm:$0xff pattern:$0x73625140]
    %v1102 = vld.sshfl [vmem:[#allocation1 + $0x28] sm:$0xff pattern:$0x73625140]
    %v1103 = vld.sshfl [vmem:[#allocation1 + $0x30] sm:$0xff pattern:$0x73625140]
    %v1104 = vld.sshfl [vmem:[#allocation1 + $0x38] sm:$0xff pattern:$0x73625140]
    %1105 = vst [vmem:[#allocation1] ss:$4 sm:$0xff] %v42
    %1106 = vst [vmem:[%s1085] ss:$4 sm:$0xff] %v43
    %v1107 = vld.sshfl [vmem:[#allocation1] sm:$0xff pattern:$0x73625140]
    %v1108 = vld.sshfl [vmem:[#allocation1 + $0x8] sm:$0xff pattern:$0x73625140]
    %v1109 = vld.sshfl [vmem:[#allocation1 + $0x10] sm:$0xff pattern:$0x73625140]
    %v1110 = vld.sshfl [vmem:[#allocation1 + $0x18] sm:$0xff pattern:$0x73625140]
    %v1111 = vld.sshfl [vmem:[#allocation1 + $0x20] sm:$0xff pattern:$0x73625140]
    %v1112 = vld.sshfl [vmem:[#allocation1 + $0x28] sm:$0xff pattern:$0x73625140]
    %v1113 = vld.sshfl [vmem:[#allocation1 + $0x30] sm:$0xff pattern:$0x73625140]
    %v1114 = vld.sshfl [vmem:[#allocation1 + $0x38] sm:$0xff pattern:$0x73625140]
    %1115 = vst [vmem:[#allocation1] ss:$4 sm:$0xff] %v44
    %1116 = vst [vmem:[%s1085] ss:$4 sm:$0xff] %v45
    %v1117 = vld.sshfl [vmem:[#allocation1] sm:$0xff pattern:$0x73625140]
    %v1118 = vld.sshfl [vmem:[#allocation1 + $0x8] sm:$0xff pattern:$0x73625140]
    %v1119 = vld.sshfl [vmem:[#allocation1 + $0x10] sm:$0xff pattern:$0x73625140]
    %v1120 = vld.sshfl [vmem:[#allocation1 + $0x18] sm:$0xff pattern:$0x73625140]
    %v1121 = vld.sshfl [vmem:[#allocation1 + $0x20] sm:$0xff pattern:$0x73625140]
    %v1122 = vld.sshfl [vmem:[#allocation1 + $0x28] sm:$0xff pattern:$0x73625140]
    %v1123 = vld.sshfl [vmem:[#allocation1 + $0x30] sm:$0xff pattern:$0x73625140]
    %v1124 = vld.sshfl [vmem:[#allocation1 + $0x38] sm:$0xff pattern:$0x73625140]
    %1157 = vmatpush.msra.mxu0 %v76
    %1158 = vmatpush.msra.mxu0 %v74
    %1159 = vmatpush.msra.mxu0 %v72
    %1160 = vmatpush.msra.mxu0 %v70
    %1161 = vmatpush.msra.mxu0 %v68
    %1162 = vmatpush.msra.mxu0 %v66
    %1163 = vmatpush.msra.mxu0 %v64
    %1164 = vmatpush.msra.mxu0 %v62
    %1165 = vmatpush.msra.mxu0 %v60
    %1166 = vmatpush.msra.mxu0 %v58
    %1167 = vmatpush.msra.mxu0 %v56
    %1168 = vmatpush.msra.mxu0 %v54
    %1169 = vmatpush.msra.mxu0 %v52
    %1170 = vmatpush.msra.mxu0 %v50
    %1171 = vmatpush.msra.mxu0 %v48
    %1172 = vmatpush.msra.mxu0 %v46
    %1173 = vmatmul.f32.gmra.mxu0 %v1087
    %v1174 = vpop.f32.mrf.mxu0
    %v1175 = vadd.f32 %v1072, %v1174
    %1176 = vdwg.mxu0
    %1177 = vmatpush.msra.mxu0 %v108
    %1178 = vmatpush.msra.mxu0 %v106
    %1179 = vmatpush.msra.mxu0 %v104
    %1180 = vmatpush.msra.mxu0 %v102
    %1181 = vmatpush.msra.mxu0 %v100
    %1182 = vmatpush.msra.mxu0 %v98
    %1183 = vmatpush.msra.mxu0 %v96
    %1184 = vmatpush.msra.mxu0 %v94
    %1185 = vmatpush.msra.mxu0 %v92
    %1186 = vmatpush.msra.mxu0 %v90
    %1187 = vmatpush.msra.mxu0 %v88
    %1188 = vmatpush.msra.mxu0 %v86
    %1189 = vmatpush.msra.mxu0 %v84
    %1190 = vmatpush.msra.mxu0 %v82
    %1191 = vmatpush.msra.mxu0 %v80
    %1192 = vmatpush.msra.mxu0 %v78
    %1193 = vmatmul.f32.gmra.mxu0 %v1088
    %v1194 = vpop.f32.mrf.mxu0
    %v1195 = vadd.f32 %v1175, %v1194
    %1196 = vdwg.mxu0
    %1197 = vmatpush.msra.mxu0 %v140
    %1198 = vmatpush.msra.mxu0 %v138
    %1199 = vmatpush.msra.mxu0 %v136
    %1200 = vmatpush.msra.mxu0 %v134
    %1201 = vmatpush.msra.mxu0 %v132
    %1202 = vmatpush.msra.mxu0 %v130
    %1203 = vmatpush.msra.mxu0 %v128
    %1204 = vmatpush.msra.mxu0 %v126
    %1205 = vmatpush.msra.mxu0 %v124
    %1206 = vmatpush.msra.mxu0 %v122
    %1207 = vmatpush.msra.mxu0 %v120
    %1208 = vmatpush.msra.mxu0 %v118
    %1209 = vmatpush.msra.mxu0 %v116
    %1210 = vmatpush.msra.mxu0 %v114
    %1211 = vmatpush.msra.mxu0 %v112
    %1212 = vmatpush.msra.mxu0 %v110
    %1213 = vmatmul.f32.gmra.mxu0 %v1089
    %v1214 = vpop.f32.mrf.mxu0
    %v1215 = vadd.f32 %v1195, %v1214
    %1216 = vdwg.mxu0
    %1217 = vmatpush.msra.mxu0 %v172
    %1218 = vmatpush.msra.mxu0 %v170
    %1219 = vmatpush.msra.mxu0 %v168
    %1220 = vmatpush.msra.mxu0 %v166
    %1221 = vmatpush.msra.mxu0 %v164
    %1222 = vmatpush.msra.mxu0 %v162
    %1223 = vmatpush.msra.mxu0 %v160
    %1224 = vmatpush.msra.mxu0 %v158
    %1225 = vmatpush.msra.mxu0 %v156
    %1226 = vmatpush.msra.mxu0 %v154
    %1227 = vmatpush.msra.mxu0 %v152
    %1228 = vmatpush.msra.mxu0 %v150
    %1229 = vmatpush.msra.mxu0 %v148
    %1230 = vmatpush.msra.mxu0 %v146
    %1231 = vmatpush.msra.mxu0 %v144
    %1232 = vmatpush.msra.mxu0 %v142
    %1233 = vmatmul.f32.gmra.mxu0 %v1090
    %v1234 = vpop.f32.mrf.mxu0
    %v1235 = vadd.f32 %v1215, %v1234
    %1236 = vdwg.mxu0
    %1237 = vmatpush.msra.mxu0 %v204
    %1238 = vmatpush.msra.mxu0 %v202
    %1239 = vmatpush.msra.mxu0 %v200
    %1240 = vmatpush.msra.mxu0 %v198
    %1241 = vmatpush.msra.mxu0 %v196
    %1242 = vmatpush.msra.mxu0 %v194
    %1243 = vmatpush.msra.mxu0 %v192
    %1244 = vmatpush.msra.mxu0 %v190
    %1245 = vmatpush.msra.mxu0 %v188
    %1246 = vmatpush.msra.mxu0 %v186
    %1247 = vmatpush.msra.mxu0 %v184
    %1248 = vmatpush.msra.mxu0 %v182
    %1249 = vmatpush.msra.mxu0 %v180
    %1250 = vmatpush.msra.mxu0 %v178
    %1251 = vmatpush.msra.mxu0 %v176
    %1252 = vmatpush.msra.mxu0 %v174
    %1253 = vmatmul.f32.gmra.mxu0 %v1091
    %v1254 = vpop.f32.mrf.mxu0
    %v1255 = vadd.f32 %v1235, %v1254
    %1256 = vdwg.mxu0
    %1257 = vmatpush.msra.mxu0 %v236
    %1258 = vmatpush.msra.mxu0 %v234
    %1259 = vmatpush.msra.mxu0 %v232
    %1260 = vmatpush.msra.mxu0 %v230
    %1261 = vmatpush.msra.mxu0 %v228
    %1262 = vmatpush.msra.mxu0 %v226
    %1263 = vmatpush.msra.mxu0 %v224
    %1264 = vmatpush.msra.mxu0 %v222
    %1265 = vmatpush.msra.mxu0 %v220
    %1266 = vmatpush.msra.mxu0 %v218
    %1267 = vmatpush.msra.mxu0 %v216
    %1268 = vmatpush.msra.mxu0 %v214
    %1269 = vmatpush.msra.mxu0 %v212
    %1270 = vmatpush.msra.mxu0 %v210
    %1271 = vmatpush.msra.mxu0 %v208
    %1272 = vmatpush.msra.mxu0 %v206
    %1273 = vmatmul.f32.gmra.mxu0 %v1092
    %v1274 = vpop.f32.mrf.mxu0
    %v1275 = vadd.f32 %v1255, %v1274
    %1276 = vdwg.mxu0
    %1277 = vmatpush.msra.mxu0 %v268
    %1278 = vmatpush.msra.mxu0 %v266
    %1279 = vmatpush.msra.mxu0 %v264
    %1280 = vmatpush.msra.mxu0 %v262
    %1281 = vmatpush.msra.mxu0 %v260
    %1282 = vmatpush.msra.mxu0 %v258
    %1283 = vmatpush.msra.mxu0 %v256
    %1284 = vmatpush.msra.mxu0 %v254
    %1285 = vmatpush.msra.mxu0 %v252
    %1286 = vmatpush.msra.mxu0 %v250
    %1287 = vmatpush.msra.mxu0 %v248
    %1288 = vmatpush.msra.mxu0 %v246
    %1289 = vmatpush.msra.mxu0 %v244
    %1290 = vmatpush.msra.mxu0 %v242
    %1291 = vmatpush.msra.mxu0 %v240
    %1292 = vmatpush.msra.mxu0 %v238
    %1293 = vmatmul.f32.gmra.mxu0 %v1093
    %v1294 = vpop.f32.mrf.mxu0
    %v1295 = vadd.f32 %v1275, %v1294
    %1296 = vdwg.mxu0
    %1297 = vmatpush.msra.mxu0 %v300
    %1298 = vmatpush.msra.mxu0 %v298
    %1299 = vmatpush.msra.mxu0 %v296
    %1300 = vmatpush.msra.mxu0 %v294
    %1301 = vmatpush.msra.mxu0 %v292
    %1302 = vmatpush.msra.mxu0 %v290
    %1303 = vmatpush.msra.mxu0 %v288
    %1304 = vmatpush.msra.mxu0 %v286
    %1305 = vmatpush.msra.mxu0 %v284
    %1306 = vmatpush.msra.mxu0 %v282
    %1307 = vmatpush.msra.mxu0 %v280
    %1308 = vmatpush.msra.mxu0 %v278
    %1309 = vmatpush.msra.mxu0 %v276
    %1310 = vmatpush.msra.mxu0 %v274
    %1311 = vmatpush.msra.mxu0 %v272
    %1312 = vmatpush.msra.mxu0 %v270
    %1313 = vmatmul.f32.gmra.mxu0 %v1094
    %v1314 = vpop.f32.mrf.mxu0
    %v1315 = vadd.f32 %v1295, %v1314
    %1316 = vdwg.mxu0
    %1317 = vmatpush.msra.mxu0 %v332
    %1318 = vmatpush.msra.mxu0 %v330
    %1319 = vmatpush.msra.mxu0 %v328
    %1320 = vmatpush.msra.mxu0 %v326
    %1321 = vmatpush.msra.mxu0 %v324
    %1322 = vmatpush.msra.mxu0 %v322
    %1323 = vmatpush.msra.mxu0 %v320
    %1324 = vmatpush.msra.mxu0 %v318
    %1325 = vmatpush.msra.mxu0 %v316
    %1326 = vmatpush.msra.mxu0 %v314
    %1327 = vmatpush.msra.mxu0 %v312
    %1328 = vmatpush.msra.mxu0 %v310
    %1329 = vmatpush.msra.mxu0 %v308
    %1330 = vmatpush.msra.mxu0 %v306
    %1331 = vmatpush.msra.mxu0 %v304
    %1332 = vmatpush.msra.mxu0 %v302
    %1333 = vmatmul.f32.gmra.mxu0 %v1097
    %v1334 = vpop.f32.mrf.mxu0
    %v1335 = vadd.f32 %v1315, %v1334
    %1336 = vdwg.mxu0
    %1337 = vmatpush.msra.mxu0 %v364
    %1338 = vmatpush.msra.mxu0 %v362
    %1339 = vmatpush.msra.mxu0 %v360
    %1340 = vmatpush.msra.mxu0 %v358
    %1341 = vmatpush.msra.mxu0 %v356
    %1342 = vmatpush.msra.mxu0 %v354
    %1343 = vmatpush.msra.mxu0 %v352
    %1344 = vmatpush.msra.mxu0 %v350
    %1345 = vmatpush.msra.mxu0 %v348
    %1346 = vmatpush.msra.mxu0 %v346
    %1347 = vmatpush.msra.mxu0 %v344
    %1348 = vmatpush.msra.mxu0 %v342
    %1349 = vmatpush.msra.mxu0 %v340
    %1350 = vmatpush.msra.mxu0 %v338
    %1351 = vmatpush.msra.mxu0 %v336
    %1352 = vmatpush.msra.mxu0 %v334
    %1353 = vmatmul.f32.gmra.mxu0 %v1098
    %v1354 = vpop.f32.mrf.mxu0
    %v1355 = vadd.f32 %v1335, %v1354
    %1356 = vdwg.mxu0
    %1357 = vmatpush.msra.mxu0 %v396
    %1358 = vmatpush.msra.mxu0 %v394
    %1359 = vmatpush.msra.mxu0 %v392
    %1360 = vmatpush.msra.mxu0 %v390
    %1361 = vmatpush.msra.mxu0 %v388
    %1362 = vmatpush.msra.mxu0 %v386
    %1363 = vmatpush.msra.mxu0 %v384
    %1364 = vmatpush.msra.mxu0 %v382
    %1365 = vmatpush.msra.mxu0 %v380
    %1366 = vmatpush.msra.mxu0 %v378
    %1367 = vmatpush.msra.mxu0 %v376
    %1368 = vmatpush.msra.mxu0 %v374
    %1369 = vmatpush.msra.mxu0 %v372
    %1370 = vmatpush.msra.mxu0 %v370
    %1371 = vmatpush.msra.mxu0 %v368
    %1372 = vmatpush.msra.mxu0 %v366
    %1373 = vmatmul.f32.gmra.mxu0 %v1099
    %v1374 = vpop.f32.mrf.mxu0
    %v1375 = vadd.f32 %v1355, %v1374
    %1376 = vdwg.mxu0
    %1377 = vmatpush.msra.mxu0 %v428
    %1378 = vmatpush.msra.mxu0 %v426
    %1379 = vmatpush.msra.mxu0 %v424
    %1380 = vmatpush.msra.mxu0 %v422
    %1381 = vmatpush.msra.mxu0 %v420
    %1382 = vmatpush.msra.mxu0 %v418
    %1383 = vmatpush.msra.mxu0 %v416
    %1384 = vmatpush.msra.mxu0 %v414
    %1385 = vmatpush.msra.mxu0 %v412
    %1386 = vmatpush.msra.mxu0 %v410
    %1387 = vmatpush.msra.mxu0 %v408
    %1388 = vmatpush.msra.mxu0 %v406
    %1389 = vmatpush.msra.mxu0 %v404
    %1390 = vmatpush.msra.mxu0 %v402
    %1391 = vmatpush.msra.mxu0 %v400
    %1392 = vmatpush.msra.mxu0 %v398
    %1393 = vmatmul.f32.gmra.mxu0 %v1100
    %v1394 = vpop.f32.mrf.mxu0
    %v1395 = vadd.f32 %v1375, %v1394
    %1396 = vdwg.mxu0
    %1397 = vmatpush.msra.mxu0 %v460
    %1398 = vmatpush.msra.mxu0 %v458
    %1399 = vmatpush.msra.mxu0 %v456
    %1400 = vmatpush.msra.mxu0 %v454
    %1401 = vmatpush.msra.mxu0 %v452
    %1402 = vmatpush.msra.mxu0 %v450
    %1403 = vmatpush.msra.mxu0 %v448
    %1404 = vmatpush.msra.mxu0 %v446
    %1405 = vmatpush.msra.mxu0 %v444
    %1406 = vmatpush.msra.mxu0 %v442
    %1407 = vmatpush.msra.mxu0 %v440
    %1408 = vmatpush.msra.mxu0 %v438
    %1409 = vmatpush.msra.mxu0 %v436
    %1410 = vmatpush.msra.mxu0 %v434
    %1411 = vmatpush.msra.mxu0 %v432
    %1412 = vmatpush.msra.mxu0 %v430
    %1413 = vmatmul.f32.gmra.mxu0 %v1101
    %v1414 = vpop.f32.mrf.mxu0
    %v1415 = vadd.f32 %v1395, %v1414
    %1416 = vdwg.mxu0
    %1417 = vmatpush.msra.mxu0 %v492
    %1418 = vmatpush.msra.mxu0 %v490
    %1419 = vmatpush.msra.mxu0 %v488
    %1420 = vmatpush.msra.mxu0 %v486
    %1421 = vmatpush.msra.mxu0 %v484
    %1422 = vmatpush.msra.mxu0 %v482
    %1423 = vmatpush.msra.mxu0 %v480
    %1424 = vmatpush.msra.mxu0 %v478
    %1425 = vmatpush.msra.mxu0 %v476
    %1426 = vmatpush.msra.mxu0 %v474
    %1427 = vmatpush.msra.mxu0 %v472
    %1428 = vmatpush.msra.mxu0 %v470
    %1429 = vmatpush.msra.mxu0 %v468
    %1430 = vmatpush.msra.mxu0 %v466
    %1431 = vmatpush.msra.mxu0 %v464
    %1432 = vmatpush.msra.mxu0 %v462
    %1433 = vmatmul.f32.gmra.mxu0 %v1102
    %v1434 = vpop.f32.mrf.mxu0
    %v1435 = vadd.f32 %v1415, %v1434
    %1436 = vdwg.mxu0
    %1437 = vmatpush.msra.mxu0 %v524
    %1438 = vmatpush.msra.mxu0 %v522
    %1439 = vmatpush.msra.mxu0 %v520
    %1440 = vmatpush.msra.mxu0 %v518
    %1441 = vmatpush.msra.mxu0 %v516
    %1442 = vmatpush.msra.mxu0 %v514
    %1443 = vmatpush.msra.mxu0 %v512
    %1444 = vmatpush.msra.mxu0 %v510
    %1445 = vmatpush.msra.mxu0 %v508
    %1446 = vmatpush.msra.mxu0 %v506
    %1447 = vmatpush.msra.mxu0 %v504
    %1448 = vmatpush.msra.mxu0 %v502
    %1449 = vmatpush.msra.mxu0 %v500
    %1450 = vmatpush.msra.mxu0 %v498
    %1451 = vmatpush.msra.mxu0 %v496
    %1452 = vmatpush.msra.mxu0 %v494
    %1453 = vmatmul.f32.gmra.mxu0 %v1103
    %v1454 = vpop.f32.mrf.mxu0
    %v1455 = vadd.f32 %v1435, %v1454
    %1456 = vdwg.mxu0
    %1457 = vmatpush.msra.mxu0 %v556
    %1458 = vmatpush.msra.mxu0 %v554
    %1459 = vmatpush.msra.mxu0 %v552
    %1460 = vmatpush.msra.mxu0 %v550
    %1461 = vmatpush.msra.mxu0 %v548
    %1462 = vmatpush.msra.mxu0 %v546
    %1463 = vmatpush.msra.mxu0 %v544
    %1464 = vmatpush.msra.mxu0 %v542
    %1465 = vmatpush.msra.mxu0 %v540
    %1466 = vmatpush.msra.mxu0 %v538
    %1467 = vmatpush.msra.mxu0 %v536
    %1468 = vmatpush.msra.mxu0 %v534
    %1469 = vmatpush.msra.mxu0 %v532
    %1470 = vmatpush.msra.mxu0 %v530
    %1471 = vmatpush.msra.mxu0 %v528
    %1472 = vmatpush.msra.mxu0 %v526
    %1473 = vmatmul.f32.gmra.mxu0 %v1104
    %v1474 = vpop.f32.mrf.mxu0
    %v1475 = vadd.f32 %v1455, %v1474
    %1476 = vdwg.mxu0
    %1477 = vmatpush.msra.mxu0 %v588
    %1478 = vmatpush.msra.mxu0 %v586
    %1479 = vmatpush.msra.mxu0 %v584
    %1480 = vmatpush.msra.mxu0 %v582
    %1481 = vmatpush.msra.mxu0 %v580
    %1482 = vmatpush.msra.mxu0 %v578
    %1483 = vmatpush.msra.mxu0 %v576
    %1484 = vmatpush.msra.mxu0 %v574
    %1485 = vmatpush.msra.mxu0 %v572
    %1486 = vmatpush.msra.mxu0 %v570
    %1487 = vmatpush.msra.mxu0 %v568
    %1488 = vmatpush.msra.mxu0 %v566
    %1489 = vmatpush.msra.mxu0 %v564
    %1490 = vmatpush.msra.mxu0 %v562
    %1491 = vmatpush.msra.mxu0 %v560
    %1492 = vmatpush.msra.mxu0 %v558
    %1493 = vmatmul.f32.gmra.mxu0 %v1107
    %v1494 = vpop.f32.mrf.mxu0
    %v1495 = vadd.f32 %v1475, %v1494
    %1496 = vdwg.mxu0
    %1497 = vmatpush.msra.mxu0 %v620
    %1498 = vmatpush.msra.mxu0 %v618
    %1499 = vmatpush.msra.mxu0 %v616
    %1500 = vmatpush.msra.mxu0 %v614
    %1501 = vmatpush.msra.mxu0 %v612
    %1502 = vmatpush.msra.mxu0 %v610
    %1503 = vmatpush.msra.mxu0 %v608
    %1504 = vmatpush.msra.mxu0 %v606
    %1505 = vmatpush.msra.mxu0 %v604
    %1506 = vmatpush.msra.mxu0 %v602
    %1507 = vmatpush.msra.mxu0 %v600
    %1508 = vmatpush.msra.mxu0 %v598
    %1509 = vmatpush.msra.mxu0 %v596
    %1510 = vmatpush.msra.mxu0 %v594
    %1511 = vmatpush.msra.mxu0 %v592
    %1512 = vmatpush.msra.mxu0 %v590
    %1513 = vmatmul.f32.gmra.mxu0 %v1108
    %v1514 = vpop.f32.mrf.mxu0
    %v1515 = vadd.f32 %v1495, %v1514
    %1516 = vdwg.mxu0
    %1517 = vmatpush.msra.mxu0 %v652
    %1518 = vmatpush.msra.mxu0 %v650
    %1519 = vmatpush.msra.mxu0 %v648
    %1520 = vmatpush.msra.mxu0 %v646
    %1521 = vmatpush.msra.mxu0 %v644
    %1522 = vmatpush.msra.mxu0 %v642
    %1523 = vmatpush.msra.mxu0 %v640
    %1524 = vmatpush.msra.mxu0 %v638
    %1525 = vmatpush.msra.mxu0 %v636
    %1526 = vmatpush.msra.mxu0 %v634
    %1527 = vmatpush.msra.mxu0 %v632
    %1528 = vmatpush.msra.mxu0 %v630
    %1529 = vmatpush.msra.mxu0 %v628
    %1530 = vmatpush.msra.mxu0 %v626
    %1531 = vmatpush.msra.mxu0 %v624
    %1532 = vmatpush.msra.mxu0 %v622
    %1533 = vmatmul.f32.gmra.mxu0 %v1109
    %v1534 = vpop.f32.mrf.mxu0
    %v1535 = vadd.f32 %v1515, %v1534
    %1536 = vdwg.mxu0
    %1537 = vmatpush.msra.mxu0 %v684
    %1538 = vmatpush.msra.mxu0 %v682
    %1539 = vmatpush.msra.mxu0 %v680
    %1540 = vmatpush.msra.mxu0 %v678
    %1541 = vmatpush.msra.mxu0 %v676
    %1542 = vmatpush.msra.mxu0 %v674
    %1543 = vmatpush.msra.mxu0 %v672
    %1544 = vmatpush.msra.mxu0 %v670
    %1545 = vmatpush.msra.mxu0 %v668
    %1546 = vmatpush.msra.mxu0 %v666
    %1547 = vmatpush.msra.mxu0 %v664
    %1548 = vmatpush.msra.mxu0 %v662
    %1549 = vmatpush.msra.mxu0 %v660
    %1550 = vmatpush.msra.mxu0 %v658
    %1551 = vmatpush.msra.mxu0 %v656
    %1552 = vmatpush.msra.mxu0 %v654
    %1553 = vmatmul.f32.gmra.mxu0 %v1110
    %v1554 = vpop.f32.mrf.mxu0
    %v1555 = vadd.f32 %v1535, %v1554
    %1556 = vdwg.mxu0
    %1557 = vmatpush.msra.mxu0 %v716
    %1558 = vmatpush.msra.mxu0 %v714
    %1559 = vmatpush.msra.mxu0 %v712
    %1560 = vmatpush.msra.mxu0 %v710
    %1561 = vmatpush.msra.mxu0 %v708
    %1562 = vmatpush.msra.mxu0 %v706
    %1563 = vmatpush.msra.mxu0 %v704
    %1564 = vmatpush.msra.mxu0 %v702
    %1565 = vmatpush.msra.mxu0 %v700
    %1566 = vmatpush.msra.mxu0 %v698
    %1567 = vmatpush.msra.mxu0 %v696
    %1568 = vmatpush.msra.mxu0 %v694
    %1569 = vmatpush.msra.mxu0 %v692
    %1570 = vmatpush.msra.mxu0 %v690
    %1571 = vmatpush.msra.mxu0 %v688
    %1572 = vmatpush.msra.mxu0 %v686
    %1573 = vmatmul.f32.gmra.mxu0 %v1111
    %v1574 = vpop.f32.mrf.mxu0
    %v1575 = vadd.f32 %v1555, %v1574
    %1576 = vdwg.mxu0
    %1577 = vmatpush.msra.mxu0 %v748
    %1578 = vmatpush.msra.mxu0 %v746
    %1579 = vmatpush.msra.mxu0 %v744
    %1580 = vmatpush.msra.mxu0 %v742
    %1581 = vmatpush.msra.mxu0 %v740
    %1582 = vmatpush.msra.mxu0 %v738
    %1583 = vmatpush.msra.mxu0 %v736
    %1584 = vmatpush.msra.mxu0 %v734
    %1585 = vmatpush.msra.mxu0 %v732
    %1586 = vmatpush.msra.mxu0 %v730
    %1587 = vmatpush.msra.mxu0 %v728
    %1588 = vmatpush.msra.mxu0 %v726
    %1589 = vmatpush.msra.mxu0 %v724
    %1590 = vmatpush.msra.mxu0 %v722
    %1591 = vmatpush.msra.mxu0 %v720
    %1592 = vmatpush.msra.mxu0 %v718
    %1593 = vmatmul.f32.gmra.mxu0 %v1112
    %v1594 = vpop.f32.mrf.mxu0
    %v1595 = vadd.f32 %v1575, %v1594
    %1596 = vdwg.mxu0
    %1597 = vmatpush.msra.mxu0 %v780
    %1598 = vmatpush.msra.mxu0 %v778
    %1599 = vmatpush.msra.mxu0 %v776
    %1600 = vmatpush.msra.mxu0 %v774
    %1601 = vmatpush.msra.mxu0 %v772
    %1602 = vmatpush.msra.mxu0 %v770
    %1603 = vmatpush.msra.mxu0 %v768
    %1604 = vmatpush.msra.mxu0 %v766
    %1605 = vmatpush.msra.mxu0 %v764
    %1606 = vmatpush.msra.mxu0 %v762
    %1607 = vmatpush.msra.mxu0 %v760
    %1608 = vmatpush.msra.mxu0 %v758
    %1609 = vmatpush.msra.mxu0 %v756
    %1610 = vmatpush.msra.mxu0 %v754
    %1611 = vmatpush.msra.mxu0 %v752
    %1612 = vmatpush.msra.mxu0 %v750
    %1613 = vmatmul.f32.gmra.mxu0 %v1113
    %v1614 = vpop.f32.mrf.mxu0
    %v1615 = vadd.f32 %v1595, %v1614
    %1616 = vdwg.mxu0
    %1617 = vmatpush.msra.mxu0 %v812
    %1618 = vmatpush.msra.mxu0 %v810
    %1619 = vmatpush.msra.mxu0 %v808
    %1620 = vmatpush.msra.mxu0 %v806
    %1621 = vmatpush.msra.mxu0 %v804
    %1622 = vmatpush.msra.mxu0 %v802
    %1623 = vmatpush.msra.mxu0 %v800
    %1624 = vmatpush.msra.mxu0 %v798
    %1625 = vmatpush.msra.mxu0 %v796
    %1626 = vmatpush.msra.mxu0 %v794
    %1627 = vmatpush.msra.mxu0 %v792
    %1628 = vmatpush.msra.mxu0 %v790
    %1629 = vmatpush.msra.mxu0 %v788
    %1630 = vmatpush.msra.mxu0 %v786
    %1631 = vmatpush.msra.mxu0 %v784
    %1632 = vmatpush.msra.mxu0 %v782
    %1633 = vmatmul.f32.gmra.mxu0 %v1114
    %v1634 = vpop.f32.mrf.mxu0
    %v1635 = vadd.f32 %v1615, %v1634
    %1636 = vdwg.mxu0
    %1637 = vmatpush.msra.mxu0 %v844
    %1638 = vmatpush.msra.mxu0 %v842
    %1639 = vmatpush.msra.mxu0 %v840
    %1640 = vmatpush.msra.mxu0 %v838
    %1641 = vmatpush.msra.mxu0 %v836
    %1642 = vmatpush.msra.mxu0 %v834
    %1643 = vmatpush.msra.mxu0 %v832
    %1644 = vmatpush.msra.mxu0 %v830
    %1645 = vmatpush.msra.mxu0 %v828
    %1646 = vmatpush.msra.mxu0 %v826
    %1647 = vmatpush.msra.mxu0 %v824
    %1648 = vmatpush.msra.mxu0 %v822
    %1649 = vmatpush.msra.mxu0 %v820
    %1650 = vmatpush.msra.mxu0 %v818
    %1651 = vmatpush.msra.mxu0 %v816
    %1652 = vmatpush.msra.mxu0 %v814
    %1653 = vmatmul.f32.gmra.mxu0 %v1117
    %v1654 = vpop.f32.mrf.mxu0
    %v1655 = vadd.f32 %v1635, %v1654
    %1656 = vdwg.mxu0
    %1657 = vmatpush.msra.mxu0 %v876
    %1658 = vmatpush.msra.mxu0 %v874
    %1659 = vmatpush.msra.mxu0 %v872
    %1660 = vmatpush.msra.mxu0 %v870
    %1661 = vmatpush.msra.mxu0 %v868
    %1662 = vmatpush.msra.mxu0 %v866
    %1663 = vmatpush.msra.mxu0 %v864
    %1664 = vmatpush.msra.mxu0 %v862
    %1665 = vmatpush.msra.mxu0 %v860
    %1666 = vmatpush.msra.mxu0 %v858
    %1667 = vmatpush.msra.mxu0 %v856
    %1668 = vmatpush.msra.mxu0 %v854
    %1669 = vmatpush.msra.mxu0 %v852
    %1670 = vmatpush.msra.mxu0 %v850
    %1671 = vmatpush.msra.mxu0 %v848
    %1672 = vmatpush.msra.mxu0 %v846
    %1673 = vmatmul.f32.gmra.mxu0 %v1118
    %v1674 = vpop.f32.mrf.mxu0
    %v1675 = vadd.f32 %v1655, %v1674
    %1676 = vdwg.mxu0
    %1677 = vmatpush.msra.mxu0 %v908
    %1678 = vmatpush.msra.mxu0 %v906
    %1679 = vmatpush.msra.mxu0 %v904
    %1680 = vmatpush.msra.mxu0 %v902
    %1681 = vmatpush.msra.mxu0 %v900
    %1682 = vmatpush.msra.mxu0 %v898
    %1683 = vmatpush.msra.mxu0 %v896
    %1684 = vmatpush.msra.mxu0 %v894
    %1685 = vmatpush.msra.mxu0 %v892
    %1686 = vmatpush.msra.mxu0 %v890
    %1687 = vmatpush.msra.mxu0 %v888
    %1688 = vmatpush.msra.mxu0 %v886
    %1689 = vmatpush.msra.mxu0 %v884
    %1690 = vmatpush.msra.mxu0 %v882
    %1691 = vmatpush.msra.mxu0 %v880
    %1692 = vmatpush.msra.mxu0 %v878
    %1693 = vmatmul.f32.gmra.mxu0 %v1119
    %v1694 = vpop.f32.mrf.mxu0
    %v1695 = vadd.f32 %v1675, %v1694
    %1696 = vdwg.mxu0
    %1697 = vmatpush.msra.mxu0 %v940
    %1698 = vmatpush.msra.mxu0 %v938
    %1699 = vmatpush.msra.mxu0 %v936
    %1700 = vmatpush.msra.mxu0 %v934
    %1701 = vmatpush.msra.mxu0 %v932
    %1702 = vmatpush.msra.mxu0 %v930
    %1703 = vmatpush.msra.mxu0 %v928
    %1704 = vmatpush.msra.mxu0 %v926
    %1705 = vmatpush.msra.mxu0 %v924
    %1706 = vmatpush.msra.mxu0 %v922
    %1707 = vmatpush.msra.mxu0 %v920
    %1708 = vmatpush.msra.mxu0 %v918
    %1709 = vmatpush.msra.mxu0 %v916
    %1710 = vmatpush.msra.mxu0 %v914
    %1711 = vmatpush.msra.mxu0 %v912
    %1712 = vmatpush.msra.mxu0 %v910
    %1713 = vmatmul.f32.gmra.mxu0 %v1120
    %v1714 = vpop.f32.mrf.mxu0
    %v1715 = vadd.f32 %v1695, %v1714
    %1716 = vdwg.mxu0
    %1717 = vmatpush.msra.mxu0 %v972
    %1718 = vmatpush.msra.mxu0 %v970
    %1719 = vmatpush.msra.mxu0 %v968
    %1720 = vmatpush.msra.mxu0 %v966
    %1721 = vmatpush.msra.mxu0 %v964
    %1722 = vmatpush.msra.mxu0 %v962
    %1723 = vmatpush.msra.mxu0 %v960
    %1724 = vmatpush.msra.mxu0 %v958
    %1725 = vmatpush.msra.mxu0 %v956
    %1726 = vmatpush.msra.mxu0 %v954
    %1727 = vmatpush.msra.mxu0 %v952
    %1728 = vmatpush.msra.mxu0 %v950
    %1729 = vmatpush.msra.mxu0 %v948
    %1730 = vmatpush.msra.mxu0 %v946
    %1731 = vmatpush.msra.mxu0 %v944
    %1732 = vmatpush.msra.mxu0 %v942
    %1733 = vmatmul.f32.gmra.mxu0 %v1121
    %v1734 = vpop.f32.mrf.mxu0
    %v1735 = vadd.f32 %v1715, %v1734
    %1736 = vdwg.mxu0
    %1737 = vmatpush.msra.mxu0 %v1004
    %1738 = vmatpush.msra.mxu0 %v1002
    %1739 = vmatpush.msra.mxu0 %v1000
    %1740 = vmatpush.msra.mxu0 %v998
    %1741 = vmatpush.msra.mxu0 %v996
    %1742 = vmatpush.msra.mxu0 %v994
    %1743 = vmatpush.msra.mxu0 %v992
    %1744 = vmatpush.msra.mxu0 %v990
    %1745 = vmatpush.msra.mxu0 %v988
    %1746 = vmatpush.msra.mxu0 %v986
    %1747 = vmatpush.msra.mxu0 %v984
    %1748 = vmatpush.msra.mxu0 %v982
    %1749 = vmatpush.msra.mxu0 %v980
    %1750 = vmatpush.msra.mxu0 %v978
    %1751 = vmatpush.msra.mxu0 %v976
    %1752 = vmatpush.msra.mxu0 %v974
    %1753 = vmatmul.f32.gmra.mxu0 %v1122
    %v1754 = vpop.f32.mrf.mxu0
    %v1755 = vadd.f32 %v1735, %v1754
    %1756 = vdwg.mxu0
    %1757 = vmatpush.msra.mxu0 %v1036
    %1758 = vmatpush.msra.mxu0 %v1034
    %1759 = vmatpush.msra.mxu0 %v1032
    %1760 = vmatpush.msra.mxu0 %v1030
    %1761 = vmatpush.msra.mxu0 %v1028
    %1762 = vmatpush.msra.mxu0 %v1026
    %1763 = vmatpush.msra.mxu0 %v1024
    %1764 = vmatpush.msra.mxu0 %v1022
    %1765 = vmatpush.msra.mxu0 %v1020
    %1766 = vmatpush.msra.mxu0 %v1018
    %1767 = vmatpush.msra.mxu0 %v1016
    %1768 = vmatpush.msra.mxu0 %v1014
    %1769 = vmatpush.msra.mxu0 %v1012
    %1770 = vmatpush.msra.mxu0 %v1010
    %1771 = vmatpush.msra.mxu0 %v1008
    %1772 = vmatpush.msra.mxu0 %v1006
    %1773 = vmatmul.f32.gmra.mxu0 %v1123
    %v1774 = vpop.f32.mrf.mxu0
    %v1775 = vadd.f32 %v1755, %v1774
    %1776 = vdwg.mxu0
    %1777 = vmatpush.msra.mxu0 %v1068
    %1778 = vmatpush.msra.mxu0 %v1066
    %1779 = vmatpush.msra.mxu0 %v1064
    %1780 = vmatpush.msra.mxu0 %v1062
    %1781 = vmatpush.msra.mxu0 %v1060
    %1782 = vmatpush.msra.mxu0 %v1058
    %1783 = vmatpush.msra.mxu0 %v1056
    %1784 = vmatpush.msra.mxu0 %v1054
    %1785 = vmatpush.msra.mxu0 %v1052
    %1786 = vmatpush.msra.mxu0 %v1050
    %1787 = vmatpush.msra.mxu0 %v1048
    %1788 = vmatpush.msra.mxu0 %v1046
    %1789 = vmatpush.msra.mxu0 %v1044
    %1790 = vmatpush.msra.mxu0 %v1042
    %1791 = vmatpush.msra.mxu0 %v1040
    %1792 = vmatpush.msra.mxu0 %v1038
    %1793 = vmatmul.f32.gmra.mxu0 %v1124
    %v1794 = vpop.f32.mrf.mxu0
    %v1795 = vadd.f32 %v1775, %v1794
    %1796 = vdwg.mxu0
    %1797 = vmatpush.msra.mxu0 %v77
    %1798 = vmatpush.msra.mxu0 %v75
    %1799 = vmatpush.msra.mxu0 %v73
    %1800 = vmatpush.msra.mxu0 %v71
    %1801 = vmatpush.msra.mxu0 %v69
    %1802 = vmatpush.msra.mxu0 %v67
    %1803 = vmatpush.msra.mxu0 %v65
    %1804 = vmatpush.msra.mxu0 %v63
    %1805 = vmatpush.msra.mxu0 %v61
    %1806 = vmatpush.msra.mxu0 %v59
    %1807 = vmatpush.msra.mxu0 %v57
    %1808 = vmatpush.msra.mxu0 %v55
    %1809 = vmatpush.msra.mxu0 %v53
    %1810 = vmatpush.msra.mxu0 %v51
    %1811 = vmatpush.msra.mxu0 %v49
    %1812 = vmatpush.msra.mxu0 %v47
    %1813 = vmatmul.f32.gmra.mxu0 %v1087
    %v1814 = vpop.f32.mrf.mxu0
    %v1815 = vadd.f32 %v1073, %v1814
    %1816 = vdwg.mxu0
    %1817 = vmatpush.msra.mxu0 %v109
    %1818 = vmatpush.msra.mxu0 %v107
    %1819 = vmatpush.msra.mxu0 %v105
    %1820 = vmatpush.msra.mxu0 %v103
    %1821 = vmatpush.msra.mxu0 %v101
    %1822 = vmatpush.msra.mxu0 %v99
    %1823 = vmatpush.msra.mxu0 %v97
    %1824 = vmatpush.msra.mxu0 %v95
    %1825 = vmatpush.msra.mxu0 %v93
    %1826 = vmatpush.msra.mxu0 %v91
    %1827 = vmatpush.msra.mxu0 %v89
    %1828 = vmatpush.msra.mxu0 %v87
    %1829 = vmatpush.msra.mxu0 %v85
    %1830 = vmatpush.msra.mxu0 %v83
    %1831 = vmatpush.msra.mxu0 %v81
    %1832 = vmatpush.msra.mxu0 %v79
    %1833 = vmatmul.f32.gmra.mxu0 %v1088
    %v1834 = vpop.f32.mrf.mxu0
    %v1835 = vadd.f32 %v1815, %v1834
    %1836 = vdwg.mxu0
    %1837 = vmatpush.msra.mxu0 %v141
    %1838 = vmatpush.msra.mxu0 %v139
    %1839 = vmatpush.msra.mxu0 %v137
    %1840 = vmatpush.msra.mxu0 %v135
    %1841 = vmatpush.msra.mxu0 %v133
    %1842 = vmatpush.msra.mxu0 %v131
    %1843 = vmatpush.msra.mxu0 %v129
    %1844 = vmatpush.msra.mxu0 %v127
    %1845 = vmatpush.msra.mxu0 %v125
    %1846 = vmatpush.msra.mxu0 %v123
    %1847 = vmatpush.msra.mxu0 %v121
    %1848 = vmatpush.msra.mxu0 %v119
    %1849 = vmatpush.msra.mxu0 %v117
    %1850 = vmatpush.msra.mxu0 %v115
    %1851 = vmatpush.msra.mxu0 %v113
    %1852 = vmatpush.msra.mxu0 %v111
    %1853 = vmatmul.f32.gmra.mxu0 %v1089
    %v1854 = vpop.f32.mrf.mxu0
    %v1855 = vadd.f32 %v1835, %v1854
    %1856 = vdwg.mxu0
    %1857 = vmatpush.msra.mxu0 %v173
    %1858 = vmatpush.msra.mxu0 %v171
    %1859 = vmatpush.msra.mxu0 %v169
    %1860 = vmatpush.msra.mxu0 %v167
    %1861 = vmatpush.msra.mxu0 %v165
    %1862 = vmatpush.msra.mxu0 %v163
    %1863 = vmatpush.msra.mxu0 %v161
    %1864 = vmatpush.msra.mxu0 %v159
    %1865 = vmatpush.msra.mxu0 %v157
    %1866 = vmatpush.msra.mxu0 %v155
    %1867 = vmatpush.msra.mxu0 %v153
    %1868 = vmatpush.msra.mxu0 %v151
    %1869 = vmatpush.msra.mxu0 %v149
    %1870 = vmatpush.msra.mxu0 %v147
    %1871 = vmatpush.msra.mxu0 %v145
    %1872 = vmatpush.msra.mxu0 %v143
    %1873 = vmatmul.f32.gmra.mxu0 %v1090
    %v1874 = vpop.f32.mrf.mxu0
    %v1875 = vadd.f32 %v1855, %v1874
    %1876 = vdwg.mxu0
    %1877 = vmatpush.msra.mxu0 %v205
    %1878 = vmatpush.msra.mxu0 %v203
    %1879 = vmatpush.msra.mxu0 %v201
    %1880 = vmatpush.msra.mxu0 %v199
    %1881 = vmatpush.msra.mxu0 %v197
    %1882 = vmatpush.msra.mxu0 %v195
    %1883 = vmatpush.msra.mxu0 %v193
    %1884 = vmatpush.msra.mxu0 %v191
    %1885 = vmatpush.msra.mxu0 %v189
    %1886 = vmatpush.msra.mxu0 %v187
    %1887 = vmatpush.msra.mxu0 %v185
    %1888 = vmatpush.msra.mxu0 %v183
    %1889 = vmatpush.msra.mxu0 %v181
    %1890 = vmatpush.msra.mxu0 %v179
    %1891 = vmatpush.msra.mxu0 %v177
    %1892 = vmatpush.msra.mxu0 %v175
    %1893 = vmatmul.f32.gmra.mxu0 %v1091
    %v1894 = vpop.f32.mrf.mxu0
    %v1895 = vadd.f32 %v1875, %v1894
    %1896 = vdwg.mxu0
    %1897 = vmatpush.msra.mxu0 %v237
    %1898 = vmatpush.msra.mxu0 %v235
    %1899 = vmatpush.msra.mxu0 %v233
    %1900 = vmatpush.msra.mxu0 %v231
    %1901 = vmatpush.msra.mxu0 %v229
    %1902 = vmatpush.msra.mxu0 %v227
    %1903 = vmatpush.msra.mxu0 %v225
    %1904 = vmatpush.msra.mxu0 %v223
    %1905 = vmatpush.msra.mxu0 %v221
    %1906 = vmatpush.msra.mxu0 %v219
    %1907 = vmatpush.msra.mxu0 %v217
    %1908 = vmatpush.msra.mxu0 %v215
    %1909 = vmatpush.msra.mxu0 %v213
    %1910 = vmatpush.msra.mxu0 %v211
    %1911 = vmatpush.msra.mxu0 %v209
    %1912 = vmatpush.msra.mxu0 %v207
    %1913 = vmatmul.f32.gmra.mxu0 %v1092
    %v1914 = vpop.f32.mrf.mxu0
    %v1915 = vadd.f32 %v1895, %v1914
    %1916 = vdwg.mxu0
    %1917 = vmatpush.msra.mxu0 %v269
    %1918 = vmatpush.msra.mxu0 %v267
    %1919 = vmatpush.msra.mxu0 %v265
    %1920 = vmatpush.msra.mxu0 %v263
    %1921 = vmatpush.msra.mxu0 %v261
    %1922 = vmatpush.msra.mxu0 %v259
    %1923 = vmatpush.msra.mxu0 %v257
    %1924 = vmatpush.msra.mxu0 %v255
    %1925 = vmatpush.msra.mxu0 %v253
    %1926 = vmatpush.msra.mxu0 %v251
    %1927 = vmatpush.msra.mxu0 %v249
    %1928 = vmatpush.msra.mxu0 %v247
    %1929 = vmatpush.msra.mxu0 %v245
    %1930 = vmatpush.msra.mxu0 %v243
    %1931 = vmatpush.msra.mxu0 %v241
    %1932 = vmatpush.msra.mxu0 %v239
    %1933 = vmatmul.f32.gmra.mxu0 %v1093
    %v1934 = vpop.f32.mrf.mxu0
    %v1935 = vadd.f32 %v1915, %v1934
    %1936 = vdwg.mxu0
    %1937 = vmatpush.msra.mxu0 %v301
    %1938 = vmatpush.msra.mxu0 %v299
    %1939 = vmatpush.msra.mxu0 %v297
    %1940 = vmatpush.msra.mxu0 %v295
    %1941 = vmatpush.msra.mxu0 %v293
    %1942 = vmatpush.msra.mxu0 %v291
    %1943 = vmatpush.msra.mxu0 %v289
    %1944 = vmatpush.msra.mxu0 %v287
    %1945 = vmatpush.msra.mxu0 %v285
    %1946 = vmatpush.msra.mxu0 %v283
    %1947 = vmatpush.msra.mxu0 %v281
    %1948 = vmatpush.msra.mxu0 %v279
    %1949 = vmatpush.msra.mxu0 %v277
    %1950 = vmatpush.msra.mxu0 %v275
    %1951 = vmatpush.msra.mxu0 %v273
    %1952 = vmatpush.msra.mxu0 %v271
    %1953 = vmatmul.f32.gmra.mxu0 %v1094
    %v1954 = vpop.f32.mrf.mxu0
    %v1955 = vadd.f32 %v1935, %v1954
    %1956 = vdwg.mxu0
    %1957 = vmatpush.msra.mxu0 %v333
    %1958 = vmatpush.msra.mxu0 %v331
    %1959 = vmatpush.msra.mxu0 %v329
    %1960 = vmatpush.msra.mxu0 %v327
    %1961 = vmatpush.msra.mxu0 %v325
    %1962 = vmatpush.msra.mxu0 %v323
    %1963 = vmatpush.msra.mxu0 %v321
    %1964 = vmatpush.msra.mxu0 %v319
    %1965 = vmatpush.msra.mxu0 %v317
    %1966 = vmatpush.msra.mxu0 %v315
    %1967 = vmatpush.msra.mxu0 %v313
    %1968 = vmatpush.msra.mxu0 %v311
    %1969 = vmatpush.msra.mxu0 %v309
    %1970 = vmatpush.msra.mxu0 %v307
    %1971 = vmatpush.msra.mxu0 %v305
    %1972 = vmatpush.msra.mxu0 %v303
    %1973 = vmatmul.f32.gmra.mxu0 %v1097
    %v1974 = vpop.f32.mrf.mxu0
    %v1975 = vadd.f32 %v1955, %v1974
    %1976 = vdwg.mxu0
    %1977 = vmatpush.msra.mxu0 %v365
    %1978 = vmatpush.msra.mxu0 %v363
    %1979 = vmatpush.msra.mxu0 %v361
    %1980 = vmatpush.msra.mxu0 %v359
    %1981 = vmatpush.msra.mxu0 %v357
    %1982 = vmatpush.msra.mxu0 %v355
    %1983 = vmatpush.msra.mxu0 %v353
    %1984 = vmatpush.msra.mxu0 %v351
    %1985 = vmatpush.msra.mxu0 %v349
    %1986 = vmatpush.msra.mxu0 %v347
    %1987 = vmatpush.msra.mxu0 %v345
    %1988 = vmatpush.msra.mxu0 %v343
    %1989 = vmatpush.msra.mxu0 %v341
    %1990 = vmatpush.msra.mxu0 %v339
    %1991 = vmatpush.msra.mxu0 %v337
    %1992 = vmatpush.msra.mxu0 %v335
    %1993 = vmatmul.f32.gmra.mxu0 %v1098
    %v1994 = vpop.f32.mrf.mxu0
    %v1995 = vadd.f32 %v1975, %v1994
    %1996 = vdwg.mxu0
    %1997 = vmatpush.msra.mxu0 %v397
    %1998 = vmatpush.msra.mxu0 %v395
    %1999 = vmatpush.msra.mxu0 %v393
    %2000 = vmatpush.msra.mxu0 %v391
    %2001 = vmatpush.msra.mxu0 %v389
    %2002 = vmatpush.msra.mxu0 %v387
    %2003 = vmatpush.msra.mxu0 %v385
    %2004 = vmatpush.msra.mxu0 %v383
    %2005 = vmatpush.msra.mxu0 %v381
    %2006 = vmatpush.msra.mxu0 %v379
    %2007 = vmatpush.msra.mxu0 %v377
    %2008 = vmatpush.msra.mxu0 %v375
    %2009 = vmatpush.msra.mxu0 %v373
    %2010 = vmatpush.msra.mxu0 %v371
    %2011 = vmatpush.msra.mxu0 %v369
    %2012 = vmatpush.msra.mxu0 %v367
    %2013 = vmatmul.f32.gmra.mxu0 %v1099
    %v2014 = vpop.f32.mrf.mxu0
    %v2015 = vadd.f32 %v1995, %v2014
    %2016 = vdwg.mxu0
    %2017 = vmatpush.msra.mxu0 %v429
    %2018 = vmatpush.msra.mxu0 %v427
    %2019 = vmatpush.msra.mxu0 %v425
    %2020 = vmatpush.msra.mxu0 %v423
    %2021 = vmatpush.msra.mxu0 %v421
    %2022 = vmatpush.msra.mxu0 %v419
    %2023 = vmatpush.msra.mxu0 %v417
    %2024 = vmatpush.msra.mxu0 %v415
    %2025 = vmatpush.msra.mxu0 %v413
    %2026 = vmatpush.msra.mxu0 %v411
    %2027 = vmatpush.msra.mxu0 %v409
    %2028 = vmatpush.msra.mxu0 %v407
    %2029 = vmatpush.msra.mxu0 %v405
    %2030 = vmatpush.msra.mxu0 %v403
    %2031 = vmatpush.msra.mxu0 %v401
    %2032 = vmatpush.msra.mxu0 %v399
    %2033 = vmatmul.f32.gmra.mxu0 %v1100
    %v2034 = vpop.f32.mrf.mxu0
    %v2035 = vadd.f32 %v2015, %v2034
    %2036 = vdwg.mxu0
    %2037 = vmatpush.msra.mxu0 %v461
    %2038 = vmatpush.msra.mxu0 %v459
    %2039 = vmatpush.msra.mxu0 %v457
    %2040 = vmatpush.msra.mxu0 %v455
    %2041 = vmatpush.msra.mxu0 %v453
    %2042 = vmatpush.msra.mxu0 %v451
    %2043 = vmatpush.msra.mxu0 %v449
    %2044 = vmatpush.msra.mxu0 %v447
    %2045 = vmatpush.msra.mxu0 %v445
    %2046 = vmatpush.msra.mxu0 %v443
    %2047 = vmatpush.msra.mxu0 %v441
    %2048 = vmatpush.msra.mxu0 %v439
    %2049 = vmatpush.msra.mxu0 %v437
    %2050 = vmatpush.msra.mxu0 %v435
    %2051 = vmatpush.msra.mxu0 %v433
    %2052 = vmatpush.msra.mxu0 %v431
    %2053 = vmatmul.f32.gmra.mxu0 %v1101
    %v2054 = vpop.f32.mrf.mxu0
    %v2055 = vadd.f32 %v2035, %v2054
    %2056 = vdwg.mxu0
    %2057 = vmatpush.msra.mxu0 %v493
    %2058 = vmatpush.msra.mxu0 %v491
    %2059 = vmatpush.msra.mxu0 %v489
    %2060 = vmatpush.msra.mxu0 %v487
    %2061 = vmatpush.msra.mxu0 %v485
    %2062 = vmatpush.msra.mxu0 %v483
    %2063 = vmatpush.msra.mxu0 %v481
    %2064 = vmatpush.msra.mxu0 %v479
    %2065 = vmatpush.msra.mxu0 %v477
    %2066 = vmatpush.msra.mxu0 %v475
    %2067 = vmatpush.msra.mxu0 %v473
    %2068 = vmatpush.msra.mxu0 %v471
    %2069 = vmatpush.msra.mxu0 %v469
    %2070 = vmatpush.msra.mxu0 %v467
    %2071 = vmatpush.msra.mxu0 %v465
    %2072 = vmatpush.msra.mxu0 %v463
    %2073 = vmatmul.f32.gmra.mxu0 %v1102
    %v2074 = vpop.f32.mrf.mxu0
    %v2075 = vadd.f32 %v2055, %v2074
    %2076 = vdwg.mxu0
    %2077 = vmatpush.msra.mxu0 %v525
    %2078 = vmatpush.msra.mxu0 %v523
    %2079 = vmatpush.msra.mxu0 %v521
    %2080 = vmatpush.msra.mxu0 %v519
    %2081 = vmatpush.msra.mxu0 %v517
    %2082 = vmatpush.msra.mxu0 %v515
    %2083 = vmatpush.msra.mxu0 %v513
    %2084 = vmatpush.msra.mxu0 %v511
    %2085 = vmatpush.msra.mxu0 %v509
    %2086 = vmatpush.msra.mxu0 %v507
    %2087 = vmatpush.msra.mxu0 %v505
    %2088 = vmatpush.msra.mxu0 %v503
    %2089 = vmatpush.msra.mxu0 %v501
    %2090 = vmatpush.msra.mxu0 %v499
    %2091 = vmatpush.msra.mxu0 %v497
    %2092 = vmatpush.msra.mxu0 %v495
    %2093 = vmatmul.f32.gmra.mxu0 %v1103
    %v2094 = vpop.f32.mrf.mxu0
    %v2095 = vadd.f32 %v2075, %v2094
    %2096 = vdwg.mxu0
    %2097 = vmatpush.msra.mxu0 %v557
    %2098 = vmatpush.msra.mxu0 %v555
    %2099 = vmatpush.msra.mxu0 %v553
    %2100 = vmatpush.msra.mxu0 %v551
    %2101 = vmatpush.msra.mxu0 %v549
    %2102 = vmatpush.msra.mxu0 %v547
    %2103 = vmatpush.msra.mxu0 %v545
    %2104 = vmatpush.msra.mxu0 %v543
    %2105 = vmatpush.msra.mxu0 %v541
    %2106 = vmatpush.msra.mxu0 %v539
    %2107 = vmatpush.msra.mxu0 %v537
    %2108 = vmatpush.msra.mxu0 %v535
    %2109 = vmatpush.msra.mxu0 %v533
    %2110 = vmatpush.msra.mxu0 %v531
    %2111 = vmatpush.msra.mxu0 %v529
    %2112 = vmatpush.msra.mxu0 %v527
    %2113 = vmatmul.f32.gmra.mxu0 %v1104
    %v2114 = vpop.f32.mrf.mxu0
    %v2115 = vadd.f32 %v2095, %v2114
    %2116 = vdwg.mxu0
    %2117 = vmatpush.msra.mxu0 %v589
    %2118 = vmatpush.msra.mxu0 %v587
    %2119 = vmatpush.msra.mxu0 %v585
    %2120 = vmatpush.msra.mxu0 %v583
    %2121 = vmatpush.msra.mxu0 %v581
    %2122 = vmatpush.msra.mxu0 %v579
    %2123 = vmatpush.msra.mxu0 %v577
    %2124 = vmatpush.msra.mxu0 %v575
    %2125 = vmatpush.msra.mxu0 %v573
    %2126 = vmatpush.msra.mxu0 %v571
    %2127 = vmatpush.msra.mxu0 %v569
    %2128 = vmatpush.msra.mxu0 %v567
    %2129 = vmatpush.msra.mxu0 %v565
    %2130 = vmatpush.msra.mxu0 %v563
    %2131 = vmatpush.msra.mxu0 %v561
    %2132 = vmatpush.msra.mxu0 %v559
    %2133 = vmatmul.f32.gmra.mxu0 %v1107
    %v2134 = vpop.f32.mrf.mxu0
    %v2135 = vadd.f32 %v2115, %v2134
    %2136 = vdwg.mxu0
    %2137 = vmatpush.msra.mxu0 %v621
    %2138 = vmatpush.msra.mxu0 %v619
    %2139 = vmatpush.msra.mxu0 %v617
    %2140 = vmatpush.msra.mxu0 %v615
    %2141 = vmatpush.msra.mxu0 %v613
    %2142 = vmatpush.msra.mxu0 %v611
    %2143 = vmatpush.msra.mxu0 %v609
    %2144 = vmatpush.msra.mxu0 %v607
    %2145 = vmatpush.msra.mxu0 %v605
    %2146 = vmatpush.msra.mxu0 %v603
    %2147 = vmatpush.msra.mxu0 %v601
    %2148 = vmatpush.msra.mxu0 %v599
    %2149 = vmatpush.msra.mxu0 %v597
    %2150 = vmatpush.msra.mxu0 %v595
    %2151 = vmatpush.msra.mxu0 %v593
    %2152 = vmatpush.msra.mxu0 %v591
    %2153 = vmatmul.f32.gmra.mxu0 %v1108
    %v2154 = vpop.f32.mrf.mxu0
    %v2155 = vadd.f32 %v2135, %v2154
    %2156 = vdwg.mxu0
    %2157 = vmatpush.msra.mxu0 %v653
    %2158 = vmatpush.msra.mxu0 %v651
    %2159 = vmatpush.msra.mxu0 %v649
    %2160 = vmatpush.msra.mxu0 %v647
    %2161 = vmatpush.msra.mxu0 %v645
    %2162 = vmatpush.msra.mxu0 %v643
    %2163 = vmatpush.msra.mxu0 %v641
    %2164 = vmatpush.msra.mxu0 %v639
    %2165 = vmatpush.msra.mxu0 %v637
    %2166 = vmatpush.msra.mxu0 %v635
    %2167 = vmatpush.msra.mxu0 %v633
    %2168 = vmatpush.msra.mxu0 %v631
    %2169 = vmatpush.msra.mxu0 %v629
    %2170 = vmatpush.msra.mxu0 %v627
    %2171 = vmatpush.msra.mxu0 %v625
    %2172 = vmatpush.msra.mxu0 %v623
    %2173 = vmatmul.f32.gmra.mxu0 %v1109
    %v2174 = vpop.f32.mrf.mxu0
    %v2175 = vadd.f32 %v2155, %v2174
    %2176 = vdwg.mxu0
    %2177 = vmatpush.msra.mxu0 %v685
    %2178 = vmatpush.msra.mxu0 %v683
    %2179 = vmatpush.msra.mxu0 %v681
    %2180 = vmatpush.msra.mxu0 %v679
    %2181 = vmatpush.msra.mxu0 %v677
    %2182 = vmatpush.msra.mxu0 %v675
    %2183 = vmatpush.msra.mxu0 %v673
    %2184 = vmatpush.msra.mxu0 %v671
    %2185 = vmatpush.msra.mxu0 %v669
    %2186 = vmatpush.msra.mxu0 %v667
    %2187 = vmatpush.msra.mxu0 %v665
    %2188 = vmatpush.msra.mxu0 %v663
    %2189 = vmatpush.msra.mxu0 %v661
    %2190 = vmatpush.msra.mxu0 %v659
    %2191 = vmatpush.msra.mxu0 %v657
    %2192 = vmatpush.msra.mxu0 %v655
    %2193 = vmatmul.f32.gmra.mxu0 %v1110
    %v2194 = vpop.f32.mrf.mxu0
    %v2195 = vadd.f32 %v2175, %v2194
    %2196 = vdwg.mxu0
    %2197 = vmatpush.msra.mxu0 %v717
    %2198 = vmatpush.msra.mxu0 %v715
    %2199 = vmatpush.msra.mxu0 %v713
    %2200 = vmatpush.msra.mxu0 %v711
    %2201 = vmatpush.msra.mxu0 %v709
    %2202 = vmatpush.msra.mxu0 %v707
    %2203 = vmatpush.msra.mxu0 %v705
    %2204 = vmatpush.msra.mxu0 %v703
    %2205 = vmatpush.msra.mxu0 %v701
    %2206 = vmatpush.msra.mxu0 %v699
    %2207 = vmatpush.msra.mxu0 %v697
    %2208 = vmatpush.msra.mxu0 %v695
    %2209 = vmatpush.msra.mxu0 %v693
    %2210 = vmatpush.msra.mxu0 %v691
    %2211 = vmatpush.msra.mxu0 %v689
    %2212 = vmatpush.msra.mxu0 %v687
    %2213 = vmatmul.f32.gmra.mxu0 %v1111
    %v2214 = vpop.f32.mrf.mxu0
    %v2215 = vadd.f32 %v2195, %v2214
    %2216 = vdwg.mxu0
    %2217 = vmatpush.msra.mxu0 %v749
    %2218 = vmatpush.msra.mxu0 %v747
    %2219 = vmatpush.msra.mxu0 %v745
    %2220 = vmatpush.msra.mxu0 %v743
    %2221 = vmatpush.msra.mxu0 %v741
    %2222 = vmatpush.msra.mxu0 %v739
    %2223 = vmatpush.msra.mxu0 %v737
    %2224 = vmatpush.msra.mxu0 %v735
    %2225 = vmatpush.msra.mxu0 %v733
    %2226 = vmatpush.msra.mxu0 %v731
    %2227 = vmatpush.msra.mxu0 %v729
    %2228 = vmatpush.msra.mxu0 %v727
    %2229 = vmatpush.msra.mxu0 %v725
    %2230 = vmatpush.msra.mxu0 %v723
    %2231 = vmatpush.msra.mxu0 %v721
    %2232 = vmatpush.msra.mxu0 %v719
    %2233 = vmatmul.f32.gmra.mxu0 %v1112
    %v2234 = vpop.f32.mrf.mxu0
    %v2235 = vadd.f32 %v2215, %v2234
    %2236 = vdwg.mxu0
    %2237 = vmatpush.msra.mxu0 %v781
    %2238 = vmatpush.msra.mxu0 %v779
    %2239 = vmatpush.msra.mxu0 %v777
    %2240 = vmatpush.msra.mxu0 %v775
    %2241 = vmatpush.msra.mxu0 %v773
    %2242 = vmatpush.msra.mxu0 %v771
    %2243 = vmatpush.msra.mxu0 %v769
    %2244 = vmatpush.msra.mxu0 %v767
    %2245 = vmatpush.msra.mxu0 %v765
    %2246 = vmatpush.msra.mxu0 %v763
    %2247 = vmatpush.msra.mxu0 %v761
    %2248 = vmatpush.msra.mxu0 %v759
    %2249 = vmatpush.msra.mxu0 %v757
    %2250 = vmatpush.msra.mxu0 %v755
    %2251 = vmatpush.msra.mxu0 %v753
    %2252 = vmatpush.msra.mxu0 %v751
    %2253 = vmatmul.f32.gmra.mxu0 %v1113
    %v2254 = vpop.f32.mrf.mxu0
    %v2255 = vadd.f32 %v2235, %v2254
    %2256 = vdwg.mxu0
    %2257 = vmatpush.msra.mxu0 %v813
    %2258 = vmatpush.msra.mxu0 %v811
    %2259 = vmatpush.msra.mxu0 %v809
    %2260 = vmatpush.msra.mxu0 %v807
    %2261 = vmatpush.msra.mxu0 %v805
    %2262 = vmatpush.msra.mxu0 %v803
    %2263 = vmatpush.msra.mxu0 %v801
    %2264 = vmatpush.msra.mxu0 %v799
    %2265 = vmatpush.msra.mxu0 %v797
    %2266 = vmatpush.msra.mxu0 %v795
    %2267 = vmatpush.msra.mxu0 %v793
    %2268 = vmatpush.msra.mxu0 %v791
    %2269 = vmatpush.msra.mxu0 %v789
    %2270 = vmatpush.msra.mxu0 %v787
    %2271 = vmatpush.msra.mxu0 %v785
    %2272 = vmatpush.msra.mxu0 %v783
    %2273 = vmatmul.f32.gmra.mxu0 %v1114
    %v2274 = vpop.f32.mrf.mxu0
    %v2275 = vadd.f32 %v2255, %v2274
    %2276 = vdwg.mxu0
    %2277 = vmatpush.msra.mxu0 %v845
    %2278 = vmatpush.msra.mxu0 %v843
    %2279 = vmatpush.msra.mxu0 %v841
    %2280 = vmatpush.msra.mxu0 %v839
    %2281 = vmatpush.msra.mxu0 %v837
    %2282 = vmatpush.msra.mxu0 %v835
    %2283 = vmatpush.msra.mxu0 %v833
    %2284 = vmatpush.msra.mxu0 %v831
    %2285 = vmatpush.msra.mxu0 %v829
    %2286 = vmatpush.msra.mxu0 %v827
    %2287 = vmatpush.msra.mxu0 %v825
    %2288 = vmatpush.msra.mxu0 %v823
    %2289 = vmatpush.msra.mxu0 %v821
    %2290 = vmatpush.msra.mxu0 %v819
    %2291 = vmatpush.msra.mxu0 %v817
    %2292 = vmatpush.msra.mxu0 %v815
    %2293 = vmatmul.f32.gmra.mxu0 %v1117
    %v2294 = vpop.f32.mrf.mxu0
    %v2295 = vadd.f32 %v2275, %v2294
    %2296 = vdwg.mxu0
    %2297 = vmatpush.msra.mxu0 %v877
    %2298 = vmatpush.msra.mxu0 %v875
    %2299 = vmatpush.msra.mxu0 %v873
    %2300 = vmatpush.msra.mxu0 %v871
    %2301 = vmatpush.msra.mxu0 %v869
    %2302 = vmatpush.msra.mxu0 %v867
    %2303 = vmatpush.msra.mxu0 %v865
    %2304 = vmatpush.msra.mxu0 %v863
    %2305 = vmatpush.msra.mxu0 %v861
    %2306 = vmatpush.msra.mxu0 %v859
    %2307 = vmatpush.msra.mxu0 %v857
    %2308 = vmatpush.msra.mxu0 %v855
    %2309 = vmatpush.msra.mxu0 %v853
    %2310 = vmatpush.msra.mxu0 %v851
    %2311 = vmatpush.msra.mxu0 %v849
    %2312 = vmatpush.msra.mxu0 %v847
    %2313 = vmatmul.f32.gmra.mxu0 %v1118
    %v2314 = vpop.f32.mrf.mxu0
    %v2315 = vadd.f32 %v2295, %v2314
    %2316 = vdwg.mxu0
    %2317 = vmatpush.msra.mxu0 %v909
    %2318 = vmatpush.msra.mxu0 %v907
    %2319 = vmatpush.msra.mxu0 %v905
    %2320 = vmatpush.msra.mxu0 %v903
    %2321 = vmatpush.msra.mxu0 %v901
    %2322 = vmatpush.msra.mxu0 %v899
    %2323 = vmatpush.msra.mxu0 %v897
    %2324 = vmatpush.msra.mxu0 %v895
    %2325 = vmatpush.msra.mxu0 %v893
    %2326 = vmatpush.msra.mxu0 %v891
    %2327 = vmatpush.msra.mxu0 %v889
    %2328 = vmatpush.msra.mxu0 %v887
    %2329 = vmatpush.msra.mxu0 %v885
    %2330 = vmatpush.msra.mxu0 %v883
    %2331 = vmatpush.msra.mxu0 %v881
    %2332 = vmatpush.msra.mxu0 %v879
    %2333 = vmatmul.f32.gmra.mxu0 %v1119
    %v2334 = vpop.f32.mrf.mxu0
    %v2335 = vadd.f32 %v2315, %v2334
    %2336 = vdwg.mxu0
    %2337 = vmatpush.msra.mxu0 %v941
    %2338 = vmatpush.msra.mxu0 %v939
    %2339 = vmatpush.msra.mxu0 %v937
    %2340 = vmatpush.msra.mxu0 %v935
    %2341 = vmatpush.msra.mxu0 %v933
    %2342 = vmatpush.msra.mxu0 %v931
    %2343 = vmatpush.msra.mxu0 %v929
    %2344 = vmatpush.msra.mxu0 %v927
    %2345 = vmatpush.msra.mxu0 %v925
    %2346 = vmatpush.msra.mxu0 %v923
    %2347 = vmatpush.msra.mxu0 %v921
    %2348 = vmatpush.msra.mxu0 %v919
    %2349 = vmatpush.msra.mxu0 %v917
    %2350 = vmatpush.msra.mxu0 %v915
    %2351 = vmatpush.msra.mxu0 %v913
    %2352 = vmatpush.msra.mxu0 %v911
    %2353 = vmatmul.f32.gmra.mxu0 %v1120
    %v2354 = vpop.f32.mrf.mxu0
    %v2355 = vadd.f32 %v2335, %v2354
    %2356 = vdwg.mxu0
    %2357 = vmatpush.msra.mxu0 %v973
    %2358 = vmatpush.msra.mxu0 %v971
    %2359 = vmatpush.msra.mxu0 %v969
    %2360 = vmatpush.msra.mxu0 %v967
    %2361 = vmatpush.msra.mxu0 %v965
    %2362 = vmatpush.msra.mxu0 %v963
    %2363 = vmatpush.msra.mxu0 %v961
    %2364 = vmatpush.msra.mxu0 %v959
    %2365 = vmatpush.msra.mxu0 %v957
    %2366 = vmatpush.msra.mxu0 %v955
    %2367 = vmatpush.msra.mxu0 %v953
    %2368 = vmatpush.msra.mxu0 %v951
    %2369 = vmatpush.msra.mxu0 %v949
    %2370 = vmatpush.msra.mxu0 %v947
    %2371 = vmatpush.msra.mxu0 %v945
    %2372 = vmatpush.msra.mxu0 %v943
    %2373 = vmatmul.f32.gmra.mxu0 %v1121
    %v2374 = vpop.f32.mrf.mxu0
    %v2375 = vadd.f32 %v2355, %v2374
    %2376 = vdwg.mxu0
    %2377 = vmatpush.msra.mxu0 %v1005
    %2378 = vmatpush.msra.mxu0 %v1003
    %2379 = vmatpush.msra.mxu0 %v1001
    %2380 = vmatpush.msra.mxu0 %v999
    %2381 = vmatpush.msra.mxu0 %v997
    %2382 = vmatpush.msra.mxu0 %v995
    %2383 = vmatpush.msra.mxu0 %v993
    %2384 = vmatpush.msra.mxu0 %v991
    %2385 = vmatpush.msra.mxu0 %v989
    %2386 = vmatpush.msra.mxu0 %v987
    %2387 = vmatpush.msra.mxu0 %v985
    %2388 = vmatpush.msra.mxu0 %v983
    %2389 = vmatpush.msra.mxu0 %v981
    %2390 = vmatpush.msra.mxu0 %v979
    %2391 = vmatpush.msra.mxu0 %v977
    %2392 = vmatpush.msra.mxu0 %v975
    %2393 = vmatmul.f32.gmra.mxu0 %v1122
    %v2394 = vpop.f32.mrf.mxu0
    %v2395 = vadd.f32 %v2375, %v2394
    %2396 = vdwg.mxu0
    %2397 = vmatpush.msra.mxu0 %v1037
    %2398 = vmatpush.msra.mxu0 %v1035
    %2399 = vmatpush.msra.mxu0 %v1033
    %2400 = vmatpush.msra.mxu0 %v1031
    %2401 = vmatpush.msra.mxu0 %v1029
    %2402 = vmatpush.msra.mxu0 %v1027
    %2403 = vmatpush.msra.mxu0 %v1025
    %2404 = vmatpush.msra.mxu0 %v1023
    %2405 = vmatpush.msra.mxu0 %v1021
    %2406 = vmatpush.msra.mxu0 %v1019
    %2407 = vmatpush.msra.mxu0 %v1017
    %2408 = vmatpush.msra.mxu0 %v1015
    %2409 = vmatpush.msra.mxu0 %v1013
    %2410 = vmatpush.msra.mxu0 %v1011
    %2411 = vmatpush.msra.mxu0 %v1009
    %2412 = vmatpush.msra.mxu0 %v1007
    %2413 = vmatmul.f32.gmra.mxu0 %v1123
    %v2414 = vpop.f32.mrf.mxu0
    %v2415 = vadd.f32 %v2395, %v2414
    %2416 = vdwg.mxu0
    %2417 = vmatpush.msra.mxu0 %v1069
    %2418 = vmatpush.msra.mxu0 %v1067
    %2419 = vmatpush.msra.mxu0 %v1065
    %2420 = vmatpush.msra.mxu0 %v1063
    %2421 = vmatpush.msra.mxu0 %v1061
    %2422 = vmatpush.msra.mxu0 %v1059
    %2423 = vmatpush.msra.mxu0 %v1057
    %2424 = vmatpush.msra.mxu0 %v1055
    %2425 = vmatpush.msra.mxu0 %v1053
    %2426 = vmatpush.msra.mxu0 %v1051
    %2427 = vmatpush.msra.mxu0 %v1049
    %2428 = vmatpush.msra.mxu0 %v1047
    %2429 = vmatpush.msra.mxu0 %v1045
    %2430 = vmatpush.msra.mxu0 %v1043
    %2431 = vmatpush.msra.mxu0 %v1041
    %2432 = vmatpush.msra.mxu0 %v1039
    %2433 = vmatmul.f32.gmra.mxu0 %v1124
    %v2434 = vpop.f32.mrf.mxu0
    %v2435 = vadd.f32 %v2415, %v2434
    %2436 = vdwg.mxu0
    %v2437 = vmax.f32 %v1795, 0.0
    %v2438 = vmax.f32 %v2435, 0.0
    %v2439 = vld [vmem:[%s3] sm:$0x3]
    %v2441 = vperm.slane %v2439, 0
    %v2442 = vperm.slane %v2439, 1
    %v2445 = vmul.f32 %v2437, %v2441
    %v2446 = vmul.f32 %v2438, %v2442
    %vm2447 = vcmask 1041408
    %v2448 = vsel %vm2447, %v2445, 0.0
    %v2449 = vsel %vm2447, %v2446, 0.0
    %v2450 = vadd.f32 %v2448, %v2449
    %2451 = vadd.xlane.f32.xlu0 %v2450
    %v2452 = vpop.xlane.xlu0 %2451
    %v2453 = vld [vmem:[#allocation2] sm:$0x1]
    %v2455 = vperm.slane %v2453, 0
    %v2457 = vadd.f32 %v2452, %v2455
    %vm2458 = vcmask 1024
    %2459 = vst.msk [vmem:[%s5] sm:$0x3] %vm2458, %v2457
    // Predicated region
    $region26: #{forward.3} parent=1 // pred_check
      _
    $region27: #{forward.3} parent=1 // pred_check_branch
      %2461 = sbr.rel (0) target = $region29
    $region28: #{forward.3} parent=1 // pred_region
      _
    $region29: #{forward.3} parent=1 // pred_fallthru
      _
    // Predicated region
    $region30: #{forward.3} parent=1 // pred_check
      _
    $region31: #{forward.3} parent=1 // pred_check_branch
      %2463 = sbr.rel (0) target = $region33
    $region32: #{forward.3} parent=1 // pred_region
      _
    $region33: #{forward.3} parent=1 // pred_fallthru
      _
    %2464 = vsyncpa [#allocation4], 1

</llo_original>
